<compile_context>
chip_gen: v5e
topology: v5e:2x2
jax: 0.10.0
libtpu: 0.0.40
codegen_flags: <defaults>
</compile_context>

<pallas_src>
import functools

import jax
import jax.numpy as jnp
from jax.experimental import pallas as pl
from jax.experimental.pallas import tpu as pltpu


def _round_up(x, m):
    return (x + m - 1) // m * m


# --------------------------------------------------------------------------- #
# Fused 4x4 / stride-2 conv  (implicit GEMM over a space-to-depth input)
# --------------------------------------------------------------------------- #

def _conv4x4s2_kernel(*refs, wo, has_bias, slope=0.01):
    """One output row (all batch items) x one Cout tile.

    refs: x0 (B,1,Ws,C4)  s2d input row m      (vertical tap a=0)
          x1 (B,1,Ws,C4)  s2d input row m + 1  (vertical tap a=1)
          w  (2,2,C4,tn)  tap-major weights (resident across the row sweep)
          [bias (1,tn) f32]
          out (B,1,Wo,tn)
    Horizontal taps (c=0,1) are static shifts of the row inside VMEM, so the
    full 4x4 stride-2 reduction happens in one invocation with an f32
    register accumulator -- no im2col matrix and no reduction grid axis.
    """
    if has_bias:
        x0_ref, x1_ref, w_ref, b_ref, o_ref = refs
    else:
        x0_ref, x1_ref, w_ref, o_ref = refs
        b_ref = None

    w = w_ref[...]                                # (2, 2, C4, tn) bf16
    acc = None
    for a, x_ref in enumerate((x0_ref, x1_ref)):
        x = x_ref[...][:, 0]                      # (B, Ws, C4) bf16
        for c in range(2):
            patch = x[:, c:c + wo, :]             # (B, Wo, C4)
            part = jax.lax.dot_general(
                patch, w[a, c],
                dimension_numbers=(((2,), (0,)), ((), ())),
                preferred_element_type=jnp.float32)   # (B, Wo, tn) f32
            acc = part if acc is None else acc + part
    if has_bias:
        acc = acc + b_ref[...]                    # (1, tn) broadcasts
    acc = jnp.where(acc >= 0, acc, acc * slope)   # LeakyReLU(0.01)
    o_ref[...] = acc.reshape(o_ref.shape).astype(o_ref.dtype)


def conv4x4_s2_pallas(x_nhwc, w_s2d, bias, *, out_dtype=jnp.bfloat16):
    """4x4 / stride-2 / pad-1 conv + bias + LeakyReLU(0.01); NHWC in / out.

    x_nhwc : (B, H, W, Cin)  with H, W even
    w_s2d  : (2, 2, 4*Cin, Cout) bf16, produced by prepare_params()
    bias   : (1, Cout) f32 or None
    """
    B, H, W, C = x_nhwc.shape
    assert H % 2 == 0 and W % 2 == 0
    _, _, C4, N = w_s2d.shape
    assert C4 == 4 * C

    # Space-to-depth: fold the stride-2 parity into channels (one fused
    # pad + transpose copy).  The 16-tap im2col matrix never exists in HBM.
    x = x_nhwc.astype(jnp.bfloat16)
    xp = jnp.pad(x, ((0, 0), (1, 1), (1, 1), (0, 0)))
    Hs, Ws = (H + 2) // 2, (W + 2) // 2
    y = xp.reshape(B, Hs, 2, Ws, 2, C).transpose(0, 1, 3, 2, 4, 5)
    y = y.reshape(B, Hs, Ws, C4)
    Ho, Wo = Hs - 1, Ws - 1                       # == H // 2, W // 2

    # Cout tile: full width when small (Cout is a power of two here),
    # otherwise a multiple of 128 sized so the double-buffered weight block
    # stays comfortably inside VMEM on every generation (v7x: 64 MiB).
    tn = min(N, 512)
    if N % tn != 0:
        tn = N
    while tn % 256 == 0 and 2 * (4 * C4 * tn * 2) > 16 * 2 ** 20:
        tn //= 2

    out_bytes = jnp.dtype(out_dtype).itemsize
    est_vmem = 2 * (2 * B * Ws * C4 * 2 + 4 * C4 * tn * 2
                    + B * Wo * tn * out_bytes + tn * 4) + (1 << 20)
    vmem_limit = int(min(48 * 2 ** 20, max(32 * 2 ** 20, est_vmem)))

    has_bias = bias is not None
    inputs = [y, y, w_s2d]
    in_specs = [
        # vertical tap a=0: s2d row m   (size-1 block -> block index == row)
        pl.BlockSpec((B, 1, Ws, C4), lambda n, m: (0, m, 0, 0)),
        # vertical tap a=1: row m + 1   (same array, shifted index_map)
        pl.BlockSpec((B, 1, Ws, C4), lambda n, m: (0, m + 1, 0, 0)),
        # weights depend only on the outermost grid axis -> stay resident
        pl.BlockSpec((2, 2, C4, tn), lambda n, m: (0, 0, 0, n)),
    ]
    if has_bias:
        inputs.append(bias)
        in_specs.append(pl.BlockSpec((1, tn), lambda n, m: (0, n)))

    kernel = functools.partial(_conv4x4s2_kernel, wo=Wo, has_bias=has_bias)
    return pl.pallas_call(
        kernel,
        out_shape=jax.ShapeDtypeStruct((B, Ho, Wo, N), out_dtype),
        grid=(N // tn, Ho),
        in_specs=in_specs,
        out_specs=pl.BlockSpec((B, 1, Wo, tn), lambda n, m: (0, m, 0, n)),
        compiler_params=pltpu.CompilerParams(
            dimension_semantics=("parallel", "parallel"),
            vmem_limit_bytes=vmem_limit),
    )(*inputs)


# --------------------------------------------------------------------------- #
# Generic tiled GEMM (used only for the two small heads)
# --------------------------------------------------------------------------- #

def _gemm_kernel(*refs, has_bias, apply_lrelu, slope=0.01):
    if has_bias:
        x_ref, w_ref, b_ref, o_ref, acc_ref = refs
    else:
        x_ref, w_ref, o_ref, acc_ref = refs
        b_ref = None
    k = pl.program_id(2)

    @pl.when(k == 0)
    def _init():
        acc_ref[...] = jnp.zeros_like(acc_ref)

    acc_ref[...] += jnp.dot(x_ref[...], w_ref[...],
                            preferred_element_type=jnp.float32)

    @pl.when(k == pl.num_programs(2) - 1)
    def _epilogue():
        acc = acc_ref[...]
        if has_bias:
            acc = acc + b_ref[...]
        if apply_lrelu:
            acc = jnp.where(acc >= 0, acc, acc * slope)
        o_ref[...] = acc.astype(o_ref.dtype)


def pallas_gemm(x, w, b=None, *, apply_lrelu=False, out_dtype=jnp.float32):
    """out = [LeakyReLU](x @ w [+ b]); bf16 operands, f32 VMEM accumulator.

    Pads / slices only when the chosen tiles do not already divide the
    problem; for the tiny discriminator heads everything runs un-padded with
    a (1, 1, 1) grid and lane-sparse but copy-free N (N = 1 / c_dim)."""
    M, K = x.shape
    K2, N = w.shape
    assert K == K2
    x = x.astype(jnp.bfloat16)
    w = w.astype(jnp.bfloat16)

    tm = M if M <= 512 else 512          # full dim (any size) or bf16-friendly 512
    tk = K if K <= 2048 else 1024        # full dim or a multiple of 128
    tn = N if N <= 512 else 512
    Mp, Kp, Np = _round_up(M, tm), _round_up(K, tk), _round_up(N, tn)

    if (Mp, Kp) != (M, K):
        x = jnp.zeros((Mp, Kp), jnp.bfloat16).at[:M, :K].set(x)
    if (Kp, Np) != (K, N):
        w = jnp.zeros((Kp, Np), jnp.bfloat16).at[:K, :N].set(w)

    has_bias = b is not None
    inputs = [x, w]
    in_specs = [
        pl.BlockSpec((tm, tk), lambda i, j, k: (i, k)),
        pl.BlockSpec((tk, tn), lambda i, j, k: (k, j)),
    ]
    if has_bias:
        bp = b.astype(jnp.float32).reshape(1, N)
        if Np != N:
            bp = jnp.zeros((1, Np), jnp.float32).at[:, :N].set(bp)
        inputs.append(bp)
        in_specs.append(pl.BlockSpec((1, tn), lambda i, j, k: (0, j)))

    kernel = functools.partial(_gemm_kernel, has_bias=has_bias,
                               apply_lrelu=apply_lrelu)
    out = pl.pallas_call(
        kernel,
        out_shape=jax.ShapeDtypeStruct((Mp, Np), out_dtype),
        grid=(Mp // tm, Np // tn, Kp // tk),
        in_specs=in_specs,
        out_specs=pl.BlockSpec((tm, tn), lambda i, j, k: (i, j)),
        scratch_shapes=[pltpu.VMEM((tm, tn), jnp.float32)],
        compiler_params=pltpu.CompilerParams(
            dimension_semantics=("parallel", "parallel", "arbitrary")),
    )(*inputs)
    if (Mp, Np) != (M, N):
        out = out[:M, :N]
    return out


# ------------------------------- JAX glue ----------------------------------- #

def im2col_nhwc(x, kh, kw, stride, pad):
    """Small helper (only used for the tiny 3x3 conv1 head)."""
    B, H, W, C = x.shape
    x = x.astype(jnp.bfloat16)
    xp = jnp.pad(x, ((0, 0), (pad, pad), (pad, pad), (0, 0)))
    Hp, Wp = H + 2 * pad, W + 2 * pad
    Ho = (Hp - kh) // stride + 1
    Wo = (Wp - kw) // stride + 1
    patches = []
    for i in range(kh):
        for j in range(kw):
            patches.append(xp[:, i::stride, j::stride, :][:, :Ho, :Wo, :])
    p = jnp.stack(patches, axis=3)                # (B, Ho, Wo, kh*kw, C)
    return p.reshape(B * Ho * Wo, kh * kw * C), Ho, Wo


def prepare_params(params):
    """One-time weight-side transforms (done outside the forward pass):
    4x4 OIHW weights -> tap-major (2, 2, 4*Cin, Cout) bf16 layout matching the
    space-to-depth channel ordering; head weights -> (K, N) bf16 matmul form."""
    main = []
    for (w, b) in params["main"]:
        O, Cin, kh, kw = w.shape
        assert (kh, kw) == (4, 4)
        w6 = w.reshape(O, Cin, 2, 2, 2, 2)               # (O, Cin, a, r, c, q)
        w6 = jnp.transpose(w6, (2, 4, 3, 5, 1, 0))       # (a, c, r, q, Cin, O)
        w_s2d = w6.reshape(2, 2, 4 * Cin, O).astype(jnp.bfloat16)
        main.append((w_s2d, b.astype(jnp.float32).reshape(1, O)))
    c1 = params["conv1_w"]                               # (1, C, 3, 3)
    O1, C = c1.shape[0], c1.shape[1]
    w1 = jnp.transpose(c1, (2, 3, 1, 0)).reshape(9 * C, O1).astype(jnp.bfloat16)
    c2 = params["conv2_w"]                               # (c_dim, C, k, k)
    O2, _, k, _ = c2.shape
    w2 = jnp.transpose(c2, (2, 3, 1, 0)).reshape(k * k * C, O2).astype(jnp.bfloat16)
    return {"main": main, "conv1_w": w1, "conv2_w": w2}


def discriminator_forward(pp, x_nchw):
    """Equivalent of Discriminator.forward; returns (out_src NCHW, out_cls (B, c_dim))."""
    h = jnp.transpose(x_nchw, (0, 2, 3, 1))              # NCHW -> NHWC
    for (w_s2d, b) in pp["main"]:
        h = conv4x4_s2_pallas(h, w_s2d, b, out_dtype=jnp.bfloat16)
    B, s, _, C = h.shape
    # conv1 head: 3x3 / stride 1 / pad 1 / Cout=1.  Feature map here is tiny
    # (B x s x s x C with s = image_size / 2^repeat_num) so im2col is negligible.
    cols, Ho, Wo = im2col_nhwc(h, 3, 3, 1, 1)
    out_src = pallas_gemm(cols, pp["conv1_w"], out_dtype=jnp.float32)
    out_src = out_src.reshape(B, Ho, Wo, 1)
    # conv2 head: kernel == full spatial extent -> a single GEMM over the
    # flattened NHWC feature map (no patch duplication at all).
    out_cls = pallas_gemm(h.reshape(B, s * s * C), pp["conv2_w"],
                          out_dtype=jnp.float32)
    return jnp.transpose(out_src, (0, 3, 1, 2)), out_cls


def init_params(key, image_size, conv_dim, c_dim, repeat_num):
    keys = iter(jax.random.split(key, 2 * repeat_num + 2))
    main = []
    cin, cout = 3, conv_dim
    for _ in range(repeat_num):
        w = 0.05 * jax.random.normal(next(keys), (cout, cin, 4, 4), jnp.float32)
        b = 0.05 * jax.random.normal(next(keys), (cout,), jnp.float32)
        main.append((w, b))
        cin, cout = cout, cout * 2
    curr_dim = cin
    k_last = image_size // (2 ** repeat_num)
    conv1_w = 0.05 * jax.random.normal(next(keys), (1, curr_dim, 3, 3), jnp.float32)
    conv2_w = 0.05 * jax.random.normal(next(keys), (c_dim, curr_dim, k_last, k_last),
                                       jnp.float32)
    return {"main": main, "conv1_w": conv1_w, "conv2_w": conv2_w}


# ------------------------- pure-JAX reference check -------------------------- #

def _r(x):
    # mirror the bf16 operand / activation rounding of the Pallas path
    return x.astype(jnp.bfloat16).astype(jnp.float32)


def _ref_conv(x, w, b, stride, pad):
    out = jax.lax.conv_general_dilated(
        x, w, (stride, stride), [(pad, pad), (pad, pad)],
        dimension_numbers=("NCHW", "OIHW", "NCHW"),
        preferred_element_type=jnp.float32)
    if b is not None:
        out = out + b[None, :, None, None]
    return out


def reference_forward(params, x):
    h = x
    for (w, b) in params["main"]:
        h = _ref_conv(_r(h), _r(w), b, 2, 1)
        h = jnp.where(h >= 0, h, 0.01 * h)
        h = _r(h)   # main-layer activations are stored in bf16 in the Pallas path
    out_src = _ref_conv(_r(h), _r(params["conv1_w"]), None, 1, 1)
    out_cls = _ref_conv(_r(h), _r(params["conv2_w"]), None, 1, 0)
    return out_src, out_cls.reshape(out_cls.shape[0], out_cls.shape[1])


# ----------------------------------- main ------------------------------------ #

if __name__ == "__main__":
    # Small config consistent with the module: image_size=32, conv_dim=8,
    # c_dim=5, repeat_num=3  ->  final spatial 4x4, curr_dim=32, conv2 kernel=4.
    image_size, conv_dim, c_dim, repeat_num = 32, 8, 5, 3
    key = jax.random.PRNGKey(0)
    pk, xk = jax.random.split(key)
    params = init_params(pk, image_size, conv_dim, c_dim, repeat_num)
    x = jax.random.normal(xk, (2, 3, image_size, image_size), jnp.float32)

    pp = prepare_params(params)           # one-time weight prep (tap-major, bf16)
    fwd = jax.jit(discriminator_forward)
    out_src, out_cls = fwd(pp, x)
    jax.block_until_ready((out_src, out_cls))

    # sanity: shapes + numerical match against a pure-JAX conv reference that
    # applies the same bf16 operand/activation rounding.
    ref_src, ref_cls = reference_forward(params, x)
    assert out_src.shape == (2, 1, image_size // 2 ** repeat_num,
                             image_size // 2 ** repeat_num), out_src.shape
    assert out_cls.shape == (2, c_dim), out_cls.shape
    assert jnp.allclose(out_src, ref_src, atol=5e-3, rtol=5e-2), \
        float(jnp.max(jnp.abs(out_src - ref_src)))
    assert jnp.allclose(out_cls, ref_cls, atol=5e-3, rtol=5e-2), \
        float(jnp.max(jnp.abs(out_cls - ref_cls)))

    print("KERNEL_OK")
</pallas_src>

<mosaic_0001>
module attributes {stable_mosaic.version = 11 : i64} {
  func.func @_conv4x4s2_kernel(%arg0: i32, %arg1: i32, %arg2: memref<2x1x17x12xbf16, #tpu.memory_space<vmem>>, %arg3: memref<2x1x17x12xbf16, #tpu.memory_space<vmem>>, %arg4: memref<2x2x12x8xbf16, #tpu.memory_space<vmem>>, %arg5: memref<1x8xf32, #tpu.memory_space<vmem>>, %arg6: memref<2x1x16x8xbf16, #tpu.memory_space<vmem>>) attributes {dimension_semantics = [#tpu.dimension_semantics<parallel>, #tpu.dimension_semantics<parallel>], iteration_bounds = array<i64: 1, 16>, scalar_prefetch = 0 : i64, scratch_operands = 0 : i64, tpu.core_type = #tpu.core_type<tc>, window_params = [{transform_indices = @transform_0, window_bounds = array<i64: 2, 1, 17, 12>}, {transform_indices = @transform_1, window_bounds = array<i64: 2, 1, 17, 12>}, {transform_indices = @transform_2, window_bounds = array<i64: 2, 2, 12, 8>}, {transform_indices = @transform_3, window_bounds = array<i64: 1, 8>}, {transform_indices = @transform_4, window_bounds = array<i64: 2, 1, 16, 8>}]} {
    %c0 = arith.constant 0 : index
    %c0_0 = arith.constant 0 : index
    %c0_1 = arith.constant 0 : index
    %c0_2 = arith.constant 0 : index
    %0 = vector.load %arg4[%c0, %c0_0, %c0_1, %c0_2] : memref<2x2x12x8xbf16, #tpu.memory_space<vmem>>, vector<2x2x12x8xbf16>
    %c0_3 = arith.constant 0 : index
    %c0_4 = arith.constant 0 : index
    %c0_5 = arith.constant 0 : index
    %c0_6 = arith.constant 0 : index
    %1 = vector.load %arg2[%c0_3, %c0_4, %c0_5, %c0_6] : memref<2x1x17x12xbf16, #tpu.memory_space<vmem>>, vector<2x1x17x12xbf16>
    %2 = vector.shape_cast %1 : vector<2x1x17x12xbf16> to vector<2x17x12xbf16>
    %3 = vector.extract_strided_slice %2 {offsets = [0, 0, 0], sizes = [2, 16, 12], strides = [1, 1, 1]} : vector<2x17x12xbf16> to vector<2x16x12xbf16>
    %4 = vector.extract_strided_slice %0 {offsets = [0, 0, 0, 0], sizes = [1, 1, 12, 8], strides = [1, 1, 1, 1]} : vector<2x2x12x8xbf16> to vector<1x1x12x8xbf16>
    %5 = vector.shape_cast %4 : vector<1x1x12x8xbf16> to vector<12x8xbf16>
    %cst = arith.constant dense<0.000000e+00> : vector<2x16x8xf32>
    %6 = tpu.matmul %3, %5, %cst {dimension_numbers = #tpu.dot_dimension_numbers<[2], [0], [0, 1], [1], [0, 0, 0, 1, 1, 1], [], []>} : vector<2x16x12xbf16>, vector<12x8xbf16>, vector<2x16x8xf32> -> vector<2x16x8xf32>
    %7 = vector.extract_strided_slice %2 {offsets = [0, 1, 0], sizes = [2, 16, 12], strides = [1, 1, 1]} : vector<2x17x12xbf16> to vector<2x16x12xbf16>
    %8 = vector.extract_strided_slice %0 {offsets = [0, 1, 0, 0], sizes = [1, 1, 12, 8], strides = [1, 1, 1, 1]} : vector<2x2x12x8xbf16> to vector<1x1x12x8xbf16>
    %9 = vector.shape_cast %8 : vector<1x1x12x8xbf16> to vector<12x8xbf16>
    %cst_7 = arith.constant dense<0.000000e+00> : vector<2x16x8xf32>
    %10 = tpu.matmul %7, %9, %cst_7 {dimension_numbers = #tpu.dot_dimension_numbers<[2], [0], [0, 1], [1], [0, 0, 0, 1, 1, 1], [], []>} : vector<2x16x12xbf16>, vector<12x8xbf16>, vector<2x16x8xf32> -> vector<2x16x8xf32>
    %11 = arith.addf %6, %10 : vector<2x16x8xf32>
    %c0_8 = arith.constant 0 : index
    %c0_9 = arith.constant 0 : index
    %c0_10 = arith.constant 0 : index
    %c0_11 = arith.constant 0 : index
    %12 = vector.load %arg3[%c0_8, %c0_9, %c0_10, %c0_11] : memref<2x1x17x12xbf16, #tpu.memory_space<vmem>>, vector<2x1x17x12xbf16>
    %13 = vector.shape_cast %12 : vector<2x1x17x12xbf16> to vector<2x17x12xbf16>
    %14 = vector.extract_strided_slice %13 {offsets = [0, 0, 0], sizes = [2, 16, 12], strides = [1, 1, 1]} : vector<2x17x12xbf16> to vector<2x16x12xbf16>
    %15 = vector.extract_strided_slice %0 {offsets = [1, 0, 0, 0], sizes = [1, 1, 12, 8], strides = [1, 1, 1, 1]} : vector<2x2x12x8xbf16> to vector<1x1x12x8xbf16>
    %16 = vector.shape_cast %15 : vector<1x1x12x8xbf16> to vector<12x8xbf16>
    %cst_12 = arith.constant dense<0.000000e+00> : vector<2x16x8xf32>
    %17 = tpu.matmul %14, %16, %cst_12 {dimension_numbers = #tpu.dot_dimension_numbers<[2], [0], [0, 1], [1], [0, 0, 0, 1, 1, 1], [], []>} : vector<2x16x12xbf16>, vector<12x8xbf16>, vector<2x16x8xf32> -> vector<2x16x8xf32>
    %18 = arith.addf %11, %17 : vector<2x16x8xf32>
    %19 = vector.extract_strided_slice %13 {offsets = [0, 1, 0], sizes = [2, 16, 12], strides = [1, 1, 1]} : vector<2x17x12xbf16> to vector<2x16x12xbf16>
    %20 = vector.extract_strided_slice %0 {offsets = [1, 1, 0, 0], sizes = [1, 1, 12, 8], strides = [1, 1, 1, 1]} : vector<2x2x12x8xbf16> to vector<1x1x12x8xbf16>
    %21 = vector.shape_cast %20 : vector<1x1x12x8xbf16> to vector<12x8xbf16>
    %cst_13 = arith.constant dense<0.000000e+00> : vector<2x16x8xf32>
    %22 = tpu.matmul %19, %21, %cst_13 {dimension_numbers = #tpu.dot_dimension_numbers<[2], [0], [0, 1], [1], [0, 0, 0, 1, 1, 1], [], []>} : vector<2x16x12xbf16>, vector<12x8xbf16>, vector<2x16x8xf32> -> vector<2x16x8xf32>
    %23 = arith.addf %18, %22 : vector<2x16x8xf32>
    %c0_14 = arith.constant 0 : index
    %c0_15 = arith.constant 0 : index
    %24 = vector.load %arg5[%c0_14, %c0_15] : memref<1x8xf32, #tpu.memory_space<vmem>>, vector<1x8xf32>
    %25 = vector.shape_cast %24 : vector<1x8xf32> to vector<1x1x8xf32>
    %26 = vector.broadcast %25 : vector<1x1x8xf32> to vector<2x16x8xf32>
    %27 = arith.addf %23, %26 : vector<2x16x8xf32>
    %cst_16 = arith.constant 0.000000e+00 : f32
    %28 = vector.broadcast %cst_16 : f32 to vector<2x16x8xf32>
    %29 = arith.cmpf oge, %27, %28 : vector<2x16x8xf32>
    %cst_17 = arith.constant 0.00999999977 : f32
    %30 = vector.broadcast %cst_17 : f32 to vector<2x16x8xf32>
    %31 = arith.mulf %27, %30 : vector<2x16x8xf32>
    %32 = arith.select %29, %27, %31 : vector<2x16x8xi1>, vector<2x16x8xf32>
    %33 = vector.shape_cast %32 : vector<2x16x8xf32> to vector<2x1x16x8xf32>
    %34 = arith.truncf %33 : vector<2x1x16x8xf32> to vector<2x1x16x8xbf16>
    %c0_18 = arith.constant 0 : index
    %c0_19 = arith.constant 0 : index
    %c0_20 = arith.constant 0 : index
    %c0_21 = arith.constant 0 : index
    %35 = vector.load %arg6[%c0_18, %c0_19, %c0_20, %c0_21] : memref<2x1x16x8xbf16, #tpu.memory_space<vmem>>, vector<2x1x16x8xbf16>
    tpu.vector_store %arg6[%c0_18, %c0_19, %c0_20, %c0_21], %34 {strides = array<i32>} : memref<2x1x16x8xbf16, #tpu.memory_space<vmem>>, vector<2x1x16x8xbf16>,
    return
  }
  func.func @transform_0(%arg0: i32, %arg1: i32) -> (i32, i32, i32, i32) {
    %c0_i32 = arith.constant 0 : i32
    %c0_i32_0 = arith.constant 0 : i32
    %c0_i32_1 = arith.constant 0 : i32
    %c0_i32_2 = arith.constant 0 : i32
    return %c0_i32, %arg1, %c0_i32_0, %c0_i32_1 : i32, i32, i32, i32
  }
  func.func @transform_1(%arg0: i32, %arg1: i32) -> (i32, i32, i32, i32) {
    %c1_i32 = arith.constant 1 : i32
    %0 = arith.addi %arg1, %c1_i32 : i32
    %c0_i32 = arith.constant 0 : i32
    %c0_i32_0 = arith.constant 0 : i32
    %c0_i32_1 = arith.constant 0 : i32
    %c0_i32_2 = arith.constant 0 : i32
    return %c0_i32, %0, %c0_i32_0, %c0_i32_1 : i32, i32, i32, i32
  }
  func.func @transform_2(%arg0: i32, %arg1: i32) -> (i32, i32, i32, i32) {
    %c0_i32 = arith.constant 0 : i32
    %c0_i32_0 = arith.constant 0 : i32
    %c0_i32_1 = arith.constant 0 : i32
    %c0_i32_2 = arith.constant 0 : i32
    return %c0_i32, %c0_i32_0, %c0_i32_1, %arg0 : i32, i32, i32, i32
  }
  func.func @transform_3(%arg0: i32, %arg1: i32) -> (i32, i32) {
    %c0_i32 = arith.constant 0 : i32
    %c0_i32_0 = arith.constant 0 : i32
    return %c0_i32, %arg0 : i32, i32
  }
  func.func @transform_4(%arg0: i32, %arg1: i32) -> (i32, i32, i32, i32) {
    %c0_i32 = arith.constant 0 : i32
    %c0_i32_0 = arith.constant 0 : i32
    %c0_i32_1 = arith.constant 0 : i32
    return %c0_i32, %arg1, %c0_i32_0, %arg0 : i32, i32, i32, i32
  }
}

module attributes {stable_mosaic.version = 11 : i64} {
  func.func @_conv4x4s2_kernel(%arg0: i32, %arg1: i32, %arg2: memref<2x1x9x32xbf16, #tpu.memory_space<vmem>>, %arg3: memref<2x1x9x32xbf16, #tpu.memory_space<vmem>>, %arg4: memref<2x2x32x16xbf16, #tpu.memory_space<vmem>>, %arg5: memref<1x16xf32, #tpu.memory_space<vmem>>, %arg6: memref<2x1x8x16xbf16, #tpu.memory_space<vmem>>) attributes {dimension_semantics = [#tpu.dimension_semantics<parallel>, #tpu.dimension_semantics<parallel>], iteration_bounds = array<i64: 1, 8>, scalar_prefetch = 0 : i64, scratch_operands = 0 : i64, tpu.core_type = #tpu.core_type<tc>, window_params = [{transform_indices = @transform_0, window_bounds = array<i64: 2, 1, 9, 32>}, {transform_indices = @transform_1, window_bounds = array<i64: 2, 1, 9, 32>}, {transform_indices = @transform_2, window_bounds = array<i64: 2, 2, 32, 16>}, {transform_indices = @transform_3, window_bounds = array<i64: 1, 16>}, {transform_indices = @transform_4, window_bounds = array<i64: 2, 1, 8, 16>}]} {
    %c0 = arith.constant 0 : index
    %c0_0 = arith.constant 0 : index
    %c0_1 = arith.constant 0 : index
    %c0_2 = arith.constant 0 : index
    %0 = vector.load %arg4[%c0, %c0_0, %c0_1, %c0_2] : memref<2x2x32x16xbf16, #tpu.memory_space<vmem>>, vector<2x2x32x16xbf16>
    %c0_3 = arith.constant 0 : index
    %c0_4 = arith.constant 0 : index
    %c0_5 = arith.constant 0 : index
    %c0_6 = arith.constant 0 : index
    %1 = vector.load %arg2[%c0_3, %c0_4, %c0_5, %c0_6] : memref<2x1x9x32xbf16, #tpu.memory_space<vmem>>, vector<2x1x9x32xbf16>
    %2 = vector.shape_cast %1 : vector<2x1x9x32xbf16> to vector<2x9x32xbf16>
    %3 = vector.extract_strided_slice %2 {offsets = [0, 0, 0], sizes = [2, 8, 32], strides = [1, 1, 1]} : vector<2x9x32xbf16> to vector<2x8x32xbf16>
    %4 = vector.extract_strided_slice %0 {offsets = [0, 0, 0, 0], sizes = [1, 1, 32, 16], strides = [1, 1, 1, 1]} : vector<2x2x32x16xbf16> to vector<1x1x32x16xbf16>
    %5 = vector.shape_cast %4 : vector<1x1x32x16xbf16> to vector<32x16xbf16>
    %cst = arith.constant dense<0.000000e+00> : vector<2x8x16xf32>
    %6 = tpu.matmul %3, %5, %cst {dimension_numbers = #tpu.dot_dimension_numbers<[2], [0], [0, 1], [1], [0, 0, 0, 1, 1, 1], [], []>} : vector<2x8x32xbf16>, vector<32x16xbf16>, vector<2x8x16xf32> -> vector<2x8x16xf32>
    %7 = vector.extract_strided_slice %2 {offsets = [0, 1, 0], sizes = [2, 8, 32], strides = [1, 1, 1]} : vector<2x9x32xbf16> to vector<2x8x32xbf16>
    %8 = vector.extract_strided_slice %0 {offsets = [0, 1, 0, 0], sizes = [1, 1, 32, 16], strides = [1, 1, 1, 1]} : vector<2x2x32x16xbf16> to vector<1x1x32x16xbf16>
    %9 = vector.shape_cast %8 : vector<1x1x32x16xbf16> to vector<32x16xbf16>
    %cst_7 = arith.constant dense<0.000000e+00> : vector<2x8x16xf32>
    %10 = tpu.matmul %7, %9, %cst_7 {dimension_numbers = #tpu.dot_dimension_numbers<[2], [0], [0, 1], [1], [0, 0, 0, 1, 1, 1], [], []>} : vector<2x8x32xbf16>, vector<32x16xbf16>, vector<2x8x16xf32> -> vector<2x8x16xf32>
    %11 = arith.addf %6, %10 : vector<2x8x16xf32>
    %c0_8 = arith.constant 0 : index
    %c0_9 = arith.constant 0 : index
    %c0_10 = arith.constant 0 : index
    %c0_11 = arith.constant 0 : index
    %12 = vector.load %arg3[%c0_8, %c0_9, %c0_10, %c0_11] : memref<2x1x9x32xbf16, #tpu.memory_space<vmem>>, vector<2x1x9x32xbf16>
    %13 = vector.shape_cast %12 : vector<2x1x9x32xbf16> to vector<2x9x32xbf16>
    %14 = vector.extract_strided_slice %13 {offsets = [0, 0, 0], sizes = [2, 8, 32], strides = [1, 1, 1]} : vector<2x9x32xbf16> to vector<2x8x32xbf16>
    %15 = vector.extract_strided_slice %0 {offsets = [1, 0, 0, 0], sizes = [1, 1, 32, 16], strides = [1, 1, 1, 1]} : vector<2x2x32x16xbf16> to vector<1x1x32x16xbf16>
    %16 = vector.shape_cast %15 : vector<1x1x32x16xbf16> to vector<32x16xbf16>
    %cst_12 = arith.constant dense<0.000000e+00> : vector<2x8x16xf32>
    %17 = tpu.matmul %14, %16, %cst_12 {dimension_numbers = #tpu.dot_dimension_numbers<[2], [0], [0, 1], [1], [0, 0, 0, 1, 1, 1], [], []>} : vector<2x8x32xbf16>, vector<32x16xbf16>, vector<2x8x16xf32> -> vector<2x8x16xf32>
    %18 = arith.addf %11, %17 : vector<2x8x16xf32>
    %19 = vector.extract_strided_slice %13 {offsets = [0, 1, 0], sizes = [2, 8, 32], strides = [1, 1, 1]} : vector<2x9x32xbf16> to vector<2x8x32xbf16>
    %20 = vector.extract_strided_slice %0 {offsets = [1, 1, 0, 0], sizes = [1, 1, 32, 16], strides = [1, 1, 1, 1]} : vector<2x2x32x16xbf16> to vector<1x1x32x16xbf16>
    %21 = vector.shape_cast %20 : vector<1x1x32x16xbf16> to vector<32x16xbf16>
    %cst_13 = arith.constant dense<0.000000e+00> : vector<2x8x16xf32>
    %22 = tpu.matmul %19, %21, %cst_13 {dimension_numbers = #tpu.dot_dimension_numbers<[2], [0], [0, 1], [1], [0, 0, 0, 1, 1, 1], [], []>} : vector<2x8x32xbf16>, vector<32x16xbf16>, vector<2x8x16xf32> -> vector<2x8x16xf32>
    %23 = arith.addf %18, %22 : vector<2x8x16xf32>
    %c0_14 = arith.constant 0 : index
    %c0_15 = arith.constant 0 : index
    %24 = vector.load %arg5[%c0_14, %c0_15] : memref<1x16xf32, #tpu.memory_space<vmem>>, vector<1x16xf32>
    %25 = vector.shape_cast %24 : vector<1x16xf32> to vector<1x1x16xf32>
    %26 = vector.broadcast %25 : vector<1x1x16xf32> to vector<2x8x16xf32>
    %27 = arith.addf %23, %26 : vector<2x8x16xf32>
    %cst_16 = arith.constant 0.000000e+00 : f32
    %28 = vector.broadcast %cst_16 : f32 to vector<2x8x16xf32>
    %29 = arith.cmpf oge, %27, %28 : vector<2x8x16xf32>
    %cst_17 = arith.constant 0.00999999977 : f32
    %30 = vector.broadcast %cst_17 : f32 to vector<2x8x16xf32>
    %31 = arith.mulf %27, %30 : vector<2x8x16xf32>
    %32 = arith.select %29, %27, %31 : vector<2x8x16xi1>, vector<2x8x16xf32>
    %33 = vector.shape_cast %32 : vector<2x8x16xf32> to vector<2x1x8x16xf32>
    %34 = arith.truncf %33 : vector<2x1x8x16xf32> to vector<2x1x8x16xbf16>
    %c0_18 = arith.constant 0 : index
    %c0_19 = arith.constant 0 : index
    %c0_20 = arith.constant 0 : index
    %c0_21 = arith.constant 0 : index
    %35 = vector.load %arg6[%c0_18, %c0_19, %c0_20, %c0_21] : memref<2x1x8x16xbf16, #tpu.memory_space<vmem>>, vector<2x1x8x16xbf16>
    tpu.vector_store %arg6[%c0_18, %c0_19, %c0_20, %c0_21], %34 {strides = array<i32>} : memref<2x1x8x16xbf16, #tpu.memory_space<vmem>>, vector<2x1x8x16xbf16>,
    return
  }
  func.func @transform_0(%arg0: i32, %arg1: i32) -> (i32, i32, i32, i32) {
    %c0_i32 = arith.constant 0 : i32
    %c0_i32_0 = arith.constant 0 : i32
    %c0_i32_1 = arith.constant 0 : i32
    %c0_i32_2 = arith.constant 0 : i32
    return %c0_i32, %arg1, %c0_i32_0, %c0_i32_1 : i32, i32, i32, i32
  }
  func.func @transform_1(%arg0: i32, %arg1: i32) -> (i32, i32, i32, i32) {
    %c1_i32 = arith.constant 1 : i32
    %0 = arith.addi %arg1, %c1_i32 : i32
    %c0_i32 = arith.constant 0 : i32
    %c0_i32_0 = arith.constant 0 : i32
    %c0_i32_1 = arith.constant 0 : i32
    %c0_i32_2 = arith.constant 0 : i32
    return %c0_i32, %0, %c0_i32_0, %c0_i32_1 : i32, i32, i32, i32
  }
  func.func @transform_2(%arg0: i32, %arg1: i32) -> (i32, i32, i32, i32) {
    %c0_i32 = arith.constant 0 : i32
    %c0_i32_0 = arith.constant 0 : i32
    %c0_i32_1 = arith.constant 0 : i32
    %c0_i32_2 = arith.constant 0 : i32
    return %c0_i32, %c0_i32_0, %c0_i32_1, %arg0 : i32, i32, i32, i32
  }
  func.func @transform_3(%arg0: i32, %arg1: i32) -> (i32, i32) {
    %c0_i32 = arith.constant 0 : i32
    %c0_i32_0 = arith.constant 0 : i32
    return %c0_i32, %arg0 : i32, i32
  }
  func.func @transform_4(%arg0: i32, %arg1: i32) -> (i32, i32, i32, i32) {
    %c0_i32 = arith.constant 0 : i32
    %c0_i32_0 = arith.constant 0 : i32
    %c0_i32_1 = arith.constant 0 : i32
    return %c0_i32, %arg1, %c0_i32_0, %arg0 : i32, i32, i32, i32
  }
}

module attributes {stable_mosaic.version = 11 : i64} {
  func.func @_conv4x4s2_kernel(%arg0: i32, %arg1: i32, %arg2: memref<2x1x5x64xbf16, #tpu.memory_space<vmem>>, %arg3: memref<2x1x5x64xbf16, #tpu.memory_space<vmem>>, %arg4: memref<2x2x64x32xbf16, #tpu.memory_space<vmem>>, %arg5: memref<1x32xf32, #tpu.memory_space<vmem>>, %arg6: memref<2x1x4x32xbf16, #tpu.memory_space<vmem>>) attributes {dimension_semantics = [#tpu.dimension_semantics<parallel>, #tpu.dimension_semantics<parallel>], iteration_bounds = array<i64: 1, 4>, scalar_prefetch = 0 : i64, scratch_operands = 0 : i64, tpu.core_type = #tpu.core_type<tc>, window_params = [{transform_indices = @transform_0, window_bounds = array<i64: 2, 1, 5, 64>}, {transform_indices = @transform_1, window_bounds = array<i64: 2, 1, 5, 64>}, {transform_indices = @transform_2, window_bounds = array<i64: 2, 2, 64, 32>}, {transform_indices = @transform_3, window_bounds = array<i64: 1, 32>}, {transform_indices = @transform_4, window_bounds = array<i64: 2, 1, 4, 32>}]} {
    %c0 = arith.constant 0 : index
    %c0_0 = arith.constant 0 : index
    %c0_1 = arith.constant 0 : index
    %c0_2 = arith.constant 0 : index
    %0 = vector.load %arg4[%c0, %c0_0, %c0_1, %c0_2] : memref<2x2x64x32xbf16, #tpu.memory_space<vmem>>, vector<2x2x64x32xbf16>
    %c0_3 = arith.constant 0 : index
    %c0_4 = arith.constant 0 : index
    %c0_5 = arith.constant 0 : index
    %c0_6 = arith.constant 0 : index
    %1 = vector.load %arg2[%c0_3, %c0_4, %c0_5, %c0_6] : memref<2x1x5x64xbf16, #tpu.memory_space<vmem>>, vector<2x1x5x64xbf16>
    %2 = vector.shape_cast %1 : vector<2x1x5x64xbf16> to vector<2x5x64xbf16>
    %3 = vector.extract_strided_slice %2 {offsets = [0, 0, 0], sizes = [2, 4, 64], strides = [1, 1, 1]} : vector<2x5x64xbf16> to vector<2x4x64xbf16>
    %4 = vector.extract_strided_slice %0 {offsets = [0, 0, 0, 0], sizes = [1, 1, 64, 32], strides = [1, 1, 1, 1]} : vector<2x2x64x32xbf16> to vector<1x1x64x32xbf16>
    %5 = vector.shape_cast %4 : vector<1x1x64x32xbf16> to vector<64x32xbf16>
    %cst = arith.constant dense<0.000000e+00> : vector<2x4x32xf32>
    %6 = tpu.matmul %3, %5, %cst {dimension_numbers = #tpu.dot_dimension_numbers<[2], [0], [0, 1], [1], [0, 0, 0, 1, 1, 1], [], []>} : vector<2x4x64xbf16>, vector<64x32xbf16>, vector<2x4x32xf32> -> vector<2x4x32xf32>
    %7 = vector.extract_strided_slice %2 {offsets = [0, 1, 0], sizes = [2, 4, 64], strides = [1, 1, 1]} : vector<2x5x64xbf16> to vector<2x4x64xbf16>
    %8 = vector.extract_strided_slice %0 {offsets = [0, 1, 0, 0], sizes = [1, 1, 64, 32], strides = [1, 1, 1, 1]} : vector<2x2x64x32xbf16> to vector<1x1x64x32xbf16>
    %9 = vector.shape_cast %8 : vector<1x1x64x32xbf16> to vector<64x32xbf16>
    %cst_7 = arith.constant dense<0.000000e+00> : vector<2x4x32xf32>
    %10 = tpu.matmul %7, %9, %cst_7 {dimension_numbers = #tpu.dot_dimension_numbers<[2], [0], [0, 1], [1], [0, 0, 0, 1, 1, 1], [], []>} : vector<2x4x64xbf16>, vector<64x32xbf16>, vector<2x4x32xf32> -> vector<2x4x32xf32>
    %11 = arith.addf %6, %10 : vector<2x4x32xf32>
    %c0_8 = arith.constant 0 : index
    %c0_9 = arith.constant 0 : index
    %c0_10 = arith.constant 0 : index
    %c0_11 = arith.constant 0 : index
    %12 = vector.load %arg3[%c0_8, %c0_9, %c0_10, %c0_11] : memref<2x1x5x64xbf16, #tpu.memory_space<vmem>>, vector<2x1x5x64xbf16>
    %13 = vector.shape_cast %12 : vector<2x1x5x64xbf16> to vector<2x5x64xbf16>
    %14 = vector.extract_strided_slice %13 {offsets = [0, 0, 0], sizes = [2, 4, 64], strides = [1, 1, 1]} : vector<2x5x64xbf16> to vector<2x4x64xbf16>
    %15 = vector.extract_strided_slice %0 {offsets = [1, 0, 0, 0], sizes = [1, 1, 64, 32], strides = [1, 1, 1, 1]} : vector<2x2x64x32xbf16> to vector<1x1x64x32xbf16>
    %16 = vector.shape_cast %15 : vector<1x1x64x32xbf16> to vector<64x32xbf16>
    %cst_12 = arith.constant dense<0.000000e+00> : vector<2x4x32xf32>
    %17 = tpu.matmul %14, %16, %cst_12 {dimension_numbers = #tpu.dot_dimension_numbers<[2], [0], [0, 1], [1], [0, 0, 0, 1, 1, 1], [], []>} : vector<2x4x64xbf16>, vector<64x32xbf16>, vector<2x4x32xf32> -> vector<2x4x32xf32>
    %18 = arith.addf %11, %17 : vector<2x4x32xf32>
    %19 = vector.extract_strided_slice %13 {offsets = [0, 1, 0], sizes = [2, 4, 64], strides = [1, 1, 1]} : vector<2x5x64xbf16> to vector<2x4x64xbf16>
    %20 = vector.extract_strided_slice %0 {offsets = [1, 1, 0, 0], sizes = [1, 1, 64, 32], strides = [1, 1, 1, 1]} : vector<2x2x64x32xbf16> to vector<1x1x64x32xbf16>
    %21 = vector.shape_cast %20 : vector<1x1x64x32xbf16> to vector<64x32xbf16>
    %cst_13 = arith.constant dense<0.000000e+00> : vector<2x4x32xf32>
    %22 = tpu.matmul %19, %21, %cst_13 {dimension_numbers = #tpu.dot_dimension_numbers<[2], [0], [0, 1], [1], [0, 0, 0, 1, 1, 1], [], []>} : vector<2x4x64xbf16>, vector<64x32xbf16>, vector<2x4x32xf32> -> vector<2x4x32xf32>
    %23 = arith.addf %18, %22 : vector<2x4x32xf32>
    %c0_14 = arith.constant 0 : index
    %c0_15 = arith.constant 0 : index
    %24 = vector.load %arg5[%c0_14, %c0_15] : memref<1x32xf32, #tpu.memory_space<vmem>>, vector<1x32xf32>
    %25 = vector.shape_cast %24 : vector<1x32xf32> to vector<1x1x32xf32>
    %26 = vector.broadcast %25 : vector<1x1x32xf32> to vector<2x4x32xf32>
    %27 = arith.addf %23, %26 : vector<2x4x32xf32>
    %cst_16 = arith.constant 0.000000e+00 : f32
    %28 = vector.broadcast %cst_16 : f32 to vector<2x4x32xf32>
    %29 = arith.cmpf oge, %27, %28 : vector<2x4x32xf32>
    %cst_17 = arith.constant 0.00999999977 : f32
    %30 = vector.broadcast %cst_17 : f32 to vector<2x4x32xf32>
    %31 = arith.mulf %27, %30 : vector<2x4x32xf32>
    %32 = arith.select %29, %27, %31 : vector<2x4x32xi1>, vector<2x4x32xf32>
    %33 = vector.shape_cast %32 : vector<2x4x32xf32> to vector<2x1x4x32xf32>
    %34 = arith.truncf %33 : vector<2x1x4x32xf32> to vector<2x1x4x32xbf16>
    %c0_18 = arith.constant 0 : index
    %c0_19 = arith.constant 0 : index
    %c0_20 = arith.constant 0 : index
    %c0_21 = arith.constant 0 : index
    %35 = vector.load %arg6[%c0_18, %c0_19, %c0_20, %c0_21] : memref<2x1x4x32xbf16, #tpu.memory_space<vmem>>, vector<2x1x4x32xbf16>
    tpu.vector_store %arg6[%c0_18, %c0_19, %c0_20, %c0_21], %34 {strides = array<i32>} : memref<2x1x4x32xbf16, #tpu.memory_space<vmem>>, vector<2x1x4x32xbf16>,
    return
  }
  func.func @transform_0(%arg0: i32, %arg1: i32) -> (i32, i32, i32, i32) {
    %c0_i32 = arith.constant 0 : i32
    %c0_i32_0 = arith.constant 0 : i32
    %c0_i32_1 = arith.constant 0 : i32
    %c0_i32_2 = arith.constant 0 : i32
    return %c0_i32, %arg1, %c0_i32_0, %c0_i32_1 : i32, i32, i32, i32
  }
  func.func @transform_1(%arg0: i32, %arg1: i32) -> (i32, i32, i32, i32) {
    %c1_i32 = arith.constant 1 : i32
    %0 = arith.addi %arg1, %c1_i32 : i32
    %c0_i32 = arith.constant 0 : i32
    %c0_i32_0 = arith.constant 0 : i32
    %c0_i32_1 = arith.constant 0 : i32
    %c0_i32_2 = arith.constant 0 : i32
    return %c0_i32, %0, %c0_i32_0, %c0_i32_1 : i32, i32, i32, i32
  }
  func.func @transform_2(%arg0: i32, %arg1: i32) -> (i32, i32, i32, i32) {
    %c0_i32 = arith.constant 0 : i32
    %c0_i32_0 = arith.constant 0 : i32
    %c0_i32_1 = arith.constant 0 : i32
    %c0_i32_2 = arith.constant 0 : i32
    return %c0_i32, %c0_i32_0, %c0_i32_1, %arg0 : i32, i32, i32, i32
  }
  func.func @transform_3(%arg0: i32, %arg1: i32) -> (i32, i32) {
    %c0_i32 = arith.constant 0 : i32
    %c0_i32_0 = arith.constant 0 : i32
    return %c0_i32, %arg0 : i32, i32
  }
  func.func @transform_4(%arg0: i32, %arg1: i32) -> (i32, i32, i32, i32) {
    %c0_i32 = arith.constant 0 : i32
    %c0_i32_0 = arith.constant 0 : i32
    %c0_i32_1 = arith.constant 0 : i32
    return %c0_i32, %arg1, %c0_i32_0, %arg0 : i32, i32, i32, i32
  }
}

module attributes {stable_mosaic.version = 11 : i64} {
  func.func @_gemm_kernel(%arg0: i32, %arg1: i32, %arg2: i32, %arg3: memref<32x288xbf16, #tpu.memory_space<vmem>>, %arg4: memref<288x1xbf16, #tpu.memory_space<vmem>>, %arg5: memref<32x1xf32, #tpu.memory_space<vmem>>, %arg6: memref<32x1xf32, #tpu.memory_space<vmem>>) attributes {dimension_semantics = [#tpu.dimension_semantics<parallel>, #tpu.dimension_semantics<parallel>, #tpu.dimension_semantics<arbitrary>], iteration_bounds = array<i64: 1, 1, 1>, scalar_prefetch = 0 : i64, scratch_operands = 1 : i64, tpu.core_type = #tpu.core_type<tc>, window_params = [{transform_indices = @transform_0, window_bounds = array<i64: 32, 288>}, {transform_indices = @transform_1, window_bounds = array<i64: 288, 1>}, {transform_indices = @transform_2, window_bounds = array<i64: 32, 1>}]} {
    %c0_i32 = arith.constant 0 : i32
    %0 = arith.cmpi eq, %arg2, %c0_i32 : i32
    %1 = arith.extui %0 : i1 to i32
    %c0_i32_0 = arith.constant 0 : i32
    %2 = arith.cmpi ne, %1, %c0_i32_0 : i32
    scf.if %2 {
      %cst_10 = arith.constant 0.000000e+00 : f32
      %12 = vector.broadcast %cst_10 : f32 to vector<32x1xf32>
      %c0_11 = arith.constant 0 : index
      %c0_12 = arith.constant 0 : index
      %13 = vector.load %arg6[%c0_11, %c0_12] : memref<32x1xf32, #tpu.memory_space<vmem>>, vector<32x1xf32>
      tpu.vector_store %arg6[%c0_11, %c0_12], %12 {strides = array<i32>} : memref<32x1xf32, #tpu.memory_space<vmem>>, vector<32x1xf32>,
    } else {
    }
    %c0 = arith.constant 0 : index
    %c0_1 = arith.constant 0 : index
    %3 = vector.load %arg6[%c0, %c0_1] : memref<32x1xf32, #tpu.memory_space<vmem>>, vector<32x1xf32>
    %c0_2 = arith.constant 0 : index
    %c0_3 = arith.constant 0 : index
    %4 = vector.load %arg3[%c0_2, %c0_3] : memref<32x288xbf16, #tpu.memory_space<vmem>>, vector<32x288xbf16>
    %c0_4 = arith.constant 0 : index
    %c0_5 = arith.constant 0 : index
    %5 = vector.load %arg4[%c0_4, %c0_5] : memref<288x1xbf16, #tpu.memory_space<vmem>>, vector<288x1xbf16>
    %cst = arith.constant dense<0.000000e+00> : vector<32x1xf32>
    %6 = tpu.matmul %4, %5, %cst {dimension_numbers = #tpu.dot_dimension_numbers<[1], [0], [0], [1], [0, 0, 1, 1], [], []>} : vector<32x288xbf16>, vector<288x1xbf16>, vector<32x1xf32> -> vector<32x1xf32>
    %7 = arith.addf %3, %6 : vector<32x1xf32>
    %c0_6 = arith.constant 0 : index
    %c0_7 = arith.constant 0 : index
    %8 = vector.load %arg6[%c0_6, %c0_7] : memref<32x1xf32, #tpu.memory_space<vmem>>, vector<32x1xf32>
    tpu.vector_store %arg6[%c0_6, %c0_7], %7 {strides = array<i32>} : memref<32x1xf32, #tpu.memory_space<vmem>>, vector<32x1xf32>,
    %c0_i32_8 = arith.constant 0 : i32
    %9 = arith.cmpi eq, %arg2, %c0_i32_8 : i32
    %10 = arith.extui %9 : i1 to i32
    %c0_i32_9 = arith.constant 0 : i32
    %11 = arith.cmpi ne, %10, %c0_i32_9 : i32
    scf.if %11 {
      %c0_10 = arith.constant 0 : index
      %c0_11 = arith.constant 0 : index
      %12 = vector.load %arg6[%c0_10, %c0_11] : memref<32x1xf32, #tpu.memory_space<vmem>>, vector<32x1xf32>
      %c0_12 = arith.constant 0 : index
      %c0_13 = arith.constant 0 : index
      %13 = vector.load %arg5[%c0_12, %c0_13] : memref<32x1xf32, #tpu.memory_space<vmem>>, vector<32x1xf32>
      tpu.vector_store %arg5[%c0_12, %c0_13], %12 {strides = array<i32>} : memref<32x1xf32, #tpu.memory_space<vmem>>, vector<32x1xf32>,
    } else {
    }
    return
  }
  func.func @transform_0(%arg0: i32, %arg1: i32, %arg2: i32) -> (i32, i32) {
    %c0_i32 = arith.constant 0 : i32
    return %arg0, %arg2 : i32, i32
  }
  func.func @transform_1(%arg0: i32, %arg1: i32, %arg2: i32) -> (i32, i32) {
    %c0_i32 = arith.constant 0 : i32
    return %arg2, %arg1 : i32, i32
  }
  func.func @transform_2(%arg0: i32, %arg1: i32, %arg2: i32) -> (i32, i32) {
    %c0_i32 = arith.constant 0 : i32
    return %arg0, %arg1 : i32, i32
  }
}

module attributes {stable_mosaic.version = 11 : i64} {
  func.func @_gemm_kernel(%arg0: i32, %arg1: i32, %arg2: i32, %arg3: memref<2x512xbf16, #tpu.memory_space<vmem>>, %arg4: memref<512x5xbf16, #tpu.memory_space<vmem>>, %arg5: memref<2x5xf32, #tpu.memory_space<vmem>>, %arg6: memref<2x5xf32, #tpu.memory_space<vmem>>) attributes {dimension_semantics = [#tpu.dimension_semantics<parallel>, #tpu.dimension_semantics<parallel>, #tpu.dimension_semantics<arbitrary>], iteration_bounds = array<i64: 1, 1, 1>, scalar_prefetch = 0 : i64, scratch_operands = 1 : i64, tpu.core_type = #tpu.core_type<tc>, window_params = [{transform_indices = @transform_0, window_bounds = array<i64: 2, 512>}, {transform_indices = @transform_1, window_bounds = array<i64: 512, 5>}, {transform_indices = @transform_2, window_bounds = array<i64: 2, 5>}]} {
    %c0_i32 = arith.constant 0 : i32
    %0 = arith.cmpi eq, %arg2, %c0_i32 : i32
    %1 = arith.extui %0 : i1 to i32
    %c0_i32_0 = arith.constant 0 : i32
    %2 = arith.cmpi ne, %1, %c0_i32_0 : i32
    scf.if %2 {
      %cst_10 = arith.constant 0.000000e+00 : f32
      %12 = vector.broadcast %cst_10 : f32 to vector<2x5xf32>
      %c0_11 = arith.constant 0 : index
      %c0_12 = arith.constant 0 : index
      %13 = vector.load %arg6[%c0_11, %c0_12] : memref<2x5xf32, #tpu.memory_space<vmem>>, vector<2x5xf32>
      tpu.vector_store %arg6[%c0_11, %c0_12], %12 {strides = array<i32>} : memref<2x5xf32, #tpu.memory_space<vmem>>, vector<2x5xf32>,
    } else {
    }
    %c0 = arith.constant 0 : index
    %c0_1 = arith.constant 0 : index
    %3 = vector.load %arg6[%c0, %c0_1] : memref<2x5xf32, #tpu.memory_space<vmem>>, vector<2x5xf32>
    %c0_2 = arith.constant 0 : index
    %c0_3 = arith.constant 0 : index
    %4 = vector.load %arg3[%c0_2, %c0_3] : memref<2x512xbf16, #tpu.memory_space<vmem>>, vector<2x512xbf16>
    %c0_4 = arith.constant 0 : index
    %c0_5 = arith.constant 0 : index
    %5 = vector.load %arg4[%c0_4, %c0_5] : memref<512x5xbf16, #tpu.memory_space<vmem>>, vector<512x5xbf16>
    %cst = arith.constant dense<0.000000e+00> : vector<2x5xf32>
    %6 = tpu.matmul %4, %5, %cst {dimension_numbers = #tpu.dot_dimension_numbers<[1], [0], [0], [1], [0, 0, 1, 1], [], []>} : vector<2x512xbf16>, vector<512x5xbf16>, vector<2x5xf32> -> vector<2x5xf32>
    %7 = arith.addf %3, %6 : vector<2x5xf32>
    %c0_6 = arith.constant 0 : index
    %c0_7 = arith.constant 0 : index
    %8 = vector.load %arg6[%c0_6, %c0_7] : memref<2x5xf32, #tpu.memory_space<vmem>>, vector<2x5xf32>
    tpu.vector_store %arg6[%c0_6, %c0_7], %7 {strides = array<i32>} : memref<2x5xf32, #tpu.memory_space<vmem>>, vector<2x5xf32>,
    %c0_i32_8 = arith.constant 0 : i32
    %9 = arith.cmpi eq, %arg2, %c0_i32_8 : i32
    %10 = arith.extui %9 : i1 to i32
    %c0_i32_9 = arith.constant 0 : i32
    %11 = arith.cmpi ne, %10, %c0_i32_9 : i32
    scf.if %11 {
      %c0_10 = arith.constant 0 : index
      %c0_11 = arith.constant 0 : index
      %12 = vector.load %arg6[%c0_10, %c0_11] : memref<2x5xf32, #tpu.memory_space<vmem>>, vector<2x5xf32>
      %c0_12 = arith.constant 0 : index
      %c0_13 = arith.constant 0 : index
      %13 = vector.load %arg5[%c0_12, %c0_13] : memref<2x5xf32, #tpu.memory_space<vmem>>, vector<2x5xf32>
      tpu.vector_store %arg5[%c0_12, %c0_13], %12 {strides = array<i32>} : memref<2x5xf32, #tpu.memory_space<vmem>>, vector<2x5xf32>,
    } else {
    }
    return
  }
  func.func @transform_0(%arg0: i32, %arg1: i32, %arg2: i32) -> (i32, i32) {
    %c0_i32 = arith.constant 0 : i32
    return %arg0, %arg2 : i32, i32
  }
  func.func @transform_1(%arg0: i32, %arg1: i32, %arg2: i32) -> (i32, i32) {
    %c0_i32 = arith.constant 0 : i32
    return %arg2, %arg1 : i32, i32
  }
  func.func @transform_2(%arg0: i32, %arg1: i32, %arg2: i32) -> (i32, i32) {
    %c0_i32 = arith.constant 0 : i32
    return %arg0, %arg1 : i32, i32
  }
}

</mosaic_0001>

<llo_original>
// kernel: discriminator_forward.5
$region0: #{discriminator_forward.5}
  #allocation0 [shape = 'u32[]', space=smem, size = 0x4, offset = 0x4, fixed_abs, tag = 'smem constant byte address 0x4 - core index']
  #allocation1 [shape = 'u32[72,128]{1,0:T(1,128)}', space=vmem, size = 0x9000, scoped, tag = 'internal scratch']
  %s0 = inlined_call_operand.vmem [shape: bf16[2,17,17,12], index: 0, kind: input, shape index: {}, may-alias: {0,1}]
  %s1 = inlined_call_operand.vmem [shape: bf16[2,17,17,12], index: 1, kind: input, shape index: {}, may-alias: {0,1}]
  %s2 = inlined_call_operand.vmem [shape: bf16[2,2,12,8], index: 2, kind: input, shape index: {}]
  %s3 = inlined_call_operand.vmem [shape: f32[1,8], index: 3, kind: input, shape index: {}]
  %s4 = inlined_call_operand.vmem [shape: bf16[2,16,16,8], index: 4, kind: output, shape index: {}]
  %s5 = sld [smem:[#allocation0]]
  $region168: #{discriminator_forward.5} parent=0
    _
  %s7 = ssub.s32 1, %s5
  %s8 = scalar_select 0, %s7, %s5
  $region1: #{discriminator_forward.5} parent=0
    #allocation2 [shape = 'u8[24576]{0}', space=vmem, size = 0x6000, scoped, tag = 'input window, operand 0']
    #allocation3 [shape = 'u8[24576]{0}', space=vmem, size = 0x6000, scoped, tag = 'input window, operand 1']
    #allocation4 [shape = 'u8[16384]{0}', space=vmem, size = 0x4000, scoped, tag = 'output window, operand 0']
    loop: start=0, step=1, limit=18
    $region2: #{discriminator_forward.5} parent=1 // loop_pre_header
      _
    $region3: #{discriminator_forward.5} parent=1 // loop_header
      %s10 = sphi 0, %s14
      %p11 = scmp.ge.s32.totalorder %s10, 18
      %s17 = sphi 0, %s29
      %s18 = sphi 0, %s25
      %s19 = sphi 0, %s17
      %s20 = sphi 0, %s18
      %s21 = sphi 0, %s19
      %s22 = sphi 0, %s20
      %s32 = sphi 0, %s34
      %s35 = sphi 0, %s32
      %s36 = sphi 0, %s35
      %s52 = sphi 0, %s36
      %s60 = sphi 0, %s62
      %s63 = sphi 0, %s60
      %s64 = sphi 0, %s63
      %s80 = sphi 0, %s64
      %s86 = sphi 0, %s88
      %s89 = sphi 0, %s86
      %s90 = sphi 0, %s89
      %s106 = sphi 0, %s90
      %s112 = sphi 0, %s114
      %s115 = sphi 0, %s112
      %s116 = sphi 0, %s115
      %s132 = sphi 0, %s116
      %s140 = sphi 0, %s142
      %s143 = sphi 0, %s140
      %s144 = sphi 0, %s143
      %s160 = sphi 0, %s144
    $region4: #{discriminator_forward.5} parent=1 // loop_header_branch
      %13 = sbr.rel (%p11) target = $region8
    $region5: #{discriminator_forward.5} parent=1 // loop_body
      %s15 = ssub.s32 %s10, 1
      %s16 = ssub.s32 %s10, 2
      %s23 = sadd.s32 1, %s18
      %p24 = scmp.ge.s32.totalorder %s23, 16
      %s25 = scalar_select %p24, 0, %s23
      %s26 = sadd.s32 1, %s17
      %s27 = scalar_select %p24, %s26, %s17
      %p28 = scmp.ge.s32.totalorder %s27, 1
      %s29 = scalar_select %p28, 0, %s27
      %s30 = ssub.s32 %s18, %s25
      %p31 = scmp.eq.s32.totalorder %s30, 0
      %s33 = sadd.s32 %s32, 1
      %s34 = scalar_select %p31, %s32, %s33
      %p37 = pneg %p31
      %p38 = scmp.eq.s32.totalorder %s10, 15
      %p39 = por %p37, %p38
      %p40 = scmp.ne.s32.totalorder %s32, %s35
      %p41 = scmp.eq.s32.totalorder %s10, 0
      %p42 = por %p40, %p41
      %p43 = scmp.ne.s32.totalorder %s32, %s35
      %p44 = scmp.eq.s32.totalorder %s15, 15
      %p45 = por %p43, %p44
      %p46 = scmp.ne.s32.totalorder %s35, %s36
      %p47 = scmp.eq.s32.totalorder %s15, 0
      %p48 = por %p46, %p47
      %p49 = scmp.ne.s32.totalorder %s35, %s36
      %p50 = scmp.eq.s32.totalorder %s16, 15
      %p51 = por %p49, %p50
      %p53 = scmp.ne.s32.totalorder %s36, %s52
      %p54 = scmp.eq.s32.totalorder %s16, 0
      %p55 = por %p53, %p54
      %s56 = sadd.s32 %s18, 1
      %s57 = sadd.s32 %s25, 1
      %s58 = ssub.s32 %s56, %s57
      %p59 = scmp.eq.s32.totalorder %s58, 0
      %s61 = sadd.s32 %s60, 1
      %s62 = scalar_select %p59, %s60, %s61
      %p65 = pneg %p59
      %p66 = scmp.eq.s32.totalorder %s10, 15
      %p67 = por %p65, %p66
      %p68 = scmp.ne.s32.totalorder %s60, %s63
      %p69 = scmp.eq.s32.totalorder %s10, 0
      %p70 = por %p68, %p69
      %p71 = scmp.ne.s32.totalorder %s60, %s63
      %p72 = scmp.eq.s32.totalorder %s15, 15
      %p73 = por %p71, %p72
      %p74 = scmp.ne.s32.totalorder %s63, %s64
      %p75 = scmp.eq.s32.totalorder %s15, 0
      %p76 = por %p74, %p75
      %p77 = scmp.ne.s32.totalorder %s63, %s64
      %p78 = scmp.eq.s32.totalorder %s16, 15
      %p79 = por %p77, %p78
      %p81 = scmp.ne.s32.totalorder %s64, %s80
      %p82 = scmp.eq.s32.totalorder %s16, 0
      %p83 = por %p81, %p82
      %s84 = ssub.s32 %s17, %s29
      %p85 = scmp.eq.s32.totalorder %s84, 0
      %s87 = sadd.s32 %s86, 1
      %s88 = scalar_select %p85, %s86, %s87
      %p91 = pneg %p85
      %p92 = scmp.eq.s32.totalorder %s10, 15
      %p93 = por %p91, %p92
      %p94 = scmp.ne.s32.totalorder %s86, %s89
      %p95 = scmp.eq.s32.totalorder %s10, 0
      %p96 = por %p94, %p95
      %p97 = scmp.ne.s32.totalorder %s86, %s89
      %p98 = scmp.eq.s32.totalorder %s15, 15
      %p99 = por %p97, %p98
      %p100 = scmp.ne.s32.totalorder %s89, %s90
      %p101 = scmp.eq.s32.totalorder %s15, 0
      %p102 = por %p100, %p101
      %p103 = scmp.ne.s32.totalorder %s89, %s90
      %p104 = scmp.eq.s32.totalorder %s16, 15
      %p105 = por %p103, %p104
      %p107 = scmp.ne.s32.totalorder %s90, %s106
      %p108 = scmp.eq.s32.totalorder %s16, 0
      %p109 = por %p107, %p108
      %s110 = ssub.s32 %s17, %s29
      %p111 = scmp.eq.s32.totalorder %s110, 0
      %s113 = sadd.s32 %s112, 1
      %s114 = scalar_select %p111, %s112, %s113
      %p117 = pneg %p111
      %p118 = scmp.eq.s32.totalorder %s10, 15
      %p119 = por %p117, %p118
      %p120 = scmp.ne.s32.totalorder %s112, %s115
      %p121 = scmp.eq.s32.totalorder %s10, 0
      %p122 = por %p120, %p121
      %p123 = scmp.ne.s32.totalorder %s112, %s115
      %p124 = scmp.eq.s32.totalorder %s15, 15
      %p125 = por %p123, %p124
      %p126 = scmp.ne.s32.totalorder %s115, %s116
      %p127 = scmp.eq.s32.totalorder %s15, 0
      %p128 = por %p126, %p127
      %p129 = scmp.ne.s32.totalorder %s115, %s116
      %p130 = scmp.eq.s32.totalorder %s16, 15
      %p131 = por %p129, %p130
      %p133 = scmp.ne.s32.totalorder %s116, %s132
      %p134 = scmp.eq.s32.totalorder %s16, 0
      %p135 = por %p133, %p134
      %s136 = ssub.s32 %s18, %s25
      %s137 = ssub.s32 %s17, %s29
      %s138 = sor.u32 %s136, %s137
      %p139 = scmp.eq.s32.totalorder %s138, 0
      %s141 = sadd.s32 %s140, 1
      %s142 = scalar_select %p139, %s140, %s141
      %p145 = pneg %p139
      %p146 = scmp.eq.s32.totalorder %s10, 15
      %p147 = por %p145, %p146
      %p148 = scmp.ne.s32.totalorder %s140, %s143
      %p149 = scmp.eq.s32.totalorder %s10, 0
      %p150 = por %p148, %p149
      %p151 = scmp.ne.s32.totalorder %s140, %s143
      %p152 = scmp.eq.s32.totalorder %s15, 15
      %p153 = por %p151, %p152
      %p154 = scmp.ne.s32.totalorder %s143, %s144
      %p155 = scmp.eq.s32.totalorder %s15, 0
      %p156 = por %p154, %p155
      %p157 = scmp.ne.s32.totalorder %s143, %s144
      %p158 = scmp.eq.s32.totalorder %s16, 15
      %p159 = por %p157, %p158
      %p161 = scmp.ne.s32.totalorder %s144, %s160
      %p162 = scmp.eq.s32.totalorder %s16, 0
      %p163 = por %p161, %p162
      %p164 = scmp.le.s32.totalorder 1, %s10
      %p165 = scmp.lt.s32.totalorder %s10, 17
      %p166 = pnand %p164, %p165
      %p167 = pneg %p166
      // Predicated region
      $region9: #{discriminator_forward.5} parent=5 // pred_check
        _
      $region10: #{discriminator_forward.5} parent=5 // pred_check_branch
        %169 = sbr.rel (%p166) target = $region12
      $region11: #{discriminator_forward.5} parent=5 // pred_region
        %s170 = ssub.s32 %s10, 1
        // Predicated region
        $region13: #{discriminator_forward.5} parent=11 // pred_check
          %p171 = pneg %p102
        $region14: #{discriminator_forward.5} parent=11 // pred_check_branch
          %173 = sbr.rel (%p171) target = $region16
        $region15: #{discriminator_forward.5} parent=11 // pred_region
          %p174 = scmp.lt.s32.totalorder %s19, 0
          %s175 = scalar_select %p174, %s19, 0
          %s176 = smul.addr %s175, 4
          %s177 = scalar_lea.vmem %s2, %s176
        $region16: #{discriminator_forward.5} parent=11 // pred_fallthru
          _
        // Predicated region
        $region17: #{discriminator_forward.5} parent=11 // pred_check
          %p178 = pneg %p128
        $region18: #{discriminator_forward.5} parent=11 // pred_check_branch
          %180 = sbr.rel (%p178) target = $region20
        $region19: #{discriminator_forward.5} parent=11 // pred_region
          %p181 = scmp.lt.s32.totalorder %s19, 0
          %s182 = scalar_select %p181, %s19, 0
          %s183 = scalar_lea.vmem %s3, %s182
        $region20: #{discriminator_forward.5} parent=11 // pred_fallthru
          _
      $region12: #{discriminator_forward.5} parent=5 // pred_fallthru
        _
      %p184 = scmp.lt.s32.totalorder %s10, 16
      // Predicated region
      $region21: #{discriminator_forward.5} parent=5 // pred_check
        %p185 = pneg %p184
      $region22: #{discriminator_forward.5} parent=5 // pred_check_branch
        %187 = sbr.rel (%p185) target = $region24
      $region23: #{discriminator_forward.5} parent=5 // pred_region
        // Predicated region
        $region25: #{discriminator_forward.5} parent=23 // pred_check
          %p188 = pneg %p42
        $region26: #{discriminator_forward.5} parent=23 // pred_check_branch
          %190 = sbr.rel (%p188) target = $region28
        $region27: #{discriminator_forward.5} parent=23 // pred_region
          %s191 = sand.u32 %s32, 1
          %s192 = sand.u32 %s32, 1
          %s193 = smul.addr %s192, 24
          %s194 = scalar_lea.vmem [#allocation2], %s193
          %s195 = smul.addr %s18, 3
          %s196 = smul.addr %s195, 4
          %s197 = scalar_lea.vmem %s0, %s196
          // Predicated region
          $region29: #{discriminator_forward.5} parent=27 // pred_check
            _
          $region30: #{discriminator_forward.5} parent=27 // pred_check_branch
            %199 = sbr.rel (0) target = $region32
          $region31: #{discriminator_forward.5} parent=27 // pred_region
            // Predicated region
            $region33: #{discriminator_forward.5} parent=31 // pred_check
              _
            $region34: #{discriminator_forward.5} parent=31 // pred_check_branch
              %201 = sbr.rel target = $region36
            $region35: #{discriminator_forward.5} parent=31 // pred_region
              // Predicated region
              $region48: #{discriminator_forward.5} parent=35 // pred_check
                _
              $region49: #{discriminator_forward.5} parent=35 // pred_check_branch
                %227 = sbr.rel (0) target = $region51
              $region50: #{discriminator_forward.5} parent=35 // pred_region
                loop: start=0, step=1, limit=1
                $region52: #{discriminator_forward.5} parent=50 // loop_pre_header
                  _
                $region53: #{discriminator_forward.5} parent=50 // loop_header
                  %s229 = sphi 0, %s233
                  %p230 = scmp.ge.s32.totalorder %s229, 1
                  %s234 = sphi %s197, %s197
                  %s235 = sphi %s194, %s194
                $region54: #{discriminator_forward.5} parent=50 // loop_header_branch
                  %232 = sbr.rel (%p230) target = $region58
                $region55: #{discriminator_forward.5} parent=50 // loop_body
                  _
                $region56: #{discriminator_forward.5} parent=50 // loop_footer
                  %s233 = sadd.s32 1, %s229
                $region57: #{discriminator_forward.5} parent=50 // loop_footer_branch
                  %228 = sbr.rel target = $region53
                $region58: #{discriminator_forward.5} parent=50 // loop_exit
                  _
                %s237 = ssub.s32 16, 1
                loop: start=0, step=1, limit=1
                $region59: #{discriminator_forward.5} parent=50 // loop_pre_header
                  _
                $region60: #{discriminator_forward.5} parent=50 // loop_header
                  %s239 = sphi 0, %s243
                  %p240 = scmp.ge.s32.totalorder %s239, 1
                  %s244 = sphi %s197, %s197
                  %s245 = sphi %s194, %s194
                $region61: #{discriminator_forward.5} parent=50 // loop_header_branch
                  %242 = sbr.rel (%p240) target = $region65
                $region62: #{discriminator_forward.5} parent=50 // loop_body
                  %v246 = vld [vmem:[%s244] sm:%s237]
                  %247 = vst [vmem:[%s245] sm:%s237] %v246
                  %v248 = vld [vmem:[%s244 + $0x4] sm:%s237]
                  %249 = vst [vmem:[%s245 + $0x4] sm:%s237] %v248
                  %v250 = vld [vmem:[%s244 + $0x8] sm:%s237]
                  %251 = vst [vmem:[%s245 + $0x8] sm:%s237] %v250
                  %v252 = vld [vmem:[%s244 + $0xcc] sm:%s237]
                  %253 = vst [vmem:[%s245 + $0xc] sm:%s237] %v252
                  %v254 = vld [vmem:[%s244 + $0xd0] sm:%s237]
                  %255 = vst [vmem:[%s245 + $0x10] sm:%s237] %v254
                  %v256 = vld [vmem:[%s244 + $0xd4] sm:%s237]
                  %257 = vst [vmem:[%s245 + $0x14] sm:%s237] %v256
                $region63: #{discriminator_forward.5} parent=50 // loop_footer
                  %s243 = sadd.s32 1, %s239
                $region64: #{discriminator_forward.5} parent=50 // loop_footer_branch
                  %238 = sbr.rel target = $region60
                $region65: #{discriminator_forward.5} parent=50 // loop_exit
                  _
              $region51: #{discriminator_forward.5} parent=35 // pred_fallthru
                _
            $region36: #{discriminator_forward.5} parent=31 // pred_fallthru
              _
            // Predicated region
            $region37: #{discriminator_forward.5} parent=31 // pred_check
              _
            $region38: #{discriminator_forward.5} parent=31 // pred_check_branch
              %203 = sbr.rel (0) target = $region40
            $region39: #{discriminator_forward.5} parent=31 // pred_region
              %s205 = ssub.s32 16, 1
              loop: start=0, step=1, limit=1
              $region41: #{discriminator_forward.5} parent=39 // loop_pre_header
                _
              $region42: #{discriminator_forward.5} parent=39 // loop_header
                %s207 = sphi 0, %s211
                %p208 = scmp.ge.s32.totalorder %s207, 1
                %s212 = sphi %s197, %s197
                %s213 = sphi %s194, %s194
              $region43: #{discriminator_forward.5} parent=39 // loop_header_branch
                %210 = sbr.rel (%p208) target = $region47
              $region44: #{discriminator_forward.5} parent=39 // loop_body
                %v214 = vld [vmem:[%s212] sm:%s205]
                %215 = vst [vmem:[%s213] sm:%s205] %v214
                %v216 = vld [vmem:[%s212 + $0x4] sm:%s205]
                %217 = vst [vmem:[%s213 + $0x4] sm:%s205] %v216
                %v218 = vld [vmem:[%s212 + $0x8] sm:%s205]
                %219 = vst [vmem:[%s213 + $0x8] sm:%s205] %v218
                %v220 = vld [vmem:[%s212 + $0xcc] sm:%s205]
                %221 = vst [vmem:[%s213 + $0xc] sm:%s205] %v220
                %v222 = vld [vmem:[%s212 + $0xd0] sm:%s205]
                %223 = vst [vmem:[%s213 + $0x10] sm:%s205] %v222
                %v224 = vld [vmem:[%s212 + $0xd4] sm:%s205]
                %225 = vst [vmem:[%s213 + $0x14] sm:%s205] %v224
              $region45: #{discriminator_forward.5} parent=39 // loop_footer
                %s211 = sadd.s32 1, %s207
              $region46: #{discriminator_forward.5} parent=39 // loop_footer_branch
                %206 = sbr.rel target = $region42
              $region47: #{discriminator_forward.5} parent=39 // loop_exit
                _
            $region40: #{discriminator_forward.5} parent=31 // pred_fallthru
              _
          $region32: #{discriminator_forward.5} parent=27 // pred_fallthru
            _
          %258 = vnop
        $region28: #{discriminator_forward.5} parent=23 // pred_fallthru
          _
        // Predicated region
        $region66: #{discriminator_forward.5} parent=23 // pred_check
          %p259 = pneg %p70
        $region67: #{discriminator_forward.5} parent=23 // pred_check_branch
          %261 = sbr.rel (%p259) target = $region69
        $region68: #{discriminator_forward.5} parent=23 // pred_region
          %s262 = sand.u32 %s60, 1
          %s263 = sand.u32 %s60, 1
          %s264 = smul.addr %s263, 24
          %s265 = scalar_lea.vmem [#allocation3], %s264
          %s266 = sadd.s32 %s18, 1
          %s267 = smul.addr %s266, 3
          %s268 = smul.addr %s267, 4
          %s269 = scalar_lea.vmem %s1, %s268
          // Predicated region
          $region70: #{discriminator_forward.5} parent=68 // pred_check
            _
          $region71: #{discriminator_forward.5} parent=68 // pred_check_branch
            %271 = sbr.rel (0) target = $region73
          $region72: #{discriminator_forward.5} parent=68 // pred_region
            // Predicated region
            $region74: #{discriminator_forward.5} parent=72 // pred_check
              _
            $region75: #{discriminator_forward.5} parent=72 // pred_check_branch
              %273 = sbr.rel target = $region77
            $region76: #{discriminator_forward.5} parent=72 // pred_region
              // Predicated region
              $region89: #{discriminator_forward.5} parent=76 // pred_check
                _
              $region90: #{discriminator_forward.5} parent=76 // pred_check_branch
                %299 = sbr.rel (0) target = $region92
              $region91: #{discriminator_forward.5} parent=76 // pred_region
                loop: start=0, step=1, limit=1
                $region93: #{discriminator_forward.5} parent=91 // loop_pre_header
                  _
                $region94: #{discriminator_forward.5} parent=91 // loop_header
                  %s301 = sphi 0, %s305
                  %p302 = scmp.ge.s32.totalorder %s301, 1
                  %s306 = sphi %s269, %s269
                  %s307 = sphi %s265, %s265
                $region95: #{discriminator_forward.5} parent=91 // loop_header_branch
                  %304 = sbr.rel (%p302) target = $region99
                $region96: #{discriminator_forward.5} parent=91 // loop_body
                  _
                $region97: #{discriminator_forward.5} parent=91 // loop_footer
                  %s305 = sadd.s32 1, %s301
                $region98: #{discriminator_forward.5} parent=91 // loop_footer_branch
                  %300 = sbr.rel target = $region94
                $region99: #{discriminator_forward.5} parent=91 // loop_exit
                  _
                %s309 = ssub.s32 16, 1
                loop: start=0, step=1, limit=1
                $region100: #{discriminator_forward.5} parent=91 // loop_pre_header
                  _
                $region101: #{discriminator_forward.5} parent=91 // loop_header
                  %s311 = sphi 0, %s315
                  %p312 = scmp.ge.s32.totalorder %s311, 1
                  %s316 = sphi %s269, %s269
                  %s317 = sphi %s265, %s265
                $region102: #{discriminator_forward.5} parent=91 // loop_header_branch
                  %314 = sbr.rel (%p312) target = $region106
                $region103: #{discriminator_forward.5} parent=91 // loop_body
                  %v318 = vld [vmem:[%s316] sm:%s309]
                  %319 = vst [vmem:[%s317] sm:%s309] %v318
                  %v320 = vld [vmem:[%s316 + $0x4] sm:%s309]
                  %321 = vst [vmem:[%s317 + $0x4] sm:%s309] %v320
                  %v322 = vld [vmem:[%s316 + $0x8] sm:%s309]
                  %323 = vst [vmem:[%s317 + $0x8] sm:%s309] %v322
                  %v324 = vld [vmem:[%s316 + $0xcc] sm:%s309]
                  %325 = vst [vmem:[%s317 + $0xc] sm:%s309] %v324
                  %v326 = vld [vmem:[%s316 + $0xd0] sm:%s309]
                  %327 = vst [vmem:[%s317 + $0x10] sm:%s309] %v326
                  %v328 = vld [vmem:[%s316 + $0xd4] sm:%s309]
                  %329 = vst [vmem:[%s317 + $0x14] sm:%s309] %v328
                $region104: #{discriminator_forward.5} parent=91 // loop_footer
                  %s315 = sadd.s32 1, %s311
                $region105: #{discriminator_forward.5} parent=91 // loop_footer_branch
                  %310 = sbr.rel target = $region101
                $region106: #{discriminator_forward.5} parent=91 // loop_exit
                  _
              $region92: #{discriminator_forward.5} parent=76 // pred_fallthru
                _
            $region77: #{discriminator_forward.5} parent=72 // pred_fallthru
              _
            // Predicated region
            $region78: #{discriminator_forward.5} parent=72 // pred_check
              _
            $region79: #{discriminator_forward.5} parent=72 // pred_check_branch
              %275 = sbr.rel (0) target = $region81
            $region80: #{discriminator_forward.5} parent=72 // pred_region
              %s277 = ssub.s32 16, 1
              loop: start=0, step=1, limit=1
              $region82: #{discriminator_forward.5} parent=80 // loop_pre_header
                _
              $region83: #{discriminator_forward.5} parent=80 // loop_header
                %s279 = sphi 0, %s283
                %p280 = scmp.ge.s32.totalorder %s279, 1
                %s284 = sphi %s269, %s269
                %s285 = sphi %s265, %s265
              $region84: #{discriminator_forward.5} parent=80 // loop_header_branch
                %282 = sbr.rel (%p280) target = $region88
              $region85: #{discriminator_forward.5} parent=80 // loop_body
                %v286 = vld [vmem:[%s284] sm:%s277]
                %287 = vst [vmem:[%s285] sm:%s277] %v286
                %v288 = vld [vmem:[%s284 + $0x4] sm:%s277]
                %289 = vst [vmem:[%s285 + $0x4] sm:%s277] %v288
                %v290 = vld [vmem:[%s284 + $0x8] sm:%s277]
                %291 = vst [vmem:[%s285 + $0x8] sm:%s277] %v290
                %v292 = vld [vmem:[%s284 + $0xcc] sm:%s277]
                %293 = vst [vmem:[%s285 + $0xc] sm:%s277] %v292
                %v294 = vld [vmem:[%s284 + $0xd0] sm:%s277]
                %295 = vst [vmem:[%s285 + $0x10] sm:%s277] %v294
                %v296 = vld [vmem:[%s284 + $0xd4] sm:%s277]
                %297 = vst [vmem:[%s285 + $0x14] sm:%s277] %v296
              $region86: #{discriminator_forward.5} parent=80 // loop_footer
                %s283 = sadd.s32 1, %s279
              $region87: #{discriminator_forward.5} parent=80 // loop_footer_branch
                %278 = sbr.rel target = $region83
              $region88: #{discriminator_forward.5} parent=80 // loop_exit
                _
            $region81: #{discriminator_forward.5} parent=72 // pred_fallthru
              _
          $region73: #{discriminator_forward.5} parent=68 // pred_fallthru
            _
          %330 = vnop
        $region69: #{discriminator_forward.5} parent=23 // pred_fallthru
          _
      $region24: #{discriminator_forward.5} parent=5 // pred_fallthru
        _
      %p331 = scmp.le.s32.totalorder 1, %s10
      %p332 = scmp.lt.s32.totalorder %s10, 17
      %p333 = pnand %p331, %p332
      %p334 = pneg %p333
      // Predicated region
      $region107: #{discriminator_forward.5} parent=5 // pred_check
        _
      $region108: #{discriminator_forward.5} parent=5 // pred_check_branch
        %336 = sbr.rel (%p333) target = $region110
      $region109: #{discriminator_forward.5} parent=5 // pred_region
        %s337 = ssub.s32 %s10, 1
        %s338 = sand.u32 %s35, 1
        %s339 = sand.u32 %s35, 1
        %s340 = smul.addr %s339, 24
        %s341 = scalar_lea.vmem [#allocation2], %s340
        // Predicated region
        $region111: #{discriminator_forward.5} parent=109 // pred_check
          %p342 = pneg %p48
        $region112: #{discriminator_forward.5} parent=109 // pred_check_branch
          %344 = sbr.rel (%p342) target = $region114
        $region113: #{discriminator_forward.5} parent=109 // pred_region
          _
        $region114: #{discriminator_forward.5} parent=109 // pred_fallthru
          _
        %s345 = sand.u32 %s63, 1
        %s346 = sand.u32 %s63, 1
        %s347 = smul.addr %s346, 24
        %s348 = scalar_lea.vmem [#allocation3], %s347
        // Predicated region
        $region115: #{discriminator_forward.5} parent=109 // pred_check
          %p349 = pneg %p76
        $region116: #{discriminator_forward.5} parent=109 // pred_check_branch
          %351 = sbr.rel (%p349) target = $region118
        $region117: #{discriminator_forward.5} parent=109 // pred_region
          _
        $region118: #{discriminator_forward.5} parent=109 // pred_fallthru
          _
        %s352 = sand.u32 %s35, 1
        %s353 = sand.u32 %s35, 1
        %s354 = smul.addr %s353, 24
        %s355 = scalar_lea.vmem [#allocation2], %s354
        %p356 = pneg %p48
        %p357 = pneg %p45
        %s358 = sand.u32 %s63, 1
        %s359 = sand.u32 %s63, 1
        %s360 = smul.addr %s359, 24
        %s361 = scalar_lea.vmem [#allocation3], %s360
        %p362 = pneg %p76
        %p363 = pneg %p73
        %p364 = scmp.lt.s32.totalorder %s19, 0
        %s365 = scalar_select %p364, %s19, 0
        %s366 = smul.addr %s365, 4
        %s367 = scalar_lea.vmem %s2, %s366
        %p368 = pneg %p102
        %p369 = pneg %p99
        %p370 = scmp.lt.s32.totalorder %s19, 0
        %s371 = scalar_select %p370, %s19, 0
        %s372 = scalar_lea.vmem %s3, %s371
        %p373 = pneg %p128
        %p374 = pneg %p125
        %p375 = pneg %p156
        %p376 = pneg %p153
        %s377 = sand.u32 %s143, 1
        %s378 = sand.u32 %s143, 1
        %s379 = smul.addr %s378, 16
        %s380 = scalar_lea.vmem [#allocation4], %s379
        %s381 = sadd.s32 %s20, 1
        %p382 = scmp.lt.s32.totalorder %s19, 0
        %s383 = scalar_select %p382, %s19, 0
        %s384 = smul.addr %s383, 4
        %s385 = scalar_lea.vmem %s2, %s384
        %p386 = scmp.lt.s32.totalorder %s19, 0
        %s387 = scalar_select %p386, %s19, 0
        %s388 = scalar_lea.vmem %s3, %s387
        %v390 = vld [vmem:[%s385] sm:$0xf]
        %v391 = vld [vmem:[%s385 + $0x4] sm:$0x3]
        %v392 = vld [vmem:[%s385 + $0x8] sm:$0xf]
        %v393 = vld [vmem:[%s385 + $0xc] sm:$0x3]
        %v394 = vld [vmem:[%s385 + $0x10] sm:$0xf]
        %v395 = vld [vmem:[%s385 + $0x14] sm:$0x3]
        %v396 = vld [vmem:[%s385 + $0x18] sm:$0xf]
        %v397 = vld [vmem:[%s385 + $0x1c] sm:$0x3]
        %v398 = vld [vmem:[%s341] sm:$0xf]
        %v399 = vld [vmem:[%s341 + $0x4] sm:$0xf]
        %v400 = vld [vmem:[%s341 + $0x8] sm:$0x1]
        %v401 = vld [vmem:[%s341 + $0xc] sm:$0xf]
        %v402 = vld [vmem:[%s341 + $0x10] sm:$0xf]
        %v403 = vld [vmem:[%s341 + $0x14] sm:$0x1]
        %vm404 = vsmask.f32 3328
        %vm405 = vsmask.f32 7440
        %vm406 = vmor %vm404, %vm405
        %v408 = vshrl.u32 %v398, 16
        %v410 = vrot.slane %v408, 4
        %v411 = vshll.u32 %v398, 16
        %v413 = vrot.slane %v411, 5
        %v414 = vor.u32 %v410, %v413
        %v415 = vrot.slane %v414, 4
        %v417 = vshll.u32 %v399, 16
        %v419 = vrot.slane %v417, 5
        %v420 = vsel %vm406, %v415, %v419
        %v421 = vshrl.u32 %v399, 16
        %v423 = vrot.slane %v421, 4
        %v424 = vor.u32 %v423, %v419
        %v425 = vrot.slane %v424, 4
        %v427 = vshll.u32 %v400, 16
        %v429 = vrot.slane %v427, 5
        %v430 = vsel %vm406, %v425, %v429
        %v432 = vshrl.u32 %v401, 16
        %v434 = vrot.slane %v432, 4
        %v435 = vshll.u32 %v401, 16
        %v437 = vrot.slane %v435, 5
        %v438 = vor.u32 %v434, %v437
        %v439 = vrot.slane %v438, 4
        %v441 = vshll.u32 %v402, 16
        %v443 = vrot.slane %v441, 5
        %v444 = vsel %vm406, %v439, %v443
        %v445 = vshrl.u32 %v402, 16
        %v447 = vrot.slane %v445, 4
        %v448 = vor.u32 %v447, %v443
        %v449 = vrot.slane %v448, 4
        %v451 = vshll.u32 %v403, 16
        %v453 = vrot.slane %v451, 5
        %v454 = vsel %vm406, %v449, %v453
        %v455 = vunpack.c.l.b16 %v420
        %v456 = vunpack.c.l.b16 %v430
        %v457 = vunpack.c.l.b16 %v444
        %v458 = vunpack.c.l.b16 %v454
        %v459 = vpack.c.b16 %v456, %v455
        %v460 = vpack.c.b16 %v458, %v457
        %v463 = vunpack.c.l.b16 %v392
        %v464 = vunpack.c.l.b16 %v393
        %v465 = vpack.c.b16 %v464, %v463
        %vm466 = vcmask 97280
        %v468 = vsel %vm466, %v459, 0
        %v471 = vsel %vm466, %v460, 0
        %vm473 = vcmask 1045504
        %v475 = vsel %vm473, %v465, 0
        %477 = vmatpush.bf16.msra.mxu0 0
        %478 = vmatpush.bf16.msra.mxu0 0
        %479 = vmatpush.bf16.msra.mxu0 0
        %480 = vmatpush.bf16.msra.mxu0 0
        %481 = vmatpush.bf16.msra.mxu0 0
        %482 = vmatpush.bf16.msra.mxu0 0
        %483 = vmatpush.bf16.msra.mxu0 0
        %484 = vmatpush.bf16.msra.mxu0 %v475
        %485 = vmatmul.bf16.gmra.mxu0 %v468
        %v486 = vpop.f32.mrf.mxu0
        %v487 = vadd.f32 0.0, %v486
        %v488 = vpop.f32.mrf.mxu0
        %v489 = vadd.f32 0.0, %v488
        %490 = vmatmul.bf16.gmra.mxu0 %v471
        %v491 = vpop.f32.mrf.mxu0
        %v492 = vadd.f32 0.0, %v491
        %v493 = vpop.f32.mrf.mxu0
        %v494 = vadd.f32 0.0, %v493
        %495 = vdwg.mxu0
        %v500 = vunpack.c.l.b16 %v398
        %v501 = vunpack.c.l.b16 %v399
        %v502 = vunpack.c.l.b16 %v401
        %v503 = vunpack.c.l.b16 %v402
        %v504 = vpack.c.b16 %v501, %v500
        %v505 = vpack.c.b16 %v503, %v502
        %v508 = vunpack.c.l.b16 %v390
        %v509 = vunpack.c.l.b16 %v391
        %v510 = vpack.c.b16 %v509, %v508
        %v512 = vsel %vm466, %v504, 0
        %v515 = vsel %vm466, %v505, 0
        %v518 = vsel %vm473, %v510, 0
        %520 = vmatpush.bf16.msra.mxu0 0
        %521 = vmatpush.bf16.msra.mxu0 0
        %522 = vmatpush.bf16.msra.mxu0 0
        %523 = vmatpush.bf16.msra.mxu0 0
        %524 = vmatpush.bf16.msra.mxu0 0
        %525 = vmatpush.bf16.msra.mxu0 0
        %526 = vmatpush.bf16.msra.mxu0 0
        %527 = vmatpush.bf16.msra.mxu0 %v518
        %528 = vmatmul.bf16.gmra.mxu0 %v512
        %v529 = vpop.f32.mrf.mxu0
        %v530 = vadd.f32 %v487, %v529
        %v531 = vpop.f32.mrf.mxu0
        %v532 = vadd.f32 %v489, %v531
        %533 = vmatmul.bf16.gmra.mxu0 %v515
        %v534 = vpop.f32.mrf.mxu0
        %v535 = vadd.f32 %v492, %v534
        %v536 = vpop.f32.mrf.mxu0
        %v537 = vadd.f32 %v494, %v536
        %538 = vdwg.mxu0
        %v539 = vld [vmem:[%s348] sm:$0xf]
        %v540 = vld [vmem:[%s348 + $0x4] sm:$0xf]
        %v541 = vld [vmem:[%s348 + $0x8] sm:$0x1]
        %v542 = vld [vmem:[%s348 + $0xc] sm:$0xf]
        %v543 = vld [vmem:[%s348 + $0x10] sm:$0xf]
        %v544 = vld [vmem:[%s348 + $0x14] sm:$0x1]
        %v549 = vunpack.c.l.b16 %v539
        %v550 = vunpack.c.l.b16 %v540
        %v551 = vunpack.c.l.b16 %v542
        %v552 = vunpack.c.l.b16 %v543
        %v553 = vpack.c.b16 %v550, %v549
        %v554 = vpack.c.b16 %v552, %v551
        %v557 = vunpack.c.l.b16 %v394
        %v558 = vunpack.c.l.b16 %v395
        %v559 = vpack.c.b16 %v558, %v557
        %v561 = vsel %vm466, %v553, 0
        %v564 = vsel %vm466, %v554, 0
        %v567 = vsel %vm473, %v559, 0
        %569 = vmatpush.bf16.msra.mxu0 0
        %570 = vmatpush.bf16.msra.mxu0 0
        %571 = vmatpush.bf16.msra.mxu0 0
        %572 = vmatpush.bf16.msra.mxu0 0
        %573 = vmatpush.bf16.msra.mxu0 0
        %574 = vmatpush.bf16.msra.mxu0 0
        %575 = vmatpush.bf16.msra.mxu0 0
        %576 = vmatpush.bf16.msra.mxu0 %v567
        %577 = vmatmul.bf16.gmra.mxu0 %v561
        %v578 = vpop.f32.mrf.mxu0
        %v579 = vadd.f32 0.0, %v578
        %v580 = vpop.f32.mrf.mxu0
        %v581 = vadd.f32 0.0, %v580
        %582 = vmatmul.bf16.gmra.mxu0 %v564
        %v583 = vpop.f32.mrf.mxu0
        %v584 = vadd.f32 0.0, %v583
        %v585 = vpop.f32.mrf.mxu0
        %v586 = vadd.f32 0.0, %v585
        %587 = vdwg.mxu0
        %v588 = vadd.f32 %v530, %v579
        %v589 = vadd.f32 %v532, %v581
        %v590 = vadd.f32 %v535, %v584
        %v591 = vadd.f32 %v537, %v586
        %v593 = vshrl.u32 %v539, 16
        %v595 = vrot.slane %v593, 4
        %v596 = vshll.u32 %v539, 16
        %v598 = vrot.slane %v596, 5
        %v599 = vor.u32 %v595, %v598
        %v600 = vrot.slane %v599, 4
        %v602 = vshll.u32 %v540, 16
        %v604 = vrot.slane %v602, 5
        %v605 = vsel %vm406, %v600, %v604
        %v606 = vshrl.u32 %v540, 16
        %v608 = vrot.slane %v606, 4
        %v609 = vor.u32 %v608, %v604
        %v610 = vrot.slane %v609, 4
        %v612 = vshll.u32 %v541, 16
        %v614 = vrot.slane %v612, 5
        %v615 = vsel %vm406, %v610, %v614
        %v617 = vshrl.u32 %v542, 16
        %v619 = vrot.slane %v617, 4
        %v620 = vshll.u32 %v542, 16
        %v622 = vrot.slane %v620, 5
        %v623 = vor.u32 %v619, %v622
        %v624 = vrot.slane %v623, 4
        %v626 = vshll.u32 %v543, 16
        %v628 = vrot.slane %v626, 5
        %v629 = vsel %vm406, %v624, %v628
        %v630 = vshrl.u32 %v543, 16
        %v632 = vrot.slane %v630, 4
        %v633 = vor.u32 %v632, %v628
        %v634 = vrot.slane %v633, 4
        %v636 = vshll.u32 %v544, 16
        %v638 = vrot.slane %v636, 5
        %v639 = vsel %vm406, %v634, %v638
        %v640 = vunpack.c.l.b16 %v605
        %v641 = vunpack.c.l.b16 %v615
        %v642 = vunpack.c.l.b16 %v629
        %v643 = vunpack.c.l.b16 %v639
        %v644 = vpack.c.b16 %v641, %v640
        %v645 = vpack.c.b16 %v643, %v642
        %v648 = vunpack.c.l.b16 %v396
        %v649 = vunpack.c.l.b16 %v397
        %v650 = vpack.c.b16 %v649, %v648
        %v652 = vsel %vm466, %v644, 0
        %v655 = vsel %vm466, %v645, 0
        %v658 = vsel %vm473, %v650, 0
        %660 = vmatpush.bf16.msra.mxu0 0
        %661 = vmatpush.bf16.msra.mxu0 0
        %662 = vmatpush.bf16.msra.mxu0 0
        %663 = vmatpush.bf16.msra.mxu0 0
        %664 = vmatpush.bf16.msra.mxu0 0
        %665 = vmatpush.bf16.msra.mxu0 0
        %666 = vmatpush.bf16.msra.mxu0 0
        %667 = vmatpush.bf16.msra.mxu0 %v658
        %668 = vmatmul.bf16.gmra.mxu0 %v652
        %v669 = vpop.f32.mrf.mxu0
        %v670 = vadd.f32 0.0, %v669
        %v671 = vpop.f32.mrf.mxu0
        %v672 = vadd.f32 0.0, %v671
        %673 = vmatmul.bf16.gmra.mxu0 %v655
        %v674 = vpop.f32.mrf.mxu0
        %v675 = vadd.f32 0.0, %v674
        %v676 = vpop.f32.mrf.mxu0
        %v677 = vadd.f32 0.0, %v676
        %678 = vdwg.mxu0
        %v679 = vadd.f32 %v588, %v670
        %v680 = vadd.f32 %v589, %v672
        %v681 = vadd.f32 %v590, %v675
        %v682 = vadd.f32 %v591, %v677
        %v683 = vld [vmem:[%s388] sm:$0x1]
        %v685 = vperm.slane %v683, 0
        %v687 = vadd.f32 %v679, %v685
        %v688 = vadd.f32 %v680, %v685
        %v689 = vadd.f32 %v681, %v685
        %v690 = vadd.f32 %v682, %v685
        %vm691 = vcmp.ge.f32.partialorder %v687, 0.0
        %vm692 = vcmp.ge.f32.partialorder %v688, 0.0
        %vm693 = vcmp.ge.f32.partialorder %v689, 0.0
        %vm694 = vcmp.ge.f32.partialorder %v690, 0.0
        %v695 = vmul.f32 %v687, 0.01
        %v696 = vmul.f32 %v688, 0.01
        %v697 = vmul.f32 %v689, 0.01
        %v698 = vmul.f32 %v690, 0.01
        %v699 = vsel %vm691, %v687, %v695
        %v700 = vsel %vm692, %v688, %v696
        %v701 = vsel %vm693, %v689, %v697
        %v702 = vsel %vm694, %v690, %v698
        %v703 = vpack.c.bf16 %v699, %v699
        %v704 = vpack.c.bf16 %v700, %v700
        %v705 = vpack.c.bf16 %v701, %v701
        %v706 = vpack.c.bf16 %v702, %v702
        %vm707 = vcmask 60416
        %708 = vst.msk [vmem:[%s380] sm:$0xf] %vm707, %v703
        %709 = vst.msk [vmem:[%s380 + $0x4] sm:$0xf] %vm707, %v704
        %710 = vst.msk [vmem:[%s380 + $0x8] sm:$0xf] %vm707, %v705
        %711 = vst.msk [vmem:[%s380 + $0xc] sm:$0xf] %vm707, %v706
        %s712 = sand.u32 %s143, 1
        %s713 = sand.u32 %s143, 1
        %s714 = smul.addr %s713, 16
        %s715 = scalar_lea.vmem [#allocation4], %s714
        // Predicated region
        $region119: #{discriminator_forward.5} parent=109 // pred_check
          %p716 = pneg %p153
        $region120: #{discriminator_forward.5} parent=109 // pred_check_branch
          %718 = sbr.rel (%p716) target = $region122
        $region121: #{discriminator_forward.5} parent=109 // pred_region
          %s719 = smul.addr %s20, 2
          %s720 = sadd.s32 %s19, %s719
          %s721 = smul.addr %s720, 4
          %s722 = scalar_lea.vmem %s4, %s721
          // Predicated region
          $region123: #{discriminator_forward.5} parent=121 // pred_check
            _
          $region124: #{discriminator_forward.5} parent=121 // pred_check_branch
            %724 = sbr.rel (0) target = $region126
          $region125: #{discriminator_forward.5} parent=121 // pred_region
            // Predicated region
            $region127: #{discriminator_forward.5} parent=125 // pred_check
              _
            $region128: #{discriminator_forward.5} parent=125 // pred_check_branch
              %726 = sbr.rel target = $region130
            $region129: #{discriminator_forward.5} parent=125 // pred_region
              // Predicated region
              $region142: #{discriminator_forward.5} parent=129 // pred_check
                _
              $region143: #{discriminator_forward.5} parent=129 // pred_check_branch
                %748 = sbr.rel (0) target = $region145
              $region144: #{discriminator_forward.5} parent=129 // pred_region
                loop: start=0, step=1, limit=1
                $region146: #{discriminator_forward.5} parent=144 // loop_pre_header
                  _
                $region147: #{discriminator_forward.5} parent=144 // loop_header
                  %s750 = sphi 0, %s754
                  %p751 = scmp.ge.s32.totalorder %s750, 1
                  %s755 = sphi %s715, %s715
                  %s756 = sphi %s722, %s722
                $region148: #{discriminator_forward.5} parent=144 // loop_header_branch
                  %753 = sbr.rel (%p751) target = $region152
                $region149: #{discriminator_forward.5} parent=144 // loop_body
                  _
                $region150: #{discriminator_forward.5} parent=144 // loop_footer
                  %s754 = sadd.s32 1, %s750
                $region151: #{discriminator_forward.5} parent=144 // loop_footer_branch
                  %749 = sbr.rel target = $region147
                $region152: #{discriminator_forward.5} parent=144 // loop_exit
                  _
                %s758 = ssub.s32 16, 1
                loop: start=0, step=1, limit=1
                $region153: #{discriminator_forward.5} parent=144 // loop_pre_header
                  _
                $region154: #{discriminator_forward.5} parent=144 // loop_header
                  %s760 = sphi 0, %s764
                  %p761 = scmp.ge.s32.totalorder %s760, 1
                  %s765 = sphi %s715, %s715
                  %s766 = sphi %s722, %s722
                $region155: #{discriminator_forward.5} parent=144 // loop_header_branch
                  %763 = sbr.rel (%p761) target = $region159
                $region156: #{discriminator_forward.5} parent=144 // loop_body
                  %v767 = vld [vmem:[%s765] sm:%s758]
                  %768 = vst [vmem:[%s766] sm:%s758] %v767
                  %v769 = vld [vmem:[%s765 + $0x4] sm:%s758]
                  %770 = vst [vmem:[%s766 + $0x4] sm:%s758] %v769
                  %v771 = vld [vmem:[%s765 + $0x8] sm:%s758]
                  %772 = vst [vmem:[%s766 + $0x80] sm:%s758] %v771
                  %v773 = vld [vmem:[%s765 + $0xc] sm:%s758]
                  %774 = vst [vmem:[%s766 + $0x84] sm:%s758] %v773
                $region157: #{discriminator_forward.5} parent=144 // loop_footer
                  %s764 = sadd.s32 1, %s760
                $region158: #{discriminator_forward.5} parent=144 // loop_footer_branch
                  %759 = sbr.rel target = $region154
                $region159: #{discriminator_forward.5} parent=144 // loop_exit
                  _
              $region145: #{discriminator_forward.5} parent=129 // pred_fallthru
                _
            $region130: #{discriminator_forward.5} parent=125 // pred_fallthru
              _
            // Predicated region
            $region131: #{discriminator_forward.5} parent=125 // pred_check
              _
            $region132: #{discriminator_forward.5} parent=125 // pred_check_branch
              %728 = sbr.rel (0) target = $region134
            $region133: #{discriminator_forward.5} parent=125 // pred_region
              %s730 = ssub.s32 16, 1
              loop: start=0, step=1, limit=1
              $region135: #{discriminator_forward.5} parent=133 // loop_pre_header
                _
              $region136: #{discriminator_forward.5} parent=133 // loop_header
                %s732 = sphi 0, %s736
                %p733 = scmp.ge.s32.totalorder %s732, 1
                %s737 = sphi %s715, %s715
                %s738 = sphi %s722, %s722
              $region137: #{discriminator_forward.5} parent=133 // loop_header_branch
                %735 = sbr.rel (%p733) target = $region141
              $region138: #{discriminator_forward.5} parent=133 // loop_body
                %v739 = vld [vmem:[%s737] sm:%s730]
                %740 = vst [vmem:[%s738] sm:%s730] %v739
                %v741 = vld [vmem:[%s737 + $0x4] sm:%s730]
                %742 = vst [vmem:[%s738 + $0x4] sm:%s730] %v741
                %v743 = vld [vmem:[%s737 + $0x8] sm:%s730]
                %744 = vst [vmem:[%s738 + $0x80] sm:%s730] %v743
                %v745 = vld [vmem:[%s737 + $0xc] sm:%s730]
                %746 = vst [vmem:[%s738 + $0x84] sm:%s730] %v745
              $region139: #{discriminator_forward.5} parent=133 // loop_footer
                %s736 = sadd.s32 1, %s732
              $region140: #{discriminator_forward.5} parent=133 // loop_footer_branch
                %731 = sbr.rel target = $region136
              $region141: #{discriminator_forward.5} parent=133 // loop_exit
                _
            $region134: #{discriminator_forward.5} parent=125 // pred_fallthru
              _
          $region126: #{discriminator_forward.5} parent=121 // pred_fallthru
            _
          %775 = vnop
        $region122: #{discriminator_forward.5} parent=109 // pred_fallthru
          _
      $region110: #{discriminator_forward.5} parent=5 // pred_fallthru
        _
      %p776 = scmp.le.s32.totalorder 2, %s10
      // Predicated region
      $region160: #{discriminator_forward.5} parent=5 // pred_check
        %p777 = pneg %p776
      $region161: #{discriminator_forward.5} parent=5 // pred_check_branch
        %779 = sbr.rel (%p777) target = $region163
      $region162: #{discriminator_forward.5} parent=5 // pred_region
        %s780 = ssub.s32 %s10, 2
        // Predicated region
        $region164: #{discriminator_forward.5} parent=162 // pred_check
          %p781 = pneg %p159
        $region165: #{discriminator_forward.5} parent=162 // pred_check_branch
          %783 = sbr.rel (%p781) target = $region167
        $region166: #{discriminator_forward.5} parent=162 // pred_region
          %s784 = sand.u32 %s144, 1
          %s785 = sand.u32 %s144, 1
          %s786 = smul.addr %s785, 16
          %s787 = scalar_lea.vmem [#allocation4], %s786
        $region167: #{discriminator_forward.5} parent=162 // pred_fallthru
          _
      $region163: #{discriminator_forward.5} parent=5 // pred_fallthru
        _
    $region6: #{discriminator_forward.5} parent=1 // loop_footer
      %s14 = sadd.s32 1, %s10
    $region7: #{discriminator_forward.5} parent=1 // loop_footer_branch
      %9 = sbr.rel target = $region3
    $region8: #{discriminator_forward.5} parent=1 // loop_exit
      _

// kernel: discriminator_forward.6
$region0: #{discriminator_forward.6}
  #allocation0 [shape = 'u32[]', space=smem, size = 0x4, offset = 0x4, fixed_abs, tag = 'smem constant byte address 0x4 - core index']
  #allocation1 [shape = 'u32[72,128]{1,0:T(1,128)}', space=vmem, size = 0x9000, scoped, tag = 'internal scratch']
  %s0 = inlined_call_operand.vmem [shape: bf16[2,9,9,32], index: 0, kind: input, shape index: {}, may-alias: {0,1}]
  %s1 = inlined_call_operand.vmem [shape: bf16[2,9,9,32], index: 1, kind: input, shape index: {}, may-alias: {0,1}]
  %s2 = inlined_call_operand.vmem [shape: bf16[2,2,32,16], index: 2, kind: input, shape index: {}]
  %s3 = inlined_call_operand.vmem [shape: f32[1,16], index: 3, kind: input, shape index: {}]
  %s4 = inlined_call_operand.vmem [shape: bf16[2,8,8,16], index: 4, kind: output, shape index: {}]
  %s5 = sld [smem:[#allocation0]]
  $region168: #{discriminator_forward.6} parent=0
    _
  %s7 = ssub.s32 1, %s5
  %s8 = scalar_select 0, %s7, %s5
  $region1: #{discriminator_forward.6} parent=0
    #allocation2 [shape = 'u8[16384]{0}', space=vmem, size = 0x4000, scoped, tag = 'input window, operand 0']
    #allocation3 [shape = 'u8[16384]{0}', space=vmem, size = 0x4000, scoped, tag = 'input window, operand 1']
    #allocation4 [shape = 'u8[8192]{0}', space=vmem, size = 0x2000, scoped, tag = 'output window, operand 0']
    loop: start=0, step=1, limit=10
    $region2: #{discriminator_forward.6} parent=1 // loop_pre_header
      _
    $region3: #{discriminator_forward.6} parent=1 // loop_header
      %s10 = sphi 0, %s14
      %p11 = scmp.ge.s32.totalorder %s10, 10
      %s17 = sphi 0, %s29
      %s18 = sphi 0, %s25
      %s19 = sphi 0, %s17
      %s20 = sphi 0, %s18
      %s21 = sphi 0, %s19
      %s22 = sphi 0, %s20
      %s32 = sphi 0, %s34
      %s35 = sphi 0, %s32
      %s36 = sphi 0, %s35
      %s52 = sphi 0, %s36
      %s60 = sphi 0, %s62
      %s63 = sphi 0, %s60
      %s64 = sphi 0, %s63
      %s80 = sphi 0, %s64
      %s86 = sphi 0, %s88
      %s89 = sphi 0, %s86
      %s90 = sphi 0, %s89
      %s106 = sphi 0, %s90
      %s112 = sphi 0, %s114
      %s115 = sphi 0, %s112
      %s116 = sphi 0, %s115
      %s132 = sphi 0, %s116
      %s140 = sphi 0, %s142
      %s143 = sphi 0, %s140
      %s144 = sphi 0, %s143
      %s160 = sphi 0, %s144
    $region4: #{discriminator_forward.6} parent=1 // loop_header_branch
      %13 = sbr.rel (%p11) target = $region8
    $region5: #{discriminator_forward.6} parent=1 // loop_body
      %s15 = ssub.s32 %s10, 1
      %s16 = ssub.s32 %s10, 2
      %s23 = sadd.s32 1, %s18
      %p24 = scmp.ge.s32.totalorder %s23, 8
      %s25 = scalar_select %p24, 0, %s23
      %s26 = sadd.s32 1, %s17
      %s27 = scalar_select %p24, %s26, %s17
      %p28 = scmp.ge.s32.totalorder %s27, 1
      %s29 = scalar_select %p28, 0, %s27
      %s30 = ssub.s32 %s18, %s25
      %p31 = scmp.eq.s32.totalorder %s30, 0
      %s33 = sadd.s32 %s32, 1
      %s34 = scalar_select %p31, %s32, %s33
      %p37 = pneg %p31
      %p38 = scmp.eq.s32.totalorder %s10, 7
      %p39 = por %p37, %p38
      %p40 = scmp.ne.s32.totalorder %s32, %s35
      %p41 = scmp.eq.s32.totalorder %s10, 0
      %p42 = por %p40, %p41
      %p43 = scmp.ne.s32.totalorder %s32, %s35
      %p44 = scmp.eq.s32.totalorder %s15, 7
      %p45 = por %p43, %p44
      %p46 = scmp.ne.s32.totalorder %s35, %s36
      %p47 = scmp.eq.s32.totalorder %s15, 0
      %p48 = por %p46, %p47
      %p49 = scmp.ne.s32.totalorder %s35, %s36
      %p50 = scmp.eq.s32.totalorder %s16, 7
      %p51 = por %p49, %p50
      %p53 = scmp.ne.s32.totalorder %s36, %s52
      %p54 = scmp.eq.s32.totalorder %s16, 0
      %p55 = por %p53, %p54
      %s56 = sadd.s32 %s18, 1
      %s57 = sadd.s32 %s25, 1
      %s58 = ssub.s32 %s56, %s57
      %p59 = scmp.eq.s32.totalorder %s58, 0
      %s61 = sadd.s32 %s60, 1
      %s62 = scalar_select %p59, %s60, %s61
      %p65 = pneg %p59
      %p66 = scmp.eq.s32.totalorder %s10, 7
      %p67 = por %p65, %p66
      %p68 = scmp.ne.s32.totalorder %s60, %s63
      %p69 = scmp.eq.s32.totalorder %s10, 0
      %p70 = por %p68, %p69
      %p71 = scmp.ne.s32.totalorder %s60, %s63
      %p72 = scmp.eq.s32.totalorder %s15, 7
      %p73 = por %p71, %p72
      %p74 = scmp.ne.s32.totalorder %s63, %s64
      %p75 = scmp.eq.s32.totalorder %s15, 0
      %p76 = por %p74, %p75
      %p77 = scmp.ne.s32.totalorder %s63, %s64
      %p78 = scmp.eq.s32.totalorder %s16, 7
      %p79 = por %p77, %p78
      %p81 = scmp.ne.s32.totalorder %s64, %s80
      %p82 = scmp.eq.s32.totalorder %s16, 0
      %p83 = por %p81, %p82
      %s84 = ssub.s32 %s17, %s29
      %p85 = scmp.eq.s32.totalorder %s84, 0
      %s87 = sadd.s32 %s86, 1
      %s88 = scalar_select %p85, %s86, %s87
      %p91 = pneg %p85
      %p92 = scmp.eq.s32.totalorder %s10, 7
      %p93 = por %p91, %p92
      %p94 = scmp.ne.s32.totalorder %s86, %s89
      %p95 = scmp.eq.s32.totalorder %s10, 0
      %p96 = por %p94, %p95
      %p97 = scmp.ne.s32.totalorder %s86, %s89
      %p98 = scmp.eq.s32.totalorder %s15, 7
      %p99 = por %p97, %p98
      %p100 = scmp.ne.s32.totalorder %s89, %s90
      %p101 = scmp.eq.s32.totalorder %s15, 0
      %p102 = por %p100, %p101
      %p103 = scmp.ne.s32.totalorder %s89, %s90
      %p104 = scmp.eq.s32.totalorder %s16, 7
      %p105 = por %p103, %p104
      %p107 = scmp.ne.s32.totalorder %s90, %s106
      %p108 = scmp.eq.s32.totalorder %s16, 0
      %p109 = por %p107, %p108
      %s110 = ssub.s32 %s17, %s29
      %p111 = scmp.eq.s32.totalorder %s110, 0
      %s113 = sadd.s32 %s112, 1
      %s114 = scalar_select %p111, %s112, %s113
      %p117 = pneg %p111
      %p118 = scmp.eq.s32.totalorder %s10, 7
      %p119 = por %p117, %p118
      %p120 = scmp.ne.s32.totalorder %s112, %s115
      %p121 = scmp.eq.s32.totalorder %s10, 0
      %p122 = por %p120, %p121
      %p123 = scmp.ne.s32.totalorder %s112, %s115
      %p124 = scmp.eq.s32.totalorder %s15, 7
      %p125 = por %p123, %p124
      %p126 = scmp.ne.s32.totalorder %s115, %s116
      %p127 = scmp.eq.s32.totalorder %s15, 0
      %p128 = por %p126, %p127
      %p129 = scmp.ne.s32.totalorder %s115, %s116
      %p130 = scmp.eq.s32.totalorder %s16, 7
      %p131 = por %p129, %p130
      %p133 = scmp.ne.s32.totalorder %s116, %s132
      %p134 = scmp.eq.s32.totalorder %s16, 0
      %p135 = por %p133, %p134
      %s136 = ssub.s32 %s18, %s25
      %s137 = ssub.s32 %s17, %s29
      %s138 = sor.u32 %s136, %s137
      %p139 = scmp.eq.s32.totalorder %s138, 0
      %s141 = sadd.s32 %s140, 1
      %s142 = scalar_select %p139, %s140, %s141
      %p145 = pneg %p139
      %p146 = scmp.eq.s32.totalorder %s10, 7
      %p147 = por %p145, %p146
      %p148 = scmp.ne.s32.totalorder %s140, %s143
      %p149 = scmp.eq.s32.totalorder %s10, 0
      %p150 = por %p148, %p149
      %p151 = scmp.ne.s32.totalorder %s140, %s143
      %p152 = scmp.eq.s32.totalorder %s15, 7
      %p153 = por %p151, %p152
      %p154 = scmp.ne.s32.totalorder %s143, %s144
      %p155 = scmp.eq.s32.totalorder %s15, 0
      %p156 = por %p154, %p155
      %p157 = scmp.ne.s32.totalorder %s143, %s144
      %p158 = scmp.eq.s32.totalorder %s16, 7
      %p159 = por %p157, %p158
      %p161 = scmp.ne.s32.totalorder %s144, %s160
      %p162 = scmp.eq.s32.totalorder %s16, 0
      %p163 = por %p161, %p162
      %p164 = scmp.le.s32.totalorder 1, %s10
      %p165 = scmp.lt.s32.totalorder %s10, 9
      %p166 = pnand %p164, %p165
      %p167 = pneg %p166
      // Predicated region
      $region9: #{discriminator_forward.6} parent=5 // pred_check
        _
      $region10: #{discriminator_forward.6} parent=5 // pred_check_branch
        %169 = sbr.rel (%p166) target = $region12
      $region11: #{discriminator_forward.6} parent=5 // pred_region
        %s170 = ssub.s32 %s10, 1
        // Predicated region
        $region13: #{discriminator_forward.6} parent=11 // pred_check
          %p171 = pneg %p102
        $region14: #{discriminator_forward.6} parent=11 // pred_check_branch
          %173 = sbr.rel (%p171) target = $region16
        $region15: #{discriminator_forward.6} parent=11 // pred_region
          %p174 = scmp.lt.s32.totalorder %s19, 0
          %s175 = scalar_select %p174, %s19, 0
          %s176 = smul.addr %s175, 4
          %s177 = scalar_lea.vmem %s2, %s176
        $region16: #{discriminator_forward.6} parent=11 // pred_fallthru
          _
        // Predicated region
        $region17: #{discriminator_forward.6} parent=11 // pred_check
          %p178 = pneg %p128
        $region18: #{discriminator_forward.6} parent=11 // pred_check_branch
          %180 = sbr.rel (%p178) target = $region20
        $region19: #{discriminator_forward.6} parent=11 // pred_region
          %p181 = scmp.lt.s32.totalorder %s19, 0
          %s182 = scalar_select %p181, %s19, 0
          %s183 = scalar_lea.vmem %s3, %s182
        $region20: #{discriminator_forward.6} parent=11 // pred_fallthru
          _
      $region12: #{discriminator_forward.6} parent=5 // pred_fallthru
        _
      %p184 = scmp.lt.s32.totalorder %s10, 8
      // Predicated region
      $region21: #{discriminator_forward.6} parent=5 // pred_check
        %p185 = pneg %p184
      $region22: #{discriminator_forward.6} parent=5 // pred_check_branch
        %187 = sbr.rel (%p185) target = $region24
      $region23: #{discriminator_forward.6} parent=5 // pred_region
        // Predicated region
        $region25: #{discriminator_forward.6} parent=23 // pred_check
          %p188 = pneg %p42
        $region26: #{discriminator_forward.6} parent=23 // pred_check_branch
          %190 = sbr.rel (%p188) target = $region28
        $region27: #{discriminator_forward.6} parent=23 // pred_region
          %s191 = sand.u32 %s32, 1
          %s192 = sand.u32 %s32, 1
          %s193 = smul.addr %s192, 16
          %s194 = scalar_lea.vmem [#allocation2], %s193
          %s195 = smul.addr %s18, 2
          %s196 = smul.addr %s195, 4
          %s197 = scalar_lea.vmem %s0, %s196
          // Predicated region
          $region29: #{discriminator_forward.6} parent=27 // pred_check
            _
          $region30: #{discriminator_forward.6} parent=27 // pred_check_branch
            %199 = sbr.rel (0) target = $region32
          $region31: #{discriminator_forward.6} parent=27 // pred_region
            // Predicated region
            $region33: #{discriminator_forward.6} parent=31 // pred_check
              _
            $region34: #{discriminator_forward.6} parent=31 // pred_check_branch
              %201 = sbr.rel target = $region36
            $region35: #{discriminator_forward.6} parent=31 // pred_region
              // Predicated region
              $region48: #{discriminator_forward.6} parent=35 // pred_check
                _
              $region49: #{discriminator_forward.6} parent=35 // pred_check_branch
                %223 = sbr.rel (0) target = $region51
              $region50: #{discriminator_forward.6} parent=35 // pred_region
                loop: start=0, step=1, limit=1
                $region52: #{discriminator_forward.6} parent=50 // loop_pre_header
                  _
                $region53: #{discriminator_forward.6} parent=50 // loop_header
                  %s225 = sphi 0, %s229
                  %p226 = scmp.ge.s32.totalorder %s225, 1
                  %s230 = sphi %s197, %s197
                  %s231 = sphi %s194, %s194
                $region54: #{discriminator_forward.6} parent=50 // loop_header_branch
                  %228 = sbr.rel (%p226) target = $region58
                $region55: #{discriminator_forward.6} parent=50 // loop_body
                  _
                $region56: #{discriminator_forward.6} parent=50 // loop_footer
                  %s229 = sadd.s32 1, %s225
                $region57: #{discriminator_forward.6} parent=50 // loop_footer_branch
                  %224 = sbr.rel target = $region53
                $region58: #{discriminator_forward.6} parent=50 // loop_exit
                  _
                %s233 = ssub.s32 16, 1
                loop: start=0, step=1, limit=1
                $region59: #{discriminator_forward.6} parent=50 // loop_pre_header
                  _
                $region60: #{discriminator_forward.6} parent=50 // loop_header
                  %s235 = sphi 0, %s239
                  %p236 = scmp.ge.s32.totalorder %s235, 1
                  %s240 = sphi %s197, %s197
                  %s241 = sphi %s194, %s194
                $region61: #{discriminator_forward.6} parent=50 // loop_header_branch
                  %238 = sbr.rel (%p236) target = $region65
                $region62: #{discriminator_forward.6} parent=50 // loop_body
                  %v242 = vld [vmem:[%s240] sm:%s233]
                  %243 = vst [vmem:[%s241] sm:%s233] %v242
                  %v244 = vld [vmem:[%s240 + $0x4] sm:%s233]
                  %245 = vst [vmem:[%s241 + $0x4] sm:%s233] %v244
                  %v246 = vld [vmem:[%s240 + $0x48] sm:%s233]
                  %247 = vst [vmem:[%s241 + $0x8] sm:%s233] %v246
                  %v248 = vld [vmem:[%s240 + $0x4c] sm:%s233]
                  %249 = vst [vmem:[%s241 + $0xc] sm:%s233] %v248
                $region63: #{discriminator_forward.6} parent=50 // loop_footer
                  %s239 = sadd.s32 1, %s235
                $region64: #{discriminator_forward.6} parent=50 // loop_footer_branch
                  %234 = sbr.rel target = $region60
                $region65: #{discriminator_forward.6} parent=50 // loop_exit
                  _
              $region51: #{discriminator_forward.6} parent=35 // pred_fallthru
                _
            $region36: #{discriminator_forward.6} parent=31 // pred_fallthru
              _
            // Predicated region
            $region37: #{discriminator_forward.6} parent=31 // pred_check
              _
            $region38: #{discriminator_forward.6} parent=31 // pred_check_branch
              %203 = sbr.rel (0) target = $region40
            $region39: #{discriminator_forward.6} parent=31 // pred_region
              %s205 = ssub.s32 16, 1
              loop: start=0, step=1, limit=1
              $region41: #{discriminator_forward.6} parent=39 // loop_pre_header
                _
              $region42: #{discriminator_forward.6} parent=39 // loop_header
                %s207 = sphi 0, %s211
                %p208 = scmp.ge.s32.totalorder %s207, 1
                %s212 = sphi %s197, %s197
                %s213 = sphi %s194, %s194
              $region43: #{discriminator_forward.6} parent=39 // loop_header_branch
                %210 = sbr.rel (%p208) target = $region47
              $region44: #{discriminator_forward.6} parent=39 // loop_body
                %v214 = vld [vmem:[%s212] sm:%s205]
                %215 = vst [vmem:[%s213] sm:%s205] %v214
                %v216 = vld [vmem:[%s212 + $0x4] sm:%s205]
                %217 = vst [vmem:[%s213 + $0x4] sm:%s205] %v216
                %v218 = vld [vmem:[%s212 + $0x48] sm:%s205]
                %219 = vst [vmem:[%s213 + $0x8] sm:%s205] %v218
                %v220 = vld [vmem:[%s212 + $0x4c] sm:%s205]
                %221 = vst [vmem:[%s213 + $0xc] sm:%s205] %v220
              $region45: #{discriminator_forward.6} parent=39 // loop_footer
                %s211 = sadd.s32 1, %s207
              $region46: #{discriminator_forward.6} parent=39 // loop_footer_branch
                %206 = sbr.rel target = $region42
              $region47: #{discriminator_forward.6} parent=39 // loop_exit
                _
            $region40: #{discriminator_forward.6} parent=31 // pred_fallthru
              _
          $region32: #{discriminator_forward.6} parent=27 // pred_fallthru
            _
          %250 = vnop
        $region28: #{discriminator_forward.6} parent=23 // pred_fallthru
          _
        // Predicated region
        $region66: #{discriminator_forward.6} parent=23 // pred_check
          %p251 = pneg %p70
        $region67: #{discriminator_forward.6} parent=23 // pred_check_branch
          %253 = sbr.rel (%p251) target = $region69
        $region68: #{discriminator_forward.6} parent=23 // pred_region
          %s254 = sand.u32 %s60, 1
          %s255 = sand.u32 %s60, 1
          %s256 = smul.addr %s255, 16
          %s257 = scalar_lea.vmem [#allocation3], %s256
          %s258 = sadd.s32 %s18, 1
          %s259 = smul.addr %s258, 2
          %s260 = smul.addr %s259, 4
          %s261 = scalar_lea.vmem %s1, %s260
          // Predicated region
          $region70: #{discriminator_forward.6} parent=68 // pred_check
            _
          $region71: #{discriminator_forward.6} parent=68 // pred_check_branch
            %263 = sbr.rel (0) target = $region73
          $region72: #{discriminator_forward.6} parent=68 // pred_region
            // Predicated region
            $region74: #{discriminator_forward.6} parent=72 // pred_check
              _
            $region75: #{discriminator_forward.6} parent=72 // pred_check_branch
              %265 = sbr.rel target = $region77
            $region76: #{discriminator_forward.6} parent=72 // pred_region
              // Predicated region
              $region89: #{discriminator_forward.6} parent=76 // pred_check
                _
              $region90: #{discriminator_forward.6} parent=76 // pred_check_branch
                %287 = sbr.rel (0) target = $region92
              $region91: #{discriminator_forward.6} parent=76 // pred_region
                loop: start=0, step=1, limit=1
                $region93: #{discriminator_forward.6} parent=91 // loop_pre_header
                  _
                $region94: #{discriminator_forward.6} parent=91 // loop_header
                  %s289 = sphi 0, %s293
                  %p290 = scmp.ge.s32.totalorder %s289, 1
                  %s294 = sphi %s261, %s261
                  %s295 = sphi %s257, %s257
                $region95: #{discriminator_forward.6} parent=91 // loop_header_branch
                  %292 = sbr.rel (%p290) target = $region99
                $region96: #{discriminator_forward.6} parent=91 // loop_body
                  _
                $region97: #{discriminator_forward.6} parent=91 // loop_footer
                  %s293 = sadd.s32 1, %s289
                $region98: #{discriminator_forward.6} parent=91 // loop_footer_branch
                  %288 = sbr.rel target = $region94
                $region99: #{discriminator_forward.6} parent=91 // loop_exit
                  _
                %s297 = ssub.s32 16, 1
                loop: start=0, step=1, limit=1
                $region100: #{discriminator_forward.6} parent=91 // loop_pre_header
                  _
                $region101: #{discriminator_forward.6} parent=91 // loop_header
                  %s299 = sphi 0, %s303
                  %p300 = scmp.ge.s32.totalorder %s299, 1
                  %s304 = sphi %s261, %s261
                  %s305 = sphi %s257, %s257
                $region102: #{discriminator_forward.6} parent=91 // loop_header_branch
                  %302 = sbr.rel (%p300) target = $region106
                $region103: #{discriminator_forward.6} parent=91 // loop_body
                  %v306 = vld [vmem:[%s304] sm:%s297]
                  %307 = vst [vmem:[%s305] sm:%s297] %v306
                  %v308 = vld [vmem:[%s304 + $0x4] sm:%s297]
                  %309 = vst [vmem:[%s305 + $0x4] sm:%s297] %v308
                  %v310 = vld [vmem:[%s304 + $0x48] sm:%s297]
                  %311 = vst [vmem:[%s305 + $0x8] sm:%s297] %v310
                  %v312 = vld [vmem:[%s304 + $0x4c] sm:%s297]
                  %313 = vst [vmem:[%s305 + $0xc] sm:%s297] %v312
                $region104: #{discriminator_forward.6} parent=91 // loop_footer
                  %s303 = sadd.s32 1, %s299
                $region105: #{discriminator_forward.6} parent=91 // loop_footer_branch
                  %298 = sbr.rel target = $region101
                $region106: #{discriminator_forward.6} parent=91 // loop_exit
                  _
              $region92: #{discriminator_forward.6} parent=76 // pred_fallthru
                _
            $region77: #{discriminator_forward.6} parent=72 // pred_fallthru
              _
            // Predicated region
            $region78: #{discriminator_forward.6} parent=72 // pred_check
              _
            $region79: #{discriminator_forward.6} parent=72 // pred_check_branch
              %267 = sbr.rel (0) target = $region81
            $region80: #{discriminator_forward.6} parent=72 // pred_region
              %s269 = ssub.s32 16, 1
              loop: start=0, step=1, limit=1
              $region82: #{discriminator_forward.6} parent=80 // loop_pre_header
                _
              $region83: #{discriminator_forward.6} parent=80 // loop_header
                %s271 = sphi 0, %s275
                %p272 = scmp.ge.s32.totalorder %s271, 1
                %s276 = sphi %s261, %s261
                %s277 = sphi %s257, %s257
              $region84: #{discriminator_forward.6} parent=80 // loop_header_branch
                %274 = sbr.rel (%p272) target = $region88
              $region85: #{discriminator_forward.6} parent=80 // loop_body
                %v278 = vld [vmem:[%s276] sm:%s269]
                %279 = vst [vmem:[%s277] sm:%s269] %v278
                %v280 = vld [vmem:[%s276 + $0x4] sm:%s269]
                %281 = vst [vmem:[%s277 + $0x4] sm:%s269] %v280
                %v282 = vld [vmem:[%s276 + $0x48] sm:%s269]
                %283 = vst [vmem:[%s277 + $0x8] sm:%s269] %v282
                %v284 = vld [vmem:[%s276 + $0x4c] sm:%s269]
                %285 = vst [vmem:[%s277 + $0xc] sm:%s269] %v284
              $region86: #{discriminator_forward.6} parent=80 // loop_footer
                %s275 = sadd.s32 1, %s271
              $region87: #{discriminator_forward.6} parent=80 // loop_footer_branch
                %270 = sbr.rel target = $region83
              $region88: #{discriminator_forward.6} parent=80 // loop_exit
                _
            $region81: #{discriminator_forward.6} parent=72 // pred_fallthru
              _
          $region73: #{discriminator_forward.6} parent=68 // pred_fallthru
            _
          %314 = vnop
        $region69: #{discriminator_forward.6} parent=23 // pred_fallthru
          _
      $region24: #{discriminator_forward.6} parent=5 // pred_fallthru
        _
      %p315 = scmp.le.s32.totalorder 1, %s10
      %p316 = scmp.lt.s32.totalorder %s10, 9
      %p317 = pnand %p315, %p316
      %p318 = pneg %p317
      // Predicated region
      $region107: #{discriminator_forward.6} parent=5 // pred_check
        _
      $region108: #{discriminator_forward.6} parent=5 // pred_check_branch
        %320 = sbr.rel (%p317) target = $region110
      $region109: #{discriminator_forward.6} parent=5 // pred_region
        %s321 = ssub.s32 %s10, 1
        %s322 = sand.u32 %s35, 1
        %s323 = sand.u32 %s35, 1
        %s324 = smul.addr %s323, 16
        %s325 = scalar_lea.vmem [#allocation2], %s324
        // Predicated region
        $region111: #{discriminator_forward.6} parent=109 // pred_check
          %p326 = pneg %p48
        $region112: #{discriminator_forward.6} parent=109 // pred_check_branch
          %328 = sbr.rel (%p326) target = $region114
        $region113: #{discriminator_forward.6} parent=109 // pred_region
          _
        $region114: #{discriminator_forward.6} parent=109 // pred_fallthru
          _
        %s329 = sand.u32 %s63, 1
        %s330 = sand.u32 %s63, 1
        %s331 = smul.addr %s330, 16
        %s332 = scalar_lea.vmem [#allocation3], %s331
        // Predicated region
        $region115: #{discriminator_forward.6} parent=109 // pred_check
          %p333 = pneg %p76
        $region116: #{discriminator_forward.6} parent=109 // pred_check_branch
          %335 = sbr.rel (%p333) target = $region118
        $region117: #{discriminator_forward.6} parent=109 // pred_region
          _
        $region118: #{discriminator_forward.6} parent=109 // pred_fallthru
          _
        %s336 = sand.u32 %s35, 1
        %s337 = sand.u32 %s35, 1
        %s338 = smul.addr %s337, 16
        %s339 = scalar_lea.vmem [#allocation2], %s338
        %p340 = pneg %p48
        %p341 = pneg %p45
        %s342 = sand.u32 %s63, 1
        %s343 = sand.u32 %s63, 1
        %s344 = smul.addr %s343, 16
        %s345 = scalar_lea.vmem [#allocation3], %s344
        %p346 = pneg %p76
        %p347 = pneg %p73
        %p348 = scmp.lt.s32.totalorder %s19, 0
        %s349 = scalar_select %p348, %s19, 0
        %s350 = smul.addr %s349, 4
        %s351 = scalar_lea.vmem %s2, %s350
        %p352 = pneg %p102
        %p353 = pneg %p99
        %p354 = scmp.lt.s32.totalorder %s19, 0
        %s355 = scalar_select %p354, %s19, 0
        %s356 = scalar_lea.vmem %s3, %s355
        %p357 = pneg %p128
        %p358 = pneg %p125
        %p359 = pneg %p156
        %p360 = pneg %p153
        %s361 = sand.u32 %s143, 1
        %s362 = sand.u32 %s143, 1
        %s363 = smul.addr %s362, 8
        %s364 = scalar_lea.vmem [#allocation4], %s363
        %s365 = sadd.s32 %s20, 1
        %p366 = scmp.lt.s32.totalorder %s19, 0
        %s367 = scalar_select %p366, %s19, 0
        %s368 = smul.addr %s367, 4
        %s369 = scalar_lea.vmem %s2, %s368
        %p370 = scmp.lt.s32.totalorder %s19, 0
        %s371 = scalar_select %p370, %s19, 0
        %s372 = scalar_lea.vmem %s3, %s371
        %v374 = vld [vmem:[%s369] sm:$0xf]
        %v375 = vld [vmem:[%s369 + $0x4] sm:$0xf]
        %v376 = vld [vmem:[%s369 + $0x8] sm:$0xf]
        %v377 = vld [vmem:[%s369 + $0xc] sm:$0xf]
        %v378 = vld [vmem:[%s369 + $0x10] sm:$0xf]
        %v379 = vld [vmem:[%s369 + $0x14] sm:$0xf]
        %v380 = vld [vmem:[%s369 + $0x18] sm:$0xf]
        %v381 = vld [vmem:[%s369 + $0x1c] sm:$0xf]
        %v382 = vld [vmem:[%s369 + $0x20] sm:$0xf]
        %v383 = vld [vmem:[%s369 + $0x24] sm:$0xf]
        %v384 = vld [vmem:[%s369 + $0x28] sm:$0xf]
        %v385 = vld [vmem:[%s369 + $0x2c] sm:$0xf]
        %v386 = vld [vmem:[%s369 + $0x30] sm:$0xf]
        %v387 = vld [vmem:[%s369 + $0x34] sm:$0xf]
        %v388 = vld [vmem:[%s369 + $0x38] sm:$0xf]
        %v389 = vld [vmem:[%s369 + $0x3c] sm:$0xf]
        %v390 = vld [vmem:[%s325] sm:$0xf]
        %v391 = vld [vmem:[%s325 + $0x4] sm:$0x1]
        %v392 = vld [vmem:[%s325 + $0x8] sm:$0xf]
        %v393 = vld [vmem:[%s325 + $0xc] sm:$0x1]
        %vm394 = vsmask.f32 3328
        %vm395 = vsmask.f32 7440
        %vm396 = vmor %vm394, %vm395
        %v398 = vshrl.u32 %v390, 16
        %v400 = vrot.slane %v398, 4
        %v401 = vshll.u32 %v390, 16
        %v403 = vrot.slane %v401, 5
        %v404 = vor.u32 %v400, %v403
        %v405 = vrot.slane %v404, 4
        %v407 = vshll.u32 %v391, 16
        %v409 = vrot.slane %v407, 5
        %v410 = vsel %vm396, %v405, %v409
        %v412 = vshrl.u32 %v392, 16
        %v414 = vrot.slane %v412, 4
        %v415 = vshll.u32 %v392, 16
        %v417 = vrot.slane %v415, 5
        %v418 = vor.u32 %v414, %v417
        %v419 = vrot.slane %v418, 4
        %v421 = vshll.u32 %v393, 16
        %v423 = vrot.slane %v421, 5
        %v424 = vsel %vm396, %v419, %v423
        %v425 = vunpack.c.l.b16 %v410
        %v426 = vunpack.c.l.b16 %v424
        %v427 = vpack.c.b16 %v426, %v425
        %v432 = vunpack.c.l.b16 %v378
        %v433 = vunpack.c.l.b16 %v379
        %v434 = vunpack.c.l.b16 %v380
        %v435 = vunpack.c.l.b16 %v381
        %v436 = vpack.c.b16 %v433, %v432
        %v437 = vpack.c.b16 %v435, %v434
        %vm440 = vcmask 261120
        %v442 = vsel %vm440, %v427, 0
        %444 = vmatpush.bf16.msra.mxu0 0
        %445 = vmatpush.bf16.msra.mxu0 0
        %446 = vmatpush.bf16.msra.mxu0 0
        %447 = vmatpush.bf16.msra.mxu0 0
        %448 = vmatpush.bf16.msra.mxu0 0
        %449 = vmatpush.bf16.msra.mxu0 0
        %450 = vmatpush.bf16.msra.mxu0 %v437
        %451 = vmatpush.bf16.msra.mxu0 %v436
        %452 = vmatmul.bf16.gmra.mxu0 %v442
        %v453 = vpop.f32.mrf.mxu0
        %v454 = vadd.f32 0.0, %v453
        %v455 = vpop.f32.mrf.mxu0
        %v456 = vadd.f32 0.0, %v455
        %457 = vdwg.mxu0
        %v460 = vunpack.c.l.b16 %v390
        %v461 = vunpack.c.l.b16 %v392
        %v462 = vpack.c.b16 %v461, %v460
        %v467 = vunpack.c.l.b16 %v374
        %v468 = vunpack.c.l.b16 %v375
        %v469 = vunpack.c.l.b16 %v376
        %v470 = vunpack.c.l.b16 %v377
        %v471 = vpack.c.b16 %v468, %v467
        %v472 = vpack.c.b16 %v470, %v469
        %v476 = vsel %vm440, %v462, 0
        %478 = vmatpush.bf16.msra.mxu0 0
        %479 = vmatpush.bf16.msra.mxu0 0
        %480 = vmatpush.bf16.msra.mxu0 0
        %481 = vmatpush.bf16.msra.mxu0 0
        %482 = vmatpush.bf16.msra.mxu0 0
        %483 = vmatpush.bf16.msra.mxu0 0
        %484 = vmatpush.bf16.msra.mxu0 %v472
        %485 = vmatpush.bf16.msra.mxu0 %v471
        %486 = vmatmul.bf16.gmra.mxu0 %v476
        %v487 = vpop.f32.mrf.mxu0
        %v488 = vadd.f32 %v454, %v487
        %v489 = vpop.f32.mrf.mxu0
        %v490 = vadd.f32 %v456, %v489
        %491 = vdwg.mxu0
        %v492 = vld [vmem:[%s332] sm:$0xf]
        %v493 = vld [vmem:[%s332 + $0x4] sm:$0x1]
        %v494 = vld [vmem:[%s332 + $0x8] sm:$0xf]
        %v495 = vld [vmem:[%s332 + $0xc] sm:$0x1]
        %v498 = vunpack.c.l.b16 %v492
        %v499 = vunpack.c.l.b16 %v494
        %v500 = vpack.c.b16 %v499, %v498
        %v505 = vunpack.c.l.b16 %v382
        %v506 = vunpack.c.l.b16 %v383
        %v507 = vunpack.c.l.b16 %v384
        %v508 = vunpack.c.l.b16 %v385
        %v509 = vpack.c.b16 %v506, %v505
        %v510 = vpack.c.b16 %v508, %v507
        %v514 = vsel %vm440, %v500, 0
        %516 = vmatpush.bf16.msra.mxu0 0
        %517 = vmatpush.bf16.msra.mxu0 0
        %518 = vmatpush.bf16.msra.mxu0 0
        %519 = vmatpush.bf16.msra.mxu0 0
        %520 = vmatpush.bf16.msra.mxu0 0
        %521 = vmatpush.bf16.msra.mxu0 0
        %522 = vmatpush.bf16.msra.mxu0 %v510
        %523 = vmatpush.bf16.msra.mxu0 %v509
        %524 = vmatmul.bf16.gmra.mxu0 %v514
        %v525 = vpop.f32.mrf.mxu0
        %v526 = vadd.f32 0.0, %v525
        %v527 = vpop.f32.mrf.mxu0
        %v528 = vadd.f32 0.0, %v527
        %529 = vdwg.mxu0
        %v530 = vadd.f32 %v488, %v526
        %v531 = vadd.f32 %v490, %v528
        %v533 = vshrl.u32 %v492, 16
        %v535 = vrot.slane %v533, 4
        %v536 = vshll.u32 %v492, 16
        %v538 = vrot.slane %v536, 5
        %v539 = vor.u32 %v535, %v538
        %v540 = vrot.slane %v539, 4
        %v542 = vshll.u32 %v493, 16
        %v544 = vrot.slane %v542, 5
        %v545 = vsel %vm396, %v540, %v544
        %v547 = vshrl.u32 %v494, 16
        %v549 = vrot.slane %v547, 4
        %v550 = vshll.u32 %v494, 16
        %v552 = vrot.slane %v550, 5
        %v553 = vor.u32 %v549, %v552
        %v554 = vrot.slane %v553, 4
        %v556 = vshll.u32 %v495, 16
        %v558 = vrot.slane %v556, 5
        %v559 = vsel %vm396, %v554, %v558
        %v560 = vunpack.c.l.b16 %v545
        %v561 = vunpack.c.l.b16 %v559
        %v562 = vpack.c.b16 %v561, %v560
        %v567 = vunpack.c.l.b16 %v386
        %v568 = vunpack.c.l.b16 %v387
        %v569 = vunpack.c.l.b16 %v388
        %v570 = vunpack.c.l.b16 %v389
        %v571 = vpack.c.b16 %v568, %v567
        %v572 = vpack.c.b16 %v570, %v569
        %v576 = vsel %vm440, %v562, 0
        %578 = vmatpush.bf16.msra.mxu0 0
        %579 = vmatpush.bf16.msra.mxu0 0
        %580 = vmatpush.bf16.msra.mxu0 0
        %581 = vmatpush.bf16.msra.mxu0 0
        %582 = vmatpush.bf16.msra.mxu0 0
        %583 = vmatpush.bf16.msra.mxu0 0
        %584 = vmatpush.bf16.msra.mxu0 %v572
        %585 = vmatpush.bf16.msra.mxu0 %v571
        %586 = vmatmul.bf16.gmra.mxu0 %v576
        %v587 = vpop.f32.mrf.mxu0
        %v588 = vadd.f32 0.0, %v587
        %v589 = vpop.f32.mrf.mxu0
        %v590 = vadd.f32 0.0, %v589
        %591 = vdwg.mxu0
        %v592 = vadd.f32 %v530, %v588
        %v593 = vadd.f32 %v531, %v590
        %v594 = vld [vmem:[%s372] sm:$0x1]
        %v596 = vperm.slane %v594, 0
        %v598 = vadd.f32 %v592, %v596
        %v599 = vadd.f32 %v593, %v596
        %vm600 = vcmp.ge.f32.partialorder %v598, 0.0
        %vm601 = vcmp.ge.f32.partialorder %v599, 0.0
        %v602 = vmul.f32 %v598, 0.01
        %v603 = vmul.f32 %v599, 0.01
        %v604 = vsel %vm600, %v598, %v602
        %v605 = vsel %vm601, %v599, %v603
        %v606 = vpack.c.bf16 %v604, %v604
        %v607 = vpack.c.bf16 %v605, %v605
        %vm608 = vcmask 125952
        %609 = vst.msk [vmem:[%s364] sm:$0xf] %vm608, %v606
        %610 = vst.msk [vmem:[%s364 + $0x4] sm:$0xf] %vm608, %v607
        %s611 = sand.u32 %s143, 1
        %s612 = sand.u32 %s143, 1
        %s613 = smul.addr %s612, 8
        %s614 = scalar_lea.vmem [#allocation4], %s613
        // Predicated region
        $region119: #{discriminator_forward.6} parent=109 // pred_check
          %p615 = pneg %p153
        $region120: #{discriminator_forward.6} parent=109 // pred_check_branch
          %617 = sbr.rel (%p615) target = $region122
        $region121: #{discriminator_forward.6} parent=109 // pred_region
          %s618 = sadd.s32 %s19, %s20
          %s619 = smul.addr %s618, 4
          %s620 = scalar_lea.vmem %s4, %s619
          // Predicated region
          $region123: #{discriminator_forward.6} parent=121 // pred_check
            _
          $region124: #{discriminator_forward.6} parent=121 // pred_check_branch
            %622 = sbr.rel (0) target = $region126
          $region125: #{discriminator_forward.6} parent=121 // pred_region
            // Predicated region
            $region127: #{discriminator_forward.6} parent=125 // pred_check
              _
            $region128: #{discriminator_forward.6} parent=125 // pred_check_branch
              %624 = sbr.rel target = $region130
            $region129: #{discriminator_forward.6} parent=125 // pred_region
              // Predicated region
              $region142: #{discriminator_forward.6} parent=129 // pred_check
                _
              $region143: #{discriminator_forward.6} parent=129 // pred_check_branch
                %642 = sbr.rel (0) target = $region145
              $region144: #{discriminator_forward.6} parent=129 // pred_region
                loop: start=0, step=1, limit=1
                $region146: #{discriminator_forward.6} parent=144 // loop_pre_header
                  _
                $region147: #{discriminator_forward.6} parent=144 // loop_header
                  %s644 = sphi 0, %s648
                  %p645 = scmp.ge.s32.totalorder %s644, 1
                  %s649 = sphi %s614, %s614
                  %s650 = sphi %s620, %s620
                $region148: #{discriminator_forward.6} parent=144 // loop_header_branch
                  %647 = sbr.rel (%p645) target = $region152
                $region149: #{discriminator_forward.6} parent=144 // loop_body
                  _
                $region150: #{discriminator_forward.6} parent=144 // loop_footer
                  %s648 = sadd.s32 1, %s644
                $region151: #{discriminator_forward.6} parent=144 // loop_footer_branch
                  %643 = sbr.rel target = $region147
                $region152: #{discriminator_forward.6} parent=144 // loop_exit
                  _
                %s652 = ssub.s32 16, 1
                loop: start=0, step=1, limit=1
                $region153: #{discriminator_forward.6} parent=144 // loop_pre_header
                  _
                $region154: #{discriminator_forward.6} parent=144 // loop_header
                  %s654 = sphi 0, %s658
                  %p655 = scmp.ge.s32.totalorder %s654, 1
                  %s659 = sphi %s614, %s614
                  %s660 = sphi %s620, %s620
                $region155: #{discriminator_forward.6} parent=144 // loop_header_branch
                  %657 = sbr.rel (%p655) target = $region159
                $region156: #{discriminator_forward.6} parent=144 // loop_body
                  %v661 = vld [vmem:[%s659] sm:%s652]
                  %662 = vst [vmem:[%s660] sm:%s652] %v661
                  %v663 = vld [vmem:[%s659 + $0x4] sm:%s652]
                  %664 = vst [vmem:[%s660 + $0x20] sm:%s652] %v663
                $region157: #{discriminator_forward.6} parent=144 // loop_footer
                  %s658 = sadd.s32 1, %s654
                $region158: #{discriminator_forward.6} parent=144 // loop_footer_branch
                  %653 = sbr.rel target = $region154
                $region159: #{discriminator_forward.6} parent=144 // loop_exit
                  _
              $region145: #{discriminator_forward.6} parent=129 // pred_fallthru
                _
            $region130: #{discriminator_forward.6} parent=125 // pred_fallthru
              _
            // Predicated region
            $region131: #{discriminator_forward.6} parent=125 // pred_check
              _
            $region132: #{discriminator_forward.6} parent=125 // pred_check_branch
              %626 = sbr.rel (0) target = $region134
            $region133: #{discriminator_forward.6} parent=125 // pred_region
              %s628 = ssub.s32 16, 1
              loop: start=0, step=1, limit=1
              $region135: #{discriminator_forward.6} parent=133 // loop_pre_header
                _
              $region136: #{discriminator_forward.6} parent=133 // loop_header
                %s630 = sphi 0, %s634
                %p631 = scmp.ge.s32.totalorder %s630, 1
                %s635 = sphi %s614, %s614
                %s636 = sphi %s620, %s620
              $region137: #{discriminator_forward.6} parent=133 // loop_header_branch
                %633 = sbr.rel (%p631) target = $region141
              $region138: #{discriminator_forward.6} parent=133 // loop_body
                %v637 = vld [vmem:[%s635] sm:%s628]
                %638 = vst [vmem:[%s636] sm:%s628] %v637
                %v639 = vld [vmem:[%s635 + $0x4] sm:%s628]
                %640 = vst [vmem:[%s636 + $0x20] sm:%s628] %v639
              $region139: #{discriminator_forward.6} parent=133 // loop_footer
                %s634 = sadd.s32 1, %s630
              $region140: #{discriminator_forward.6} parent=133 // loop_footer_branch
                %629 = sbr.rel target = $region136
              $region141: #{discriminator_forward.6} parent=133 // loop_exit
                _
            $region134: #{discriminator_forward.6} parent=125 // pred_fallthru
              _
          $region126: #{discriminator_forward.6} parent=121 // pred_fallthru
            _
          %665 = vnop
        $region122: #{discriminator_forward.6} parent=109 // pred_fallthru
          _
      $region110: #{discriminator_forward.6} parent=5 // pred_fallthru
        _
      %p666 = scmp.le.s32.totalorder 2, %s10
      // Predicated region
      $region160: #{discriminator_forward.6} parent=5 // pred_check
        %p667 = pneg %p666
      $region161: #{discriminator_forward.6} parent=5 // pred_check_branch
        %669 = sbr.rel (%p667) target = $region163
      $region162: #{discriminator_forward.6} parent=5 // pred_region
        %s670 = ssub.s32 %s10, 2
        // Predicated region
        $region164: #{discriminator_forward.6} parent=162 // pred_check
          %p671 = pneg %p159
        $region165: #{discriminator_forward.6} parent=162 // pred_check_branch
          %673 = sbr.rel (%p671) target = $region167
        $region166: #{discriminator_forward.6} parent=162 // pred_region
          %s674 = sand.u32 %s144, 1
          %s675 = sand.u32 %s144, 1
          %s676 = smul.addr %s675, 8
          %s677 = scalar_lea.vmem [#allocation4], %s676
        $region167: #{discriminator_forward.6} parent=162 // pred_fallthru
          _
      $region163: #{discriminator_forward.6} parent=5 // pred_fallthru
        _
    $region6: #{discriminator_forward.6} parent=1 // loop_footer
      %s14 = sadd.s32 1, %s10
    $region7: #{discriminator_forward.6} parent=1 // loop_footer_branch
      %9 = sbr.rel target = $region3
    $region8: #{discriminator_forward.6} parent=1 // loop_exit
      _

// kernel: discriminator_forward.7
$region0: #{discriminator_forward.7}
  #allocation0 [shape = 'u32[]', space=smem, size = 0x4, offset = 0x4, fixed_abs, tag = 'smem constant byte address 0x4 - core index']
  #allocation1 [shape = 'u32[72,128]{1,0:T(1,128)}', space=vmem, size = 0x9000, scoped, tag = 'internal scratch']
  %s0 = inlined_call_operand.vmem [shape: bf16[2,5,5,64], index: 0, kind: input, shape index: {}, may-alias: {0,1}]
  %s1 = inlined_call_operand.vmem [shape: bf16[2,5,5,64], index: 1, kind: input, shape index: {}, may-alias: {0,1}]
  %s2 = inlined_call_operand.vmem [shape: bf16[2,2,64,32], index: 2, kind: input, shape index: {}]
  %s3 = inlined_call_operand.vmem [shape: f32[1,32], index: 3, kind: input, shape index: {}]
  %s4 = inlined_call_operand.vmem [shape: bf16[2,4,4,32], index: 4, kind: output, shape index: {}]
  %s5 = sld [smem:[#allocation0]]
  $region161: #{discriminator_forward.7} parent=0
    _
  %s7 = ssub.s32 1, %s5
  %s8 = scalar_select 0, %s7, %s5
  $region1: #{discriminator_forward.7} parent=0
    #allocation2 [shape = 'u8[8192]{0}', space=vmem, size = 0x2000, scoped, tag = 'input window, operand 0']
    #allocation3 [shape = 'u8[8192]{0}', space=vmem, size = 0x2000, scoped, tag = 'input window, operand 1']
    #allocation4 [shape = 'u8[4096]{0}', space=vmem, size = 0x1000, scoped, tag = 'output window, operand 0']
    loop: start=0, step=1, limit=6
    $region2: #{discriminator_forward.7} parent=1 // loop_pre_header
      _
    $region3: #{discriminator_forward.7} parent=1 // loop_header
      %s10 = sphi 0, %s14
      %p11 = scmp.ge.s32.totalorder %s10, 6
      %s17 = sphi 0, %s29
      %s18 = sphi 0, %s25
      %s19 = sphi 0, %s17
      %s20 = sphi 0, %s18
      %s21 = sphi 0, %s19
      %s22 = sphi 0, %s20
      %s32 = sphi 0, %s34
      %s35 = sphi 0, %s32
      %s36 = sphi 0, %s35
      %s52 = sphi 0, %s36
      %s60 = sphi 0, %s62
      %s63 = sphi 0, %s60
      %s64 = sphi 0, %s63
      %s80 = sphi 0, %s64
      %s86 = sphi 0, %s88
      %s89 = sphi 0, %s86
      %s90 = sphi 0, %s89
      %s106 = sphi 0, %s90
      %s112 = sphi 0, %s114
      %s115 = sphi 0, %s112
      %s116 = sphi 0, %s115
      %s132 = sphi 0, %s116
      %s140 = sphi 0, %s142
      %s143 = sphi 0, %s140
      %s144 = sphi 0, %s143
      %s160 = sphi 0, %s144
    $region4: #{discriminator_forward.7} parent=1 // loop_header_branch
      %13 = sbr.rel (%p11) target = $region8
    $region5: #{discriminator_forward.7} parent=1 // loop_body
      %s15 = ssub.s32 %s10, 1
      %s16 = ssub.s32 %s10, 2
      %s23 = sadd.s32 1, %s18
      %p24 = scmp.ge.s32.totalorder %s23, 4
      %s25 = scalar_select %p24, 0, %s23
      %s26 = sadd.s32 1, %s17
      %s27 = scalar_select %p24, %s26, %s17
      %p28 = scmp.ge.s32.totalorder %s27, 1
      %s29 = scalar_select %p28, 0, %s27
      %s30 = ssub.s32 %s18, %s25
      %p31 = scmp.eq.s32.totalorder %s30, 0
      %s33 = sadd.s32 %s32, 1
      %s34 = scalar_select %p31, %s32, %s33
      %p37 = pneg %p31
      %p38 = scmp.eq.s32.totalorder %s10, 3
      %p39 = por %p37, %p38
      %p40 = scmp.ne.s32.totalorder %s32, %s35
      %p41 = scmp.eq.s32.totalorder %s10, 0
      %p42 = por %p40, %p41
      %p43 = scmp.ne.s32.totalorder %s32, %s35
      %p44 = scmp.eq.s32.totalorder %s15, 3
      %p45 = por %p43, %p44
      %p46 = scmp.ne.s32.totalorder %s35, %s36
      %p47 = scmp.eq.s32.totalorder %s15, 0
      %p48 = por %p46, %p47
      %p49 = scmp.ne.s32.totalorder %s35, %s36
      %p50 = scmp.eq.s32.totalorder %s16, 3
      %p51 = por %p49, %p50
      %p53 = scmp.ne.s32.totalorder %s36, %s52
      %p54 = scmp.eq.s32.totalorder %s16, 0
      %p55 = por %p53, %p54
      %s56 = sadd.s32 %s18, 1
      %s57 = sadd.s32 %s25, 1
      %s58 = ssub.s32 %s56, %s57
      %p59 = scmp.eq.s32.totalorder %s58, 0
      %s61 = sadd.s32 %s60, 1
      %s62 = scalar_select %p59, %s60, %s61
      %p65 = pneg %p59
      %p66 = scmp.eq.s32.totalorder %s10, 3
      %p67 = por %p65, %p66
      %p68 = scmp.ne.s32.totalorder %s60, %s63
      %p69 = scmp.eq.s32.totalorder %s10, 0
      %p70 = por %p68, %p69
      %p71 = scmp.ne.s32.totalorder %s60, %s63
      %p72 = scmp.eq.s32.totalorder %s15, 3
      %p73 = por %p71, %p72
      %p74 = scmp.ne.s32.totalorder %s63, %s64
      %p75 = scmp.eq.s32.totalorder %s15, 0
      %p76 = por %p74, %p75
      %p77 = scmp.ne.s32.totalorder %s63, %s64
      %p78 = scmp.eq.s32.totalorder %s16, 3
      %p79 = por %p77, %p78
      %p81 = scmp.ne.s32.totalorder %s64, %s80
      %p82 = scmp.eq.s32.totalorder %s16, 0
      %p83 = por %p81, %p82
      %s84 = ssub.s32 %s17, %s29
      %p85 = scmp.eq.s32.totalorder %s84, 0
      %s87 = sadd.s32 %s86, 1
      %s88 = scalar_select %p85, %s86, %s87
      %p91 = pneg %p85
      %p92 = scmp.eq.s32.totalorder %s10, 3
      %p93 = por %p91, %p92
      %p94 = scmp.ne.s32.totalorder %s86, %s89
      %p95 = scmp.eq.s32.totalorder %s10, 0
      %p96 = por %p94, %p95
      %p97 = scmp.ne.s32.totalorder %s86, %s89
      %p98 = scmp.eq.s32.totalorder %s15, 3
      %p99 = por %p97, %p98
      %p100 = scmp.ne.s32.totalorder %s89, %s90
      %p101 = scmp.eq.s32.totalorder %s15, 0
      %p102 = por %p100, %p101
      %p103 = scmp.ne.s32.totalorder %s89, %s90
      %p104 = scmp.eq.s32.totalorder %s16, 3
      %p105 = por %p103, %p104
      %p107 = scmp.ne.s32.totalorder %s90, %s106
      %p108 = scmp.eq.s32.totalorder %s16, 0
      %p109 = por %p107, %p108
      %s110 = ssub.s32 %s17, %s29
      %p111 = scmp.eq.s32.totalorder %s110, 0
      %s113 = sadd.s32 %s112, 1
      %s114 = scalar_select %p111, %s112, %s113
      %p117 = pneg %p111
      %p118 = scmp.eq.s32.totalorder %s10, 3
      %p119 = por %p117, %p118
      %p120 = scmp.ne.s32.totalorder %s112, %s115
      %p121 = scmp.eq.s32.totalorder %s10, 0
      %p122 = por %p120, %p121
      %p123 = scmp.ne.s32.totalorder %s112, %s115
      %p124 = scmp.eq.s32.totalorder %s15, 3
      %p125 = por %p123, %p124
      %p126 = scmp.ne.s32.totalorder %s115, %s116
      %p127 = scmp.eq.s32.totalorder %s15, 0
      %p128 = por %p126, %p127
      %p129 = scmp.ne.s32.totalorder %s115, %s116
      %p130 = scmp.eq.s32.totalorder %s16, 3
      %p131 = por %p129, %p130
      %p133 = scmp.ne.s32.totalorder %s116, %s132
      %p134 = scmp.eq.s32.totalorder %s16, 0
      %p135 = por %p133, %p134
      %s136 = ssub.s32 %s18, %s25
      %s137 = ssub.s32 %s17, %s29
      %s138 = sor.u32 %s136, %s137
      %p139 = scmp.eq.s32.totalorder %s138, 0
      %s141 = sadd.s32 %s140, 1
      %s142 = scalar_select %p139, %s140, %s141
      %p145 = pneg %p139
      %p146 = scmp.eq.s32.totalorder %s10, 3
      %p147 = por %p145, %p146
      %p148 = scmp.ne.s32.totalorder %s140, %s143
      %p149 = scmp.eq.s32.totalorder %s10, 0
      %p150 = por %p148, %p149
      %p151 = scmp.ne.s32.totalorder %s140, %s143
      %p152 = scmp.eq.s32.totalorder %s15, 3
      %p153 = por %p151, %p152
      %p154 = scmp.ne.s32.totalorder %s143, %s144
      %p155 = scmp.eq.s32.totalorder %s15, 0
      %p156 = por %p154, %p155
      %p157 = scmp.ne.s32.totalorder %s143, %s144
      %p158 = scmp.eq.s32.totalorder %s16, 3
      %p159 = por %p157, %p158
      %p161 = scmp.ne.s32.totalorder %s144, %s160
      %p162 = scmp.eq.s32.totalorder %s16, 0
      %p163 = por %p161, %p162
      %p164 = scmp.le.s32.totalorder 1, %s10
      %p165 = scmp.lt.s32.totalorder %s10, 5
      %p166 = pnand %p164, %p165
      %p167 = pneg %p166
      // Predicated region
      $region9: #{discriminator_forward.7} parent=5 // pred_check
        _
      $region10: #{discriminator_forward.7} parent=5 // pred_check_branch
        %169 = sbr.rel (%p166) target = $region12
      $region11: #{discriminator_forward.7} parent=5 // pred_region
        %s170 = ssub.s32 %s10, 1
        // Predicated region
        $region13: #{discriminator_forward.7} parent=11 // pred_check
          %p171 = pneg %p102
        $region14: #{discriminator_forward.7} parent=11 // pred_check_branch
          %173 = sbr.rel (%p171) target = $region16
        $region15: #{discriminator_forward.7} parent=11 // pred_region
          %p174 = scmp.lt.s32.totalorder %s19, 0
          %s175 = scalar_select %p174, %s19, 0
          %s176 = smul.addr %s175, 4
          %s177 = scalar_lea.vmem %s2, %s176
        $region16: #{discriminator_forward.7} parent=11 // pred_fallthru
          _
        // Predicated region
        $region17: #{discriminator_forward.7} parent=11 // pred_check
          %p178 = pneg %p128
        $region18: #{discriminator_forward.7} parent=11 // pred_check_branch
          %180 = sbr.rel (%p178) target = $region20
        $region19: #{discriminator_forward.7} parent=11 // pred_region
          %p181 = scmp.lt.s32.totalorder %s19, 0
          %s182 = scalar_select %p181, %s19, 0
          %s183 = scalar_lea.vmem %s3, %s182
        $region20: #{discriminator_forward.7} parent=11 // pred_fallthru
          _
      $region12: #{discriminator_forward.7} parent=5 // pred_fallthru
        _
      %p184 = scmp.lt.s32.totalorder %s10, 4
      // Predicated region
      $region21: #{discriminator_forward.7} parent=5 // pred_check
        %p185 = pneg %p184
      $region22: #{discriminator_forward.7} parent=5 // pred_check_branch
        %187 = sbr.rel (%p185) target = $region24
      $region23: #{discriminator_forward.7} parent=5 // pred_region
        // Predicated region
        $region25: #{discriminator_forward.7} parent=23 // pred_check
          %p188 = pneg %p42
        $region26: #{discriminator_forward.7} parent=23 // pred_check_branch
          %190 = sbr.rel (%p188) target = $region28
        $region27: #{discriminator_forward.7} parent=23 // pred_region
          %s191 = sand.u32 %s32, 1
          %s192 = sand.u32 %s32, 1
          %s193 = smul.addr %s192, 8
          %s194 = scalar_lea.vmem [#allocation2], %s193
          %s195 = smul.addr %s18, 4
          %s196 = scalar_lea.vmem %s0, %s195
          // Predicated region
          $region29: #{discriminator_forward.7} parent=27 // pred_check
            _
          $region30: #{discriminator_forward.7} parent=27 // pred_check_branch
            %198 = sbr.rel (0) target = $region32
          $region31: #{discriminator_forward.7} parent=27 // pred_region
            // Predicated region
            $region33: #{discriminator_forward.7} parent=31 // pred_check
              _
            $region34: #{discriminator_forward.7} parent=31 // pred_check_branch
              %200 = sbr.rel target = $region36
            $region35: #{discriminator_forward.7} parent=31 // pred_region
              // Predicated region
              $region48: #{discriminator_forward.7} parent=35 // pred_check
                _
              $region49: #{discriminator_forward.7} parent=35 // pred_check_branch
                %218 = sbr.rel (0) target = $region51
              $region50: #{discriminator_forward.7} parent=35 // pred_region
                loop: start=0, step=1, limit=1
                $region52: #{discriminator_forward.7} parent=50 // loop_pre_header
                  _
                $region53: #{discriminator_forward.7} parent=50 // loop_header
                  %s220 = sphi 0, %s224
                  %p221 = scmp.ge.s32.totalorder %s220, 1
                  %s225 = sphi %s196, %s196
                  %s226 = sphi %s194, %s194
                $region54: #{discriminator_forward.7} parent=50 // loop_header_branch
                  %223 = sbr.rel (%p221) target = $region58
                $region55: #{discriminator_forward.7} parent=50 // loop_body
                  _
                $region56: #{discriminator_forward.7} parent=50 // loop_footer
                  %s224 = sadd.s32 1, %s220
                $region57: #{discriminator_forward.7} parent=50 // loop_footer_branch
                  %219 = sbr.rel target = $region53
                $region58: #{discriminator_forward.7} parent=50 // loop_exit
                  _
                %s228 = ssub.s32 16, 1
                loop: start=0, step=1, limit=1
                $region59: #{discriminator_forward.7} parent=50 // loop_pre_header
                  _
                $region60: #{discriminator_forward.7} parent=50 // loop_header
                  %s230 = sphi 0, %s234
                  %p231 = scmp.ge.s32.totalorder %s230, 1
                  %s235 = sphi %s196, %s196
                  %s236 = sphi %s194, %s194
                $region61: #{discriminator_forward.7} parent=50 // loop_header_branch
                  %233 = sbr.rel (%p231) target = $region65
                $region62: #{discriminator_forward.7} parent=50 // loop_body
                  %v237 = vld [vmem:[%s235] sm:%s228]
                  %238 = vst [vmem:[%s236] sm:%s228] %v237
                  %v239 = vld [vmem:[%s235 + $0x14] sm:%s228]
                  %240 = vst [vmem:[%s236 + $0x4] sm:%s228] %v239
                $region63: #{discriminator_forward.7} parent=50 // loop_footer
                  %s234 = sadd.s32 1, %s230
                $region64: #{discriminator_forward.7} parent=50 // loop_footer_branch
                  %229 = sbr.rel target = $region60
                $region65: #{discriminator_forward.7} parent=50 // loop_exit
                  _
              $region51: #{discriminator_forward.7} parent=35 // pred_fallthru
                _
            $region36: #{discriminator_forward.7} parent=31 // pred_fallthru
              _
            // Predicated region
            $region37: #{discriminator_forward.7} parent=31 // pred_check
              _
            $region38: #{discriminator_forward.7} parent=31 // pred_check_branch
              %202 = sbr.rel (0) target = $region40
            $region39: #{discriminator_forward.7} parent=31 // pred_region
              %s204 = ssub.s32 16, 1
              loop: start=0, step=1, limit=1
              $region41: #{discriminator_forward.7} parent=39 // loop_pre_header
                _
              $region42: #{discriminator_forward.7} parent=39 // loop_header
                %s206 = sphi 0, %s210
                %p207 = scmp.ge.s32.totalorder %s206, 1
                %s211 = sphi %s196, %s196
                %s212 = sphi %s194, %s194
              $region43: #{discriminator_forward.7} parent=39 // loop_header_branch
                %209 = sbr.rel (%p207) target = $region47
              $region44: #{discriminator_forward.7} parent=39 // loop_body
                %v213 = vld [vmem:[%s211] sm:%s204]
                %214 = vst [vmem:[%s212] sm:%s204] %v213
                %v215 = vld [vmem:[%s211 + $0x14] sm:%s204]
                %216 = vst [vmem:[%s212 + $0x4] sm:%s204] %v215
              $region45: #{discriminator_forward.7} parent=39 // loop_footer
                %s210 = sadd.s32 1, %s206
              $region46: #{discriminator_forward.7} parent=39 // loop_footer_branch
                %205 = sbr.rel target = $region42
              $region47: #{discriminator_forward.7} parent=39 // loop_exit
                _
            $region40: #{discriminator_forward.7} parent=31 // pred_fallthru
              _
          $region32: #{discriminator_forward.7} parent=27 // pred_fallthru
            _
          %241 = vnop
        $region28: #{discriminator_forward.7} parent=23 // pred_fallthru
          _
        // Predicated region
        $region66: #{discriminator_forward.7} parent=23 // pred_check
          %p242 = pneg %p70
        $region67: #{discriminator_forward.7} parent=23 // pred_check_branch
          %244 = sbr.rel (%p242) target = $region69
        $region68: #{discriminator_forward.7} parent=23 // pred_region
          %s245 = sand.u32 %s60, 1
          %s246 = sand.u32 %s60, 1
          %s247 = smul.addr %s246, 8
          %s248 = scalar_lea.vmem [#allocation3], %s247
          %s249 = sadd.s32 %s18, 1
          %s250 = smul.addr %s249, 4
          %s251 = scalar_lea.vmem %s1, %s250
          // Predicated region
          $region70: #{discriminator_forward.7} parent=68 // pred_check
            _
          $region71: #{discriminator_forward.7} parent=68 // pred_check_branch
            %253 = sbr.rel (0) target = $region73
          $region72: #{discriminator_forward.7} parent=68 // pred_region
            // Predicated region
            $region74: #{discriminator_forward.7} parent=72 // pred_check
              _
            $region75: #{discriminator_forward.7} parent=72 // pred_check_branch
              %255 = sbr.rel target = $region77
            $region76: #{discriminator_forward.7} parent=72 // pred_region
              // Predicated region
              $region89: #{discriminator_forward.7} parent=76 // pred_check
                _
              $region90: #{discriminator_forward.7} parent=76 // pred_check_branch
                %273 = sbr.rel (0) target = $region92
              $region91: #{discriminator_forward.7} parent=76 // pred_region
                loop: start=0, step=1, limit=1
                $region93: #{discriminator_forward.7} parent=91 // loop_pre_header
                  _
                $region94: #{discriminator_forward.7} parent=91 // loop_header
                  %s275 = sphi 0, %s279
                  %p276 = scmp.ge.s32.totalorder %s275, 1
                  %s280 = sphi %s251, %s251
                  %s281 = sphi %s248, %s248
                $region95: #{discriminator_forward.7} parent=91 // loop_header_branch
                  %278 = sbr.rel (%p276) target = $region99
                $region96: #{discriminator_forward.7} parent=91 // loop_body
                  _
                $region97: #{discriminator_forward.7} parent=91 // loop_footer
                  %s279 = sadd.s32 1, %s275
                $region98: #{discriminator_forward.7} parent=91 // loop_footer_branch
                  %274 = sbr.rel target = $region94
                $region99: #{discriminator_forward.7} parent=91 // loop_exit
                  _
                %s283 = ssub.s32 16, 1
                loop: start=0, step=1, limit=1
                $region100: #{discriminator_forward.7} parent=91 // loop_pre_header
                  _
                $region101: #{discriminator_forward.7} parent=91 // loop_header
                  %s285 = sphi 0, %s289
                  %p286 = scmp.ge.s32.totalorder %s285, 1
                  %s290 = sphi %s251, %s251
                  %s291 = sphi %s248, %s248
                $region102: #{discriminator_forward.7} parent=91 // loop_header_branch
                  %288 = sbr.rel (%p286) target = $region106
                $region103: #{discriminator_forward.7} parent=91 // loop_body
                  %v292 = vld [vmem:[%s290] sm:%s283]
                  %293 = vst [vmem:[%s291] sm:%s283] %v292
                  %v294 = vld [vmem:[%s290 + $0x14] sm:%s283]
                  %295 = vst [vmem:[%s291 + $0x4] sm:%s283] %v294
                $region104: #{discriminator_forward.7} parent=91 // loop_footer
                  %s289 = sadd.s32 1, %s285
                $region105: #{discriminator_forward.7} parent=91 // loop_footer_branch
                  %284 = sbr.rel target = $region101
                $region106: #{discriminator_forward.7} parent=91 // loop_exit
                  _
              $region92: #{discriminator_forward.7} parent=76 // pred_fallthru
                _
            $region77: #{discriminator_forward.7} parent=72 // pred_fallthru
              _
            // Predicated region
            $region78: #{discriminator_forward.7} parent=72 // pred_check
              _
            $region79: #{discriminator_forward.7} parent=72 // pred_check_branch
              %257 = sbr.rel (0) target = $region81
            $region80: #{discriminator_forward.7} parent=72 // pred_region
              %s259 = ssub.s32 16, 1
              loop: start=0, step=1, limit=1
              $region82: #{discriminator_forward.7} parent=80 // loop_pre_header
                _
              $region83: #{discriminator_forward.7} parent=80 // loop_header
                %s261 = sphi 0, %s265
                %p262 = scmp.ge.s32.totalorder %s261, 1
                %s266 = sphi %s251, %s251
                %s267 = sphi %s248, %s248
              $region84: #{discriminator_forward.7} parent=80 // loop_header_branch
                %264 = sbr.rel (%p262) target = $region88
              $region85: #{discriminator_forward.7} parent=80 // loop_body
                %v268 = vld [vmem:[%s266] sm:%s259]
                %269 = vst [vmem:[%s267] sm:%s259] %v268
                %v270 = vld [vmem:[%s266 + $0x14] sm:%s259]
                %271 = vst [vmem:[%s267 + $0x4] sm:%s259] %v270
              $region86: #{discriminator_forward.7} parent=80 // loop_footer
                %s265 = sadd.s32 1, %s261
              $region87: #{discriminator_forward.7} parent=80 // loop_footer_branch
                %260 = sbr.rel target = $region83
              $region88: #{discriminator_forward.7} parent=80 // loop_exit
                _
            $region81: #{discriminator_forward.7} parent=72 // pred_fallthru
              _
          $region73: #{discriminator_forward.7} parent=68 // pred_fallthru
            _
          %296 = vnop
        $region69: #{discriminator_forward.7} parent=23 // pred_fallthru
          _
      $region24: #{discriminator_forward.7} parent=5 // pred_fallthru
        _
      %p297 = scmp.le.s32.totalorder 1, %s10
      %p298 = scmp.lt.s32.totalorder %s10, 5
      %p299 = pnand %p297, %p298
      %p300 = pneg %p299
      // Predicated region
      $region107: #{discriminator_forward.7} parent=5 // pred_check
        _
      $region108: #{discriminator_forward.7} parent=5 // pred_check_branch
        %302 = sbr.rel (%p299) target = $region110
      $region109: #{discriminator_forward.7} parent=5 // pred_region
        %s303 = ssub.s32 %s10, 1
        %s304 = sand.u32 %s35, 1
        %s305 = sand.u32 %s35, 1
        %s306 = smul.addr %s305, 8
        %s307 = scalar_lea.vmem [#allocation2], %s306
        // Predicated region
        $region111: #{discriminator_forward.7} parent=109 // pred_check
          %p308 = pneg %p48
        $region112: #{discriminator_forward.7} parent=109 // pred_check_branch
          %310 = sbr.rel (%p308) target = $region114
        $region113: #{discriminator_forward.7} parent=109 // pred_region
          _
        $region114: #{discriminator_forward.7} parent=109 // pred_fallthru
          _
        %s311 = sand.u32 %s63, 1
        %s312 = sand.u32 %s63, 1
        %s313 = smul.addr %s312, 8
        %s314 = scalar_lea.vmem [#allocation3], %s313
        // Predicated region
        $region115: #{discriminator_forward.7} parent=109 // pred_check
          %p315 = pneg %p76
        $region116: #{discriminator_forward.7} parent=109 // pred_check_branch
          %317 = sbr.rel (%p315) target = $region118
        $region117: #{discriminator_forward.7} parent=109 // pred_region
          _
        $region118: #{discriminator_forward.7} parent=109 // pred_fallthru
          _
        %s318 = sand.u32 %s35, 1
        %s319 = sand.u32 %s35, 1
        %s320 = smul.addr %s319, 8
        %s321 = scalar_lea.vmem [#allocation2], %s320
        %p322 = pneg %p48
        %p323 = pneg %p45
        %s324 = sand.u32 %s63, 1
        %s325 = sand.u32 %s63, 1
        %s326 = smul.addr %s325, 8
        %s327 = scalar_lea.vmem [#allocation3], %s326
        %p328 = pneg %p76
        %p329 = pneg %p73
        %p330 = scmp.lt.s32.totalorder %s19, 0
        %s331 = scalar_select %p330, %s19, 0
        %s332 = smul.addr %s331, 4
        %s333 = scalar_lea.vmem %s2, %s332
        %p334 = pneg %p102
        %p335 = pneg %p99
        %p336 = scmp.lt.s32.totalorder %s19, 0
        %s337 = scalar_select %p336, %s19, 0
        %s338 = scalar_lea.vmem %s3, %s337
        %p339 = pneg %p128
        %p340 = pneg %p125
        %p341 = pneg %p156
        %p342 = pneg %p153
        %s343 = sand.u32 %s143, 1
        %s344 = sand.u32 %s143, 1
        %s345 = smul.addr %s344, 4
        %s346 = scalar_lea.vmem [#allocation4], %s345
        %s347 = sadd.s32 %s20, 1
        %p348 = scmp.lt.s32.totalorder %s19, 0
        %s349 = scalar_select %p348, %s19, 0
        %s350 = smul.addr %s349, 4
        %s351 = scalar_lea.vmem %s2, %s350
        %p352 = scmp.lt.s32.totalorder %s19, 0
        %s353 = scalar_select %p352, %s19, 0
        %s354 = scalar_lea.vmem %s3, %s353
        %v356 = vld [vmem:[%s351] sm:$0xf]
        %v357 = vld [vmem:[%s351 + $0x4] sm:$0xf]
        %v358 = vld [vmem:[%s351 + $0x8] sm:$0xf]
        %v359 = vld [vmem:[%s351 + $0xc] sm:$0xf]
        %v360 = vld [vmem:[%s351 + $0x10] sm:$0xf]
        %v361 = vld [vmem:[%s351 + $0x14] sm:$0xf]
        %v362 = vld [vmem:[%s351 + $0x18] sm:$0xf]
        %v363 = vld [vmem:[%s351 + $0x1c] sm:$0xf]
        %v364 = vld [vmem:[%s351 + $0x20] sm:$0xf]
        %v365 = vld [vmem:[%s351 + $0x24] sm:$0xf]
        %v366 = vld [vmem:[%s351 + $0x28] sm:$0xf]
        %v367 = vld [vmem:[%s351 + $0x2c] sm:$0xf]
        %v368 = vld [vmem:[%s351 + $0x30] sm:$0xf]
        %v369 = vld [vmem:[%s351 + $0x34] sm:$0xf]
        %v370 = vld [vmem:[%s351 + $0x38] sm:$0xf]
        %v371 = vld [vmem:[%s351 + $0x3c] sm:$0xf]
        %v372 = vld [vmem:[%s351 + $0x40] sm:$0xf]
        %v373 = vld [vmem:[%s351 + $0x44] sm:$0xf]
        %v374 = vld [vmem:[%s351 + $0x48] sm:$0xf]
        %v375 = vld [vmem:[%s351 + $0x4c] sm:$0xf]
        %v376 = vld [vmem:[%s351 + $0x50] sm:$0xf]
        %v377 = vld [vmem:[%s351 + $0x54] sm:$0xf]
        %v378 = vld [vmem:[%s351 + $0x58] sm:$0xf]
        %v379 = vld [vmem:[%s351 + $0x5c] sm:$0xf]
        %v380 = vld [vmem:[%s351 + $0x60] sm:$0xf]
        %v381 = vld [vmem:[%s351 + $0x64] sm:$0xf]
        %v382 = vld [vmem:[%s351 + $0x68] sm:$0xf]
        %v383 = vld [vmem:[%s351 + $0x6c] sm:$0xf]
        %v384 = vld [vmem:[%s351 + $0x70] sm:$0xf]
        %v385 = vld [vmem:[%s351 + $0x74] sm:$0xf]
        %v386 = vld [vmem:[%s351 + $0x78] sm:$0xf]
        %v387 = vld [vmem:[%s351 + $0x7c] sm:$0xf]
        %v388 = vld [vmem:[%s307] sm:$0x7]
        %v389 = vld [vmem:[%s307 + $0x4] sm:$0x7]
        %v392 = vrot.slane %v388, 2
        %v393 = vrot.slane %v389, 2
        %vm394 = vcmask 1041408
        %v397 = vsel %vm394, %v388, %v392
        %vm398 = vcmask 1043458
        %v399 = vsel %vm398, %v388, %v392
        %v401 = vrot.slane %v399, 2
        %v404 = vsel %vm394, %v389, %v393
        %v405 = vsel %vm398, %v389, %v393
        %v407 = vrot.slane %v405, 2
        %vm408 = vsmask.f32 1280
        %vm409 = vsmask.f32 3336
        %vm410 = vmor %vm408, %vm409
        %vm411 = vsmask.f32 5392
        %vm412 = vmor %vm410, %vm411
        %vm413 = vsmask.f32 7448
        %vm414 = vmor %vm412, %vm413
        %v415 = vshrl.u32 %v397, 16
        %v417 = vrot.slane %v415, 6
        %v418 = vshll.u32 %v397, 16
        %v420 = vrot.slane %v418, 7
        %v421 = vor.u32 %v417, %v420
        %v422 = vrot.slane %v421, 2
        %v424 = vshll.u32 %v401, 16
        %v426 = vrot.slane %v424, 7
        %v427 = vsel %vm414, %v422, %v426
        %v428 = vshrl.u32 %v404, 16
        %v430 = vrot.slane %v428, 6
        %v431 = vshll.u32 %v404, 16
        %v433 = vrot.slane %v431, 7
        %v434 = vor.u32 %v430, %v433
        %v435 = vrot.slane %v434, 2
        %v437 = vshll.u32 %v407, 16
        %v439 = vrot.slane %v437, 7
        %v440 = vsel %vm414, %v435, %v439
        %442 = vst [vmem:[#allocation1] ss:$4 sm:$0xff] %v427
        %s444 = scalar_lea.vmem [#allocation1], 1
        %445 = vst [vmem:[%s444] ss:$4 sm:$0xff] %v440
        %v446 = vld.sshfl [vmem:[#allocation1] sm:$0xff pattern:$0x73625140]
        %v455 = vunpack.c.l.b16 %v364
        %v456 = vunpack.c.l.b16 %v365
        %v457 = vunpack.c.l.b16 %v366
        %v458 = vunpack.c.l.b16 %v367
        %v459 = vunpack.c.l.b16 %v368
        %v460 = vunpack.c.l.b16 %v369
        %v461 = vunpack.c.l.b16 %v370
        %v462 = vunpack.c.l.b16 %v371
        %v463 = vpack.c.b16 %v456, %v455
        %v464 = vpack.c.b16 %v458, %v457
        %v465 = vpack.c.b16 %v460, %v459
        %v466 = vpack.c.b16 %v462, %v461
        %vm471 = vcmask 523264
        %v472 = vsel %vm471, %v446, 0
        %474 = vmatpush.bf16.msra.mxu0 0
        %475 = vmatpush.bf16.msra.mxu0 0
        %476 = vmatpush.bf16.msra.mxu0 0
        %477 = vmatpush.bf16.msra.mxu0 0
        %478 = vmatpush.bf16.msra.mxu0 %v466
        %479 = vmatpush.bf16.msra.mxu0 %v465
        %480 = vmatpush.bf16.msra.mxu0 %v464
        %481 = vmatpush.bf16.msra.mxu0 %v463
        %482 = vmatmul.bf16.gmra.mxu0 %v472
        %v483 = vpop.f32.mrf.mxu0
        %v484 = vadd.f32 0.0, %v483
        %v485 = vpop.f32.mrf.mxu0
        %486 = vdwg.mxu0
        %487 = vst [vmem:[#allocation1] ss:$4 sm:$0xff] %v388
        %s488 = scalar_lea.vmem [#allocation1], 1
        %489 = vst [vmem:[%s488] ss:$4 sm:$0xff] %v389
        %v490 = vld.sshfl [vmem:[#allocation1] sm:$0xff pattern:$0x73625140]
        %v499 = vunpack.c.l.b16 %v356
        %v500 = vunpack.c.l.b16 %v357
        %v501 = vunpack.c.l.b16 %v358
        %v502 = vunpack.c.l.b16 %v359
        %v503 = vunpack.c.l.b16 %v360
        %v504 = vunpack.c.l.b16 %v361
        %v505 = vunpack.c.l.b16 %v362
        %v506 = vunpack.c.l.b16 %v363
        %v507 = vpack.c.b16 %v500, %v499
        %v508 = vpack.c.b16 %v502, %v501
        %v509 = vpack.c.b16 %v504, %v503
        %v510 = vpack.c.b16 %v506, %v505
        %v515 = vsel %vm471, %v490, 0
        %517 = vmatpush.bf16.msra.mxu0 0
        %518 = vmatpush.bf16.msra.mxu0 0
        %519 = vmatpush.bf16.msra.mxu0 0
        %520 = vmatpush.bf16.msra.mxu0 0
        %521 = vmatpush.bf16.msra.mxu0 %v510
        %522 = vmatpush.bf16.msra.mxu0 %v509
        %523 = vmatpush.bf16.msra.mxu0 %v508
        %524 = vmatpush.bf16.msra.mxu0 %v507
        %525 = vmatmul.bf16.gmra.mxu0 %v515
        %v526 = vpop.f32.mrf.mxu0
        %v527 = vadd.f32 %v484, %v526
        %v528 = vpop.f32.mrf.mxu0
        %529 = vdwg.mxu0
        %v531 = vrot.slane %v527, 4
        %v533 = vld [vmem:[%s314] sm:$0x7]
        %v534 = vld [vmem:[%s314 + $0x4] sm:$0x7]
        %536 = vst [vmem:[#allocation1] ss:$4 sm:$0xff] %v533
        %s538 = scalar_lea.vmem [#allocation1], 1
        %539 = vst [vmem:[%s538] ss:$4 sm:$0xff] %v534
        %v540 = vld.sshfl [vmem:[#allocation1] sm:$0xff pattern:$0x73625140]
        %v549 = vunpack.c.l.b16 %v372
        %v550 = vunpack.c.l.b16 %v373
        %v551 = vunpack.c.l.b16 %v374
        %v552 = vunpack.c.l.b16 %v375
        %v553 = vunpack.c.l.b16 %v376
        %v554 = vunpack.c.l.b16 %v377
        %v555 = vunpack.c.l.b16 %v378
        %v556 = vunpack.c.l.b16 %v379
        %v557 = vpack.c.b16 %v550, %v549
        %v558 = vpack.c.b16 %v552, %v551
        %v559 = vpack.c.b16 %v554, %v553
        %v560 = vpack.c.b16 %v556, %v555
        %v565 = vsel %vm471, %v540, 0
        %567 = vmatpush.bf16.msra.mxu0 0
        %568 = vmatpush.bf16.msra.mxu0 0
        %569 = vmatpush.bf16.msra.mxu0 0
        %570 = vmatpush.bf16.msra.mxu0 0
        %571 = vmatpush.bf16.msra.mxu0 %v560
        %572 = vmatpush.bf16.msra.mxu0 %v559
        %573 = vmatpush.bf16.msra.mxu0 %v558
        %574 = vmatpush.bf16.msra.mxu0 %v557
        %575 = vmatmul.bf16.gmra.mxu0 %v565
        %v576 = vpop.f32.mrf.mxu0
        %v577 = vadd.f32 0.0, %v576
        %v578 = vpop.f32.mrf.mxu0
        %579 = vdwg.mxu0
        %v581 = vrot.slane %v577, 4
        %v583 = vadd.f32 %v527, %v577
        %v584 = vadd.f32 %v531, %v581
        %v587 = vrot.slane %v533, 2
        %v588 = vrot.slane %v534, 2
        %v590 = vsel %vm394, %v533, %v587
        %v591 = vsel %vm398, %v533, %v587
        %v593 = vrot.slane %v591, 2
        %v595 = vsel %vm394, %v534, %v588
        %v596 = vsel %vm398, %v534, %v588
        %v598 = vrot.slane %v596, 2
        %v599 = vshrl.u32 %v590, 16
        %v601 = vrot.slane %v599, 6
        %v602 = vshll.u32 %v590, 16
        %v604 = vrot.slane %v602, 7
        %v605 = vor.u32 %v601, %v604
        %v606 = vrot.slane %v605, 2
        %v608 = vshll.u32 %v593, 16
        %v610 = vrot.slane %v608, 7
        %v611 = vsel %vm414, %v606, %v610
        %v612 = vshrl.u32 %v595, 16
        %v614 = vrot.slane %v612, 6
        %v615 = vshll.u32 %v595, 16
        %v617 = vrot.slane %v615, 7
        %v618 = vor.u32 %v614, %v617
        %v619 = vrot.slane %v618, 2
        %v621 = vshll.u32 %v598, 16
        %v623 = vrot.slane %v621, 7
        %v624 = vsel %vm414, %v619, %v623
        %626 = vst [vmem:[#allocation1] ss:$4 sm:$0xff] %v611
        %s628 = scalar_lea.vmem [#allocation1], 1
        %629 = vst [vmem:[%s628] ss:$4 sm:$0xff] %v624
        %v630 = vld.sshfl [vmem:[#allocation1] sm:$0xff pattern:$0x73625140]
        %v639 = vunpack.c.l.b16 %v380
        %v640 = vunpack.c.l.b16 %v381
        %v641 = vunpack.c.l.b16 %v382
        %v642 = vunpack.c.l.b16 %v383
        %v643 = vunpack.c.l.b16 %v384
        %v644 = vunpack.c.l.b16 %v385
        %v645 = vunpack.c.l.b16 %v386
        %v646 = vunpack.c.l.b16 %v387
        %v647 = vpack.c.b16 %v640, %v639
        %v648 = vpack.c.b16 %v642, %v641
        %v649 = vpack.c.b16 %v644, %v643
        %v650 = vpack.c.b16 %v646, %v645
        %v655 = vsel %vm471, %v630, 0
        %657 = vmatpush.bf16.msra.mxu0 0
        %658 = vmatpush.bf16.msra.mxu0 0
        %659 = vmatpush.bf16.msra.mxu0 0
        %660 = vmatpush.bf16.msra.mxu0 0
        %661 = vmatpush.bf16.msra.mxu0 %v650
        %662 = vmatpush.bf16.msra.mxu0 %v649
        %663 = vmatpush.bf16.msra.mxu0 %v648
        %664 = vmatpush.bf16.msra.mxu0 %v647
        %665 = vmatmul.bf16.gmra.mxu0 %v655
        %v666 = vpop.f32.mrf.mxu0
        %v667 = vadd.f32 0.0, %v666
        %v668 = vpop.f32.mrf.mxu0
        %669 = vdwg.mxu0
        %v671 = vrot.slane %v667, 4
        %v673 = vadd.f32 %v583, %v667
        %v674 = vadd.f32 %v584, %v671
        %v675 = vld [vmem:[%s354] sm:$0x1]
        %v677 = vperm.slane %v675, 0
        %v679 = vadd.f32 %v673, %v677
        %v680 = vadd.f32 %v674, %v677
        %vm681 = vcmp.ge.f32.partialorder %v679, 0.0
        %vm682 = vcmp.ge.f32.partialorder %v680, 0.0
        %v683 = vmul.f32 %v679, 0.01
        %v684 = vmul.f32 %v680, 0.01
        %v685 = vsel %vm681, %v679, %v683
        %v686 = vsel %vm682, %v680, %v684
        %v687 = vpack.c.bf16 %v685, %v685
        %v688 = vpack.c.bf16 %v686, %v686
        %vm689 = vcmask 254976
        %690 = vst.msk [vmem:[%s346] sm:$0x3] %vm689, %v687
        %691 = vst.msk [vmem:[%s346 + $0x2] sm:$0x3] %vm689, %v688
        %s692 = sand.u32 %s143, 1
        %s693 = sand.u32 %s143, 1
        %s694 = smul.addr %s693, 4
        %s695 = scalar_lea.vmem [#allocation4], %s694
        // Predicated region
        $region119: #{discriminator_forward.7} parent=109 // pred_check
          %p696 = pneg %p153
        $region120: #{discriminator_forward.7} parent=109 // pred_check_branch
          %698 = sbr.rel (%p696) target = $region122
        $region121: #{discriminator_forward.7} parent=109 // pred_region
          %s699 = sadd.s32 %s19, %s20
          %s700 = smul.addr %s699, 2
          %s701 = scalar_lea.vmem %s4, %s700
          // Predicated region
          $region123: #{discriminator_forward.7} parent=121 // pred_check
            _
          $region124: #{discriminator_forward.7} parent=121 // pred_check_branch
            %703 = sbr.rel (0) target = $region126
          $region125: #{discriminator_forward.7} parent=121 // pred_region
            // Predicated region
            $region127: #{discriminator_forward.7} parent=125 // pred_check
              _
            $region128: #{discriminator_forward.7} parent=125 // pred_check_branch
              %705 = sbr.rel target = $region130
            $region129: #{discriminator_forward.7} parent=125 // pred_region
              // Predicated region
              $region142: #{discriminator_forward.7} parent=129 // pred_check
                _
              $region143: #{discriminator_forward.7} parent=129 // pred_check_branch
                %723 = sbr.rel (0) target = $region145
              $region144: #{discriminator_forward.7} parent=129 // pred_region
                %s725 = ssub.s32 4, 1
                loop: start=0, step=1, limit=1
                $region146: #{discriminator_forward.7} parent=144 // loop_pre_header
                  _
                $region147: #{discriminator_forward.7} parent=144 // loop_header
                  %s727 = sphi 0, %s731
                  %p728 = scmp.ge.s32.totalorder %s727, 1
                  %s732 = sphi %s695, %s695
                  %s733 = sphi %s701, %s701
                $region148: #{discriminator_forward.7} parent=144 // loop_header_branch
                  %730 = sbr.rel (%p728) target = $region152
                $region149: #{discriminator_forward.7} parent=144 // loop_body
                  %v734 = vld [vmem:[%s732] sm:%s725]
                  %735 = vst [vmem:[%s733] sm:%s725] %v734
                  %v736 = vld [vmem:[%s732 + $0x2] sm:%s725]
                  %737 = vst [vmem:[%s733 + $0x8] sm:%s725] %v736
                $region150: #{discriminator_forward.7} parent=144 // loop_footer
                  %s731 = sadd.s32 1, %s727
                $region151: #{discriminator_forward.7} parent=144 // loop_footer_branch
                  %726 = sbr.rel target = $region147
                $region152: #{discriminator_forward.7} parent=144 // loop_exit
                  _
              $region145: #{discriminator_forward.7} parent=129 // pred_fallthru
                _
            $region130: #{discriminator_forward.7} parent=125 // pred_fallthru
              _
            // Predicated region
            $region131: #{discriminator_forward.7} parent=125 // pred_check
              _
            $region132: #{discriminator_forward.7} parent=125 // pred_check_branch
              %707 = sbr.rel (0) target = $region134
            $region133: #{discriminator_forward.7} parent=125 // pred_region
              %s709 = ssub.s32 4, 1
              loop: start=0, step=1, limit=1
              $region135: #{discriminator_forward.7} parent=133 // loop_pre_header
                _
              $region136: #{discriminator_forward.7} parent=133 // loop_header
                %s711 = sphi 0, %s715
                %p712 = scmp.ge.s32.totalorder %s711, 1
                %s716 = sphi %s695, %s695
                %s717 = sphi %s701, %s701
              $region137: #{discriminator_forward.7} parent=133 // loop_header_branch
                %714 = sbr.rel (%p712) target = $region141
              $region138: #{discriminator_forward.7} parent=133 // loop_body
                %v718 = vld [vmem:[%s716] sm:%s709]
                %719 = vst [vmem:[%s717] sm:%s709] %v718
                %v720 = vld [vmem:[%s716 + $0x2] sm:%s709]
                %721 = vst [vmem:[%s717 + $0x8] sm:%s709] %v720
              $region139: #{discriminator_forward.7} parent=133 // loop_footer
                %s715 = sadd.s32 1, %s711
              $region140: #{discriminator_forward.7} parent=133 // loop_footer_branch
                %710 = sbr.rel target = $region136
              $region141: #{discriminator_forward.7} parent=133 // loop_exit
                _
            $region134: #{discriminator_forward.7} parent=125 // pred_fallthru
              _
          $region126: #{discriminator_forward.7} parent=121 // pred_fallthru
            _
          %738 = vnop
        $region122: #{discriminator_forward.7} parent=109 // pred_fallthru
          _
      $region110: #{discriminator_forward.7} parent=5 // pred_fallthru
        _
      %p739 = scmp.le.s32.totalorder 2, %s10
      // Predicated region
      $region153: #{discriminator_forward.7} parent=5 // pred_check
        %p740 = pneg %p739
      $region154: #{discriminator_forward.7} parent=5 // pred_check_branch
        %742 = sbr.rel (%p740) target = $region156
      $region155: #{discriminator_forward.7} parent=5 // pred_region
        %s743 = ssub.s32 %s10, 2
        // Predicated region
        $region157: #{discriminator_forward.7} parent=155 // pred_check
          %p744 = pneg %p159
        $region158: #{discriminator_forward.7} parent=155 // pred_check_branch
          %746 = sbr.rel (%p744) target = $region160
        $region159: #{discriminator_forward.7} parent=155 // pred_region
          %s747 = sand.u32 %s144, 1
          %s748 = sand.u32 %s144, 1
          %s749 = smul.addr %s748, 4
          %s750 = scalar_lea.vmem [#allocation4], %s749
        $region160: #{discriminator_forward.7} parent=155 // pred_fallthru
          _
      $region156: #{discriminator_forward.7} parent=5 // pred_fallthru
        _
    $region6: #{discriminator_forward.7} parent=1 // loop_footer
      %s14 = sadd.s32 1, %s10
    $region7: #{discriminator_forward.7} parent=1 // loop_footer_branch
      %9 = sbr.rel target = $region3
    $region8: #{discriminator_forward.7} parent=1 // loop_exit
      _

// kernel: discriminator_forward.8
$region0: #{discriminator_forward.8}
  #allocation0 [shape = 'u32[]', space=smem, size = 0x4, offset = 0x4, fixed_abs, tag = 'smem constant byte address 0x4 - core index']
  #allocation1 [shape = 'u32[72,128]{1,0:T(1,128)}', space=vmem, size = 0x9000, scoped, tag = 'internal scratch']
  #allocation2 [shape = 'f32[32,1]{1,0:T(8,128)}', space=vmem, size = 0x4000, scoped, tag = 'scratch operand']
  %s0 = inlined_call_operand.vmem [shape: bf16[32,288], index: 0, kind: input, shape index: {}]
  %s1 = inlined_call_operand.vmem [shape: bf16[288,1], index: 1, kind: input, shape index: {}]
  %s2 = inlined_call_operand.vmem [shape: f32[32,1], index: 2, kind: output, shape index: {}]
  %s3 = sld [smem:[#allocation0]]
  $region26: #{discriminator_forward.8} parent=0
    _
  %s5 = ssub.s32 1, %s3
  %s6 = scalar_select 0, %s5, %s3
  // Predicated region
  $region2: #{discriminator_forward.8} parent=0 // pred_check
    _
  $region3: #{discriminator_forward.8} parent=0 // pred_check_branch
    %8 = sbr.rel (0) target = $region5
  $region4: #{discriminator_forward.8} parent=0 // pred_region
    _
  $region5: #{discriminator_forward.8} parent=0 // pred_fallthru
    _
  // Predicated region
  $region6: #{discriminator_forward.8} parent=0 // pred_check
    _
  $region7: #{discriminator_forward.8} parent=0 // pred_check_branch
    %10 = sbr.rel (0) target = $region9
  $region8: #{discriminator_forward.8} parent=0 // pred_region
    _
  $region9: #{discriminator_forward.8} parent=0 // pred_fallthru
    _
  %p12 = scmp.eq.s32.totalorder 0, 0
  // Predicated region
  $region10: #{discriminator_forward.8} parent=0 // pred_check
    %p13 = pneg %p12
  $region11: #{discriminator_forward.8} parent=0 // pred_check_branch
    %15 = sbr.rel (%p13) target = $region13
  $region12: #{discriminator_forward.8} parent=0 // pred_region
    %vm16 = vcmask 7168
    %17 = vst.msk [vmem:[#allocation2] sm:$0xff] %vm16, 0.0
    %18 = vst.msk [vmem:[#allocation2 + $0x8] sm:$0xff] %vm16, 0.0
    %19 = vst.msk [vmem:[#allocation2 + $0x10] sm:$0xff] %vm16, 0.0
    %20 = vst.msk [vmem:[#allocation2 + $0x18] sm:$0xff] %vm16, 0.0
  $region13: #{discriminator_forward.8} parent=0 // pred_fallthru
    _
  %v21 = vld [vmem:[#allocation2] sm:$0xff]
  %v22 = vld [vmem:[#allocation2 + $0x8] sm:$0xff]
  %v23 = vld [vmem:[#allocation2 + $0x10] sm:$0xff]
  %v24 = vld [vmem:[#allocation2 + $0x18] sm:$0xff]
  %v25 = vld [vmem:[%s0] sm:$0xff]
  %v26 = vld [vmem:[%s0 + $0x8] sm:$0xf]
  %v27 = vld [vmem:[%s0 + $0xc] sm:$0xff]
  %v28 = vld [vmem:[%s0 + $0x14] sm:$0xf]
  %v29 = vld [vmem:[%s0 + $0x18] sm:$0xff]
  %v30 = vld [vmem:[%s0 + $0x20] sm:$0xf]
  %v31 = vld [vmem:[%s0 + $0x24] sm:$0xff]
  %v32 = vld [vmem:[%s0 + $0x2c] sm:$0xf]
  %v33 = vld [vmem:[%s1] sm:$0xf]
  %v34 = vld [vmem:[%s1 + $0x4] sm:$0xf]
  %v35 = vld [vmem:[%s1 + $0x8] sm:$0xf]
  %v36 = vld [vmem:[%s1 + $0xc] sm:$0xf]
  %v37 = vld [vmem:[%s1 + $0x10] sm:$0xf]
  %v38 = vld [vmem:[%s1 + $0x14] sm:$0xf]
  %v39 = vld [vmem:[%s1 + $0x18] sm:$0xf]
  %v40 = vld [vmem:[%s1 + $0x1c] sm:$0xf]
  %v41 = vld [vmem:[%s1 + $0x20] sm:$0xf]
  %v42 = vld [vmem:[%s1 + $0x24] sm:$0xf]
  %v43 = vld [vmem:[%s1 + $0x28] sm:$0xf]
  %v44 = vld [vmem:[%s1 + $0x2c] sm:$0xf]
  %v45 = vld [vmem:[%s1 + $0x30] sm:$0xf]
  %v46 = vld [vmem:[%s1 + $0x34] sm:$0xf]
  %v47 = vld [vmem:[%s1 + $0x38] sm:$0xf]
  %v48 = vld [vmem:[%s1 + $0x3c] sm:$0xf]
  %v49 = vld [vmem:[%s1 + $0x40] sm:$0xf]
  %v50 = vld [vmem:[%s1 + $0x44] sm:$0xf]
  %v51 = vld [vmem:[%s1 + $0x48] sm:$0xf]
  %v52 = vld [vmem:[%s1 + $0x4c] sm:$0xf]
  %v53 = vld [vmem:[%s1 + $0x50] sm:$0xf]
  %v54 = vld [vmem:[%s1 + $0x54] sm:$0xf]
  %v55 = vld [vmem:[%s1 + $0x58] sm:$0xf]
  %v56 = vld [vmem:[%s1 + $0x5c] sm:$0xf]
  %v57 = vld [vmem:[%s1 + $0x60] sm:$0xf]
  %v58 = vld [vmem:[%s1 + $0x64] sm:$0xf]
  %v59 = vld [vmem:[%s1 + $0x68] sm:$0xf]
  %v60 = vld [vmem:[%s1 + $0x6c] sm:$0xf]
  %v61 = vld [vmem:[%s1 + $0x70] sm:$0xf]
  %v62 = vld [vmem:[%s1 + $0x74] sm:$0xf]
  %v63 = vld [vmem:[%s1 + $0x78] sm:$0xf]
  %v64 = vld [vmem:[%s1 + $0x7c] sm:$0xf]
  %v65 = vld [vmem:[%s1 + $0x80] sm:$0xf]
  %v66 = vld [vmem:[%s1 + $0x84] sm:$0xf]
  %v67 = vld [vmem:[%s1 + $0x88] sm:$0xf]
  %v68 = vld [vmem:[%s1 + $0x8c] sm:$0xf]
  %v77 = vunpack.c.l.b16 %v25
  %v78 = vunpack.c.h.b16 %v25
  %v79 = vunpack.c.l.b16 %v26
  %v80 = vunpack.c.l.b16 %v27
  %v81 = vunpack.c.h.b16 %v27
  %v82 = vunpack.c.l.b16 %v28
  %v83 = vunpack.c.l.b16 %v29
  %v84 = vunpack.c.h.b16 %v29
  %v85 = vunpack.c.l.b16 %v30
  %v86 = vunpack.c.l.b16 %v31
  %v87 = vunpack.c.h.b16 %v31
  %v88 = vunpack.c.l.b16 %v32
  %v89 = vpack.c.b16 %v80, %v77
  %v90 = vpack.c.b16 %v81, %v78
  %v91 = vpack.c.b16 %v82, %v79
  %v92 = vpack.c.b16 %v86, %v83
  %v93 = vpack.c.b16 %v87, %v84
  %v94 = vpack.c.b16 %v88, %v85
  %v135 = vunpack.c.l.b16 %v33
  %v136 = vunpack.c.l.b16 %v34
  %v137 = vunpack.c.l.b16 %v35
  %v138 = vunpack.c.l.b16 %v36
  %v139 = vunpack.c.l.b16 %v37
  %v140 = vunpack.c.l.b16 %v38
  %v141 = vunpack.c.l.b16 %v39
  %v142 = vunpack.c.l.b16 %v40
  %v143 = vunpack.c.l.b16 %v41
  %v144 = vunpack.c.l.b16 %v42
  %v145 = vunpack.c.l.b16 %v43
  %v146 = vunpack.c.l.b16 %v44
  %v147 = vunpack.c.l.b16 %v45
  %v148 = vunpack.c.l.b16 %v46
  %v149 = vunpack.c.l.b16 %v47
  %v150 = vunpack.c.l.b16 %v48
  %v151 = vunpack.c.l.b16 %v49
  %v152 = vunpack.c.l.b16 %v50
  %v153 = vunpack.c.l.b16 %v51
  %v154 = vunpack.c.l.b16 %v52
  %v155 = vunpack.c.l.b16 %v53
  %v156 = vunpack.c.l.b16 %v54
  %v157 = vunpack.c.l.b16 %v55
  %v158 = vunpack.c.l.b16 %v56
  %v159 = vunpack.c.l.b16 %v57
  %v160 = vunpack.c.l.b16 %v58
  %v161 = vunpack.c.l.b16 %v59
  %v162 = vunpack.c.l.b16 %v60
  %v163 = vunpack.c.l.b16 %v61
  %v164 = vunpack.c.l.b16 %v62
  %v165 = vunpack.c.l.b16 %v63
  %v166 = vunpack.c.l.b16 %v64
  %v167 = vunpack.c.l.b16 %v65
  %v168 = vunpack.c.l.b16 %v66
  %v169 = vunpack.c.l.b16 %v67
  %v170 = vunpack.c.l.b16 %v68
  %v171 = vpack.c.b16 %v136, %v135
  %v172 = vpack.c.b16 %v138, %v137
  %v173 = vpack.c.b16 %v140, %v139
  %v174 = vpack.c.b16 %v142, %v141
  %v175 = vpack.c.b16 %v144, %v143
  %v176 = vpack.c.b16 %v146, %v145
  %v177 = vpack.c.b16 %v148, %v147
  %v178 = vpack.c.b16 %v150, %v149
  %v179 = vpack.c.b16 %v152, %v151
  %v180 = vpack.c.b16 %v154, %v153
  %v181 = vpack.c.b16 %v156, %v155
  %v182 = vpack.c.b16 %v158, %v157
  %v183 = vpack.c.b16 %v160, %v159
  %v184 = vpack.c.b16 %v162, %v161
  %v185 = vpack.c.b16 %v164, %v163
  %v186 = vpack.c.b16 %v166, %v165
  %v187 = vpack.c.b16 %v168, %v167
  %v188 = vpack.c.b16 %v170, %v169
  %vm207 = vcmask 261120
  %v209 = vsel %vm207, %v91, 0
  %v212 = vsel %vm207, %v94, 0
  %214 = vmatpush.bf16.msra.mxu0 %v178
  %215 = vmatpush.bf16.msra.mxu0 %v177
  %216 = vmatpush.bf16.msra.mxu0 %v176
  %217 = vmatpush.bf16.msra.mxu0 %v175
  %218 = vmatpush.bf16.msra.mxu0 %v174
  %219 = vmatpush.bf16.msra.mxu0 %v173
  %220 = vmatpush.bf16.msra.mxu0 %v172
  %221 = vmatpush.bf16.msra.mxu0 %v171
  %222 = vmatmul.bf16.gmra.mxu0 %v89
  %v223 = vpop.f32.mrf.mxu0
  %v224 = vadd.f32 0.0, %v223
  %v225 = vpop.f32.mrf.mxu0
  %v226 = vadd.f32 0.0, %v225
  %227 = vmatmul.bf16.gmra.mxu0 %v92
  %v228 = vpop.f32.mrf.mxu0
  %v229 = vadd.f32 0.0, %v228
  %v230 = vpop.f32.mrf.mxu0
  %v231 = vadd.f32 0.0, %v230
  %232 = vdwg.mxu0
  %233 = vmatpush.bf16.msra.mxu0 %v186
  %234 = vmatpush.bf16.msra.mxu0 %v185
  %235 = vmatpush.bf16.msra.mxu0 %v184
  %236 = vmatpush.bf16.msra.mxu0 %v183
  %237 = vmatpush.bf16.msra.mxu0 %v182
  %238 = vmatpush.bf16.msra.mxu0 %v181
  %239 = vmatpush.bf16.msra.mxu0 %v180
  %240 = vmatpush.bf16.msra.mxu0 %v179
  %241 = vmatmul.bf16.gmra.mxu0 %v90
  %v242 = vpop.f32.mrf.mxu0
  %v243 = vadd.f32 %v224, %v242
  %v244 = vpop.f32.mrf.mxu0
  %v245 = vadd.f32 %v226, %v244
  %246 = vmatmul.bf16.gmra.mxu0 %v93
  %v247 = vpop.f32.mrf.mxu0
  %v248 = vadd.f32 %v229, %v247
  %v249 = vpop.f32.mrf.mxu0
  %v250 = vadd.f32 %v231, %v249
  %251 = vdwg.mxu0
  %252 = vmatpush.bf16.msra.mxu0 0
  %253 = vmatpush.bf16.msra.mxu0 0
  %254 = vmatpush.bf16.msra.mxu0 0
  %255 = vmatpush.bf16.msra.mxu0 0
  %256 = vmatpush.bf16.msra.mxu0 0
  %257 = vmatpush.bf16.msra.mxu0 0
  %258 = vmatpush.bf16.msra.mxu0 %v188
  %259 = vmatpush.bf16.msra.mxu0 %v187
  %260 = vmatmul.bf16.gmra.mxu0 %v209
  %v261 = vpop.f32.mrf.mxu0
  %v262 = vadd.f32 %v243, %v261
  %v263 = vpop.f32.mrf.mxu0
  %v264 = vadd.f32 %v245, %v263
  %265 = vmatmul.bf16.gmra.mxu0 %v212
  %v266 = vpop.f32.mrf.mxu0
  %v267 = vadd.f32 %v248, %v266
  %v268 = vpop.f32.mrf.mxu0
  %v269 = vadd.f32 %v250, %v268
  %270 = vdwg.mxu0
  %v271 = vadd.f32 %v21, %v262
  %v272 = vadd.f32 %v22, %v264
  %v273 = vadd.f32 %v23, %v267
  %v274 = vadd.f32 %v24, %v269
  %vm275 = vcmask 7168
  %276 = vst.msk [vmem:[#allocation2] sm:$0xff] %vm275, %v271
  %277 = vst.msk [vmem:[#allocation2 + $0x8] sm:$0xff] %vm275, %v272
  %278 = vst.msk [vmem:[#allocation2 + $0x10] sm:$0xff] %vm275, %v273
  %279 = vst.msk [vmem:[#allocation2 + $0x18] sm:$0xff] %vm275, %v274
  // Predicated region
  $region14: #{discriminator_forward.8} parent=0 // pred_check
    %p280 = pneg %p12
  $region15: #{discriminator_forward.8} parent=0 // pred_check_branch
    %282 = sbr.rel (%p280) target = $region17
  $region16: #{discriminator_forward.8} parent=0 // pred_region
    %v283 = vld [vmem:[#allocation2] sm:$0xff]
    %v284 = vld [vmem:[#allocation2 + $0x8] sm:$0xff]
    %v285 = vld [vmem:[#allocation2 + $0x10] sm:$0xff]
    %v286 = vld [vmem:[#allocation2 + $0x18] sm:$0xff]
    %287 = vst.msk [vmem:[%s2] sm:$0xff] %vm275, %v283
    %288 = vst.msk [vmem:[%s2 + $0x8] sm:$0xff] %vm275, %v284
    %289 = vst.msk [vmem:[%s2 + $0x10] sm:$0xff] %vm275, %v285
    %290 = vst.msk [vmem:[%s2 + $0x18] sm:$0xff] %vm275, %v286
  $region17: #{discriminator_forward.8} parent=0 // pred_fallthru
    _
  // Predicated region
  $region18: #{discriminator_forward.8} parent=0 // pred_check
    _
  $region19: #{discriminator_forward.8} parent=0 // pred_check_branch
    %292 = sbr.rel (0) target = $region21
  $region20: #{discriminator_forward.8} parent=0 // pred_region
    _
  $region21: #{discriminator_forward.8} parent=0 // pred_fallthru
    _
  // Predicated region
  $region22: #{discriminator_forward.8} parent=0 // pred_check
    _
  $region23: #{discriminator_forward.8} parent=0 // pred_check_branch
    %294 = sbr.rel (0) target = $region25
  $region24: #{discriminator_forward.8} parent=0 // pred_region
    _
  $region25: #{discriminator_forward.8} parent=0 // pred_fallthru
    _

// kernel: discriminator_forward.9
$region0: #{discriminator_forward.9}
  #allocation0 [shape = 'u32[]', space=smem, size = 0x4, offset = 0x4, fixed_abs, tag = 'smem constant byte address 0x4 - core index']
  #allocation1 [shape = 'u32[72,128]{1,0:T(1,128)}', space=vmem, size = 0x9000, scoped, tag = 'internal scratch']
  #allocation2 [shape = 'f32[2,5]{1,0:T(2,128)}', space=vmem, size = 0x400, scoped, tag = 'scratch operand']
  %s0 = inlined_call_operand.vmem [shape: bf16[2,512], index: 0, kind: input, shape index: {}]
  %s1 = inlined_call_operand.vmem [shape: bf16[512,5], index: 1, kind: input, shape index: {}]
  %s2 = inlined_call_operand.hbm [shape: f32[2,5], index: 2, kind: output, shape index: {}]
  %s3 = sld [smem:[#allocation0]]
  $region26: #{discriminator_forward.9} parent=0
    _
  %s5 = ssub.s32 1, %s3
  %s6 = scalar_select 0, %s5, %s3
  $region1: #{discriminator_forward.9} parent=0
    #allocation3 [shape = 'u8[1024]{0}', space=vmem, size = 0x400, scoped, tag = 'output window, operand 0, single buffered']
    #allocation4 [shape = 's32[1]{0}', space=sflag, size = 0x4, scoped, tag = 'scoped memory for discriminator_forward.9']
    %7 = vsyncpa [#allocation4], 0
    // Predicated region
    $region2: #{discriminator_forward.9} parent=1 // pred_check
      _
    $region3: #{discriminator_forward.9} parent=1 // pred_check_branch
      %9 = sbr.rel (0) target = $region5
    $region4: #{discriminator_forward.9} parent=1 // pred_region
      _
    $region5: #{discriminator_forward.9} parent=1 // pred_fallthru
      _
    // Predicated region
    $region6: #{discriminator_forward.9} parent=1 // pred_check
      _
    $region7: #{discriminator_forward.9} parent=1 // pred_check_branch
      %11 = sbr.rel (0) target = $region9
    $region8: #{discriminator_forward.9} parent=1 // pred_region
      _
    $region9: #{discriminator_forward.9} parent=1 // pred_fallthru
      _
    %p12 = scmp.eq.s32.totalorder 0, 0
    // Predicated region
    $region10: #{discriminator_forward.9} parent=1 // pred_check
      %p13 = pneg %p12
    $region11: #{discriminator_forward.9} parent=1 // pred_check_branch
      %15 = sbr.rel (%p13) target = $region13
    $region12: #{discriminator_forward.9} parent=1 // pred_region
      %vm16 = vcmask 33792
      %17 = vst.msk [vmem:[#allocation2] sm:$0x3] %vm16, 0.0
    $region13: #{discriminator_forward.9} parent=1 // pred_fallthru
      _
    %v18 = vld [vmem:[#allocation2] sm:$0x3]
    %v19 = vld [vmem:[%s0] sm:$0xf]
    %v20 = vld [vmem:[%s1] sm:$0xf]
    %v21 = vld [vmem:[%s1 + $0x4] sm:$0xf]
    %v22 = vld [vmem:[%s1 + $0x8] sm:$0xf]
    %v23 = vld [vmem:[%s1 + $0xc] sm:$0xf]
    %v24 = vld [vmem:[%s1 + $0x10] sm:$0xf]
    %v25 = vld [vmem:[%s1 + $0x14] sm:$0xf]
    %v26 = vld [vmem:[%s1 + $0x18] sm:$0xf]
    %v27 = vld [vmem:[%s1 + $0x1c] sm:$0xf]
    %v28 = vld [vmem:[%s1 + $0x20] sm:$0xf]
    %v29 = vld [vmem:[%s1 + $0x24] sm:$0xf]
    %v30 = vld [vmem:[%s1 + $0x28] sm:$0xf]
    %v31 = vld [vmem:[%s1 + $0x2c] sm:$0xf]
    %v32 = vld [vmem:[%s1 + $0x30] sm:$0xf]
    %v33 = vld [vmem:[%s1 + $0x34] sm:$0xf]
    %v34 = vld [vmem:[%s1 + $0x38] sm:$0xf]
    %v35 = vld [vmem:[%s1 + $0x3c] sm:$0xf]
    %v36 = vld [vmem:[%s1 + $0x40] sm:$0xf]
    %v37 = vld [vmem:[%s1 + $0x44] sm:$0xf]
    %v38 = vld [vmem:[%s1 + $0x48] sm:$0xf]
    %v39 = vld [vmem:[%s1 + $0x4c] sm:$0xf]
    %v40 = vld [vmem:[%s1 + $0x50] sm:$0xf]
    %v41 = vld [vmem:[%s1 + $0x54] sm:$0xf]
    %v42 = vld [vmem:[%s1 + $0x58] sm:$0xf]
    %v43 = vld [vmem:[%s1 + $0x5c] sm:$0xf]
    %v44 = vld [vmem:[%s1 + $0x60] sm:$0xf]
    %v45 = vld [vmem:[%s1 + $0x64] sm:$0xf]
    %v46 = vld [vmem:[%s1 + $0x68] sm:$0xf]
    %v47 = vld [vmem:[%s1 + $0x6c] sm:$0xf]
    %v48 = vld [vmem:[%s1 + $0x70] sm:$0xf]
    %v49 = vld [vmem:[%s1 + $0x74] sm:$0xf]
    %v50 = vld [vmem:[%s1 + $0x78] sm:$0xf]
    %v51 = vld [vmem:[%s1 + $0x7c] sm:$0xf]
    %v52 = vld [vmem:[%s1 + $0x80] sm:$0xf]
    %v53 = vld [vmem:[%s1 + $0x84] sm:$0xf]
    %v54 = vld [vmem:[%s1 + $0x88] sm:$0xf]
    %v55 = vld [vmem:[%s1 + $0x8c] sm:$0xf]
    %v56 = vld [vmem:[%s1 + $0x90] sm:$0xf]
    %v57 = vld [vmem:[%s1 + $0x94] sm:$0xf]
    %v58 = vld [vmem:[%s1 + $0x98] sm:$0xf]
    %v59 = vld [vmem:[%s1 + $0x9c] sm:$0xf]
    %v60 = vld [vmem:[%s1 + $0xa0] sm:$0xf]
    %v61 = vld [vmem:[%s1 + $0xa4] sm:$0xf]
    %v62 = vld [vmem:[%s1 + $0xa8] sm:$0xf]
    %v63 = vld [vmem:[%s1 + $0xac] sm:$0xf]
    %v64 = vld [vmem:[%s1 + $0xb0] sm:$0xf]
    %v65 = vld [vmem:[%s1 + $0xb4] sm:$0xf]
    %v66 = vld [vmem:[%s1 + $0xb8] sm:$0xf]
    %v67 = vld [vmem:[%s1 + $0xbc] sm:$0xf]
    %v68 = vld [vmem:[%s1 + $0xc0] sm:$0xf]
    %v69 = vld [vmem:[%s1 + $0xc4] sm:$0xf]
    %v70 = vld [vmem:[%s1 + $0xc8] sm:$0xf]
    %v71 = vld [vmem:[%s1 + $0xcc] sm:$0xf]
    %v72 = vld [vmem:[%s1 + $0xd0] sm:$0xf]
    %v73 = vld [vmem:[%s1 + $0xd4] sm:$0xf]
    %v74 = vld [vmem:[%s1 + $0xd8] sm:$0xf]
    %v75 = vld [vmem:[%s1 + $0xdc] sm:$0xf]
    %v76 = vld [vmem:[%s1 + $0xe0] sm:$0xf]
    %v77 = vld [vmem:[%s1 + $0xe4] sm:$0xf]
    %v78 = vld [vmem:[%s1 + $0xe8] sm:$0xf]
    %v79 = vld [vmem:[%s1 + $0xec] sm:$0xf]
    %v80 = vld [vmem:[%s1 + $0xf0] sm:$0xf]
    %v81 = vld [vmem:[%s1 + $0xf4] sm:$0xf]
    %v82 = vld [vmem:[%s1 + $0xf8] sm:$0xf]
    %v83 = vld [vmem:[%s1 + $0xfc] sm:$0xf]
    %85 = vst [vmem:[#allocation1] ss:$9 sm:$0xff] %v19
    %v86 = vld [vmem:[#allocation1] sm:$0xff]
    %v87 = vld [vmem:[#allocation1 + $0x9] sm:$0xff]
    %v88 = vld [vmem:[#allocation1 + $0x12] sm:$0xff]
    %v89 = vld [vmem:[#allocation1 + $0x1b] sm:$0xff]
    %v158 = vunpack.c.l.b16 %v20
    %v159 = vunpack.c.l.b16 %v21
    %v160 = vunpack.c.l.b16 %v22
    %v161 = vunpack.c.l.b16 %v23
    %v162 = vunpack.c.l.b16 %v24
    %v163 = vunpack.c.l.b16 %v25
    %v164 = vunpack.c.l.b16 %v26
    %v165 = vunpack.c.l.b16 %v27
    %v166 = vunpack.c.l.b16 %v28
    %v167 = vunpack.c.l.b16 %v29
    %v168 = vunpack.c.l.b16 %v30
    %v169 = vunpack.c.l.b16 %v31
    %v170 = vunpack.c.l.b16 %v32
    %v171 = vunpack.c.l.b16 %v33
    %v172 = vunpack.c.l.b16 %v34
    %v173 = vunpack.c.l.b16 %v35
    %v174 = vunpack.c.l.b16 %v36
    %v175 = vunpack.c.l.b16 %v37
    %v176 = vunpack.c.l.b16 %v38
    %v177 = vunpack.c.l.b16 %v39
    %v178 = vunpack.c.l.b16 %v40
    %v179 = vunpack.c.l.b16 %v41
    %v180 = vunpack.c.l.b16 %v42
    %v181 = vunpack.c.l.b16 %v43
    %v182 = vunpack.c.l.b16 %v44
    %v183 = vunpack.c.l.b16 %v45
    %v184 = vunpack.c.l.b16 %v46
    %v185 = vunpack.c.l.b16 %v47
    %v186 = vunpack.c.l.b16 %v48
    %v187 = vunpack.c.l.b16 %v49
    %v188 = vunpack.c.l.b16 %v50
    %v189 = vunpack.c.l.b16 %v51
    %v190 = vunpack.c.l.b16 %v52
    %v191 = vunpack.c.l.b16 %v53
    %v192 = vunpack.c.l.b16 %v54
    %v193 = vunpack.c.l.b16 %v55
    %v194 = vunpack.c.l.b16 %v56
    %v195 = vunpack.c.l.b16 %v57
    %v196 = vunpack.c.l.b16 %v58
    %v197 = vunpack.c.l.b16 %v59
    %v198 = vunpack.c.l.b16 %v60
    %v199 = vunpack.c.l.b16 %v61
    %v200 = vunpack.c.l.b16 %v62
    %v201 = vunpack.c.l.b16 %v63
    %v202 = vunpack.c.l.b16 %v64
    %v203 = vunpack.c.l.b16 %v65
    %v204 = vunpack.c.l.b16 %v66
    %v205 = vunpack.c.l.b16 %v67
    %v206 = vunpack.c.l.b16 %v68
    %v207 = vunpack.c.l.b16 %v69
    %v208 = vunpack.c.l.b16 %v70
    %v209 = vunpack.c.l.b16 %v71
    %v210 = vunpack.c.l.b16 %v72
    %v211 = vunpack.c.l.b16 %v73
    %v212 = vunpack.c.l.b16 %v74
    %v213 = vunpack.c.l.b16 %v75
    %v214 = vunpack.c.l.b16 %v76
    %v215 = vunpack.c.l.b16 %v77
    %v216 = vunpack.c.l.b16 %v78
    %v217 = vunpack.c.l.b16 %v79
    %v218 = vunpack.c.l.b16 %v80
    %v219 = vunpack.c.l.b16 %v81
    %v220 = vunpack.c.l.b16 %v82
    %v221 = vunpack.c.l.b16 %v83
    %v222 = vpack.c.b16 %v159, %v158
    %v223 = vpack.c.b16 %v161, %v160
    %v224 = vpack.c.b16 %v163, %v162
    %v225 = vpack.c.b16 %v165, %v164
    %v226 = vpack.c.b16 %v167, %v166
    %v227 = vpack.c.b16 %v169, %v168
    %v228 = vpack.c.b16 %v171, %v170
    %v229 = vpack.c.b16 %v173, %v172
    %v230 = vpack.c.b16 %v175, %v174
    %v231 = vpack.c.b16 %v177, %v176
    %v232 = vpack.c.b16 %v179, %v178
    %v233 = vpack.c.b16 %v181, %v180
    %v234 = vpack.c.b16 %v183, %v182
    %v235 = vpack.c.b16 %v185, %v184
    %v236 = vpack.c.b16 %v187, %v186
    %v237 = vpack.c.b16 %v189, %v188
    %v238 = vpack.c.b16 %v191, %v190
    %v239 = vpack.c.b16 %v193, %v192
    %v240 = vpack.c.b16 %v195, %v194
    %v241 = vpack.c.b16 %v197, %v196
    %v242 = vpack.c.b16 %v199, %v198
    %v243 = vpack.c.b16 %v201, %v200
    %v244 = vpack.c.b16 %v203, %v202
    %v245 = vpack.c.b16 %v205, %v204
    %v246 = vpack.c.b16 %v207, %v206
    %v247 = vpack.c.b16 %v209, %v208
    %v248 = vpack.c.b16 %v211, %v210
    %v249 = vpack.c.b16 %v213, %v212
    %v250 = vpack.c.b16 %v215, %v214
    %v251 = vpack.c.b16 %v217, %v216
    %v252 = vpack.c.b16 %v219, %v218
    %v253 = vpack.c.b16 %v221, %v220
    %286 = vmatpush.bf16.msra.mxu0 %v229
    %287 = vmatpush.bf16.msra.mxu0 %v228
    %288 = vmatpush.bf16.msra.mxu0 %v227
    %289 = vmatpush.bf16.msra.mxu0 %v226
    %290 = vmatpush.bf16.msra.mxu0 %v225
    %291 = vmatpush.bf16.msra.mxu0 %v224
    %292 = vmatpush.bf16.msra.mxu0 %v223
    %293 = vmatpush.bf16.msra.mxu0 %v222
    %294 = vmatmul.bf16.gmra.mxu0 %v86
    %v295 = vpop.f32.mrf.mxu0
    %v296 = vadd.f32 0.0, %v295
    %v297 = vpop.f32.mrf.mxu0
    %298 = vdwg.mxu0
    %299 = vmatpush.bf16.msra.mxu0 %v237
    %300 = vmatpush.bf16.msra.mxu0 %v236
    %301 = vmatpush.bf16.msra.mxu0 %v235
    %302 = vmatpush.bf16.msra.mxu0 %v234
    %303 = vmatpush.bf16.msra.mxu0 %v233
    %304 = vmatpush.bf16.msra.mxu0 %v232
    %305 = vmatpush.bf16.msra.mxu0 %v231
    %306 = vmatpush.bf16.msra.mxu0 %v230
    %307 = vmatmul.bf16.gmra.mxu0 %v87
    %v308 = vpop.f32.mrf.mxu0
    %v309 = vadd.f32 %v296, %v308
    %v310 = vpop.f32.mrf.mxu0
    %311 = vdwg.mxu0
    %312 = vmatpush.bf16.msra.mxu0 %v245
    %313 = vmatpush.bf16.msra.mxu0 %v244
    %314 = vmatpush.bf16.msra.mxu0 %v243
    %315 = vmatpush.bf16.msra.mxu0 %v242
    %316 = vmatpush.bf16.msra.mxu0 %v241
    %317 = vmatpush.bf16.msra.mxu0 %v240
    %318 = vmatpush.bf16.msra.mxu0 %v239
    %319 = vmatpush.bf16.msra.mxu0 %v238
    %320 = vmatmul.bf16.gmra.mxu0 %v88
    %v321 = vpop.f32.mrf.mxu0
    %v322 = vadd.f32 %v309, %v321
    %v323 = vpop.f32.mrf.mxu0
    %324 = vdwg.mxu0
    %325 = vmatpush.bf16.msra.mxu0 %v253
    %326 = vmatpush.bf16.msra.mxu0 %v252
    %327 = vmatpush.bf16.msra.mxu0 %v251
    %328 = vmatpush.bf16.msra.mxu0 %v250
    %329 = vmatpush.bf16.msra.mxu0 %v249
    %330 = vmatpush.bf16.msra.mxu0 %v248
    %331 = vmatpush.bf16.msra.mxu0 %v247
    %332 = vmatpush.bf16.msra.mxu0 %v246
    %333 = vmatmul.bf16.gmra.mxu0 %v89
    %v334 = vpop.f32.mrf.mxu0
    %v335 = vadd.f32 %v322, %v334
    %v336 = vpop.f32.mrf.mxu0
    %337 = vdwg.mxu0
    %v338 = vadd.f32 %v18, %v335
    %vm339 = vcmask 33792
    %340 = vst.msk [vmem:[#allocation2] sm:$0x3] %vm339, %v338
    // Predicated region
    $region14: #{discriminator_forward.9} parent=1 // pred_check
      %p341 = pneg %p12
    $region15: #{discriminator_forward.9} parent=1 // pred_check_branch
      %343 = sbr.rel (%p341) target = $region17
    $region16: #{discriminator_forward.9} parent=1 // pred_region
      %v344 = vld [vmem:[#allocation2] sm:$0x3]
      %345 = vst.msk [vmem:[#allocation3] sm:$0x3] %vm339, %v344
    $region17: #{discriminator_forward.9} parent=1 // pred_fallthru
      _
    // Predicated region
    $region18: #{discriminator_forward.9} parent=1 // pred_check
      _
    $region19: #{discriminator_forward.9} parent=1 // pred_check_branch
      %347 = sbr.rel (0) target = $region21
    $region20: #{discriminator_forward.9} parent=1 // pred_region
      %349 = vsyncadd [#allocation4], 0
      %s351 = sshll.u32 [#allocation3], 4
      %s352 = int_to_ptr.vmem [resolvable:$true] %s351
      %s353 = sshll.u32 %s2, 4
      %s354 = int_to_ptr.hbm [resolvable:$true] %s353
      %356 = dma.vmem_to_hbm [thread:$0]  %s352, 32, %s354, [#allocation4]
    $region21: #{discriminator_forward.9} parent=1 // pred_fallthru
      _
    // Predicated region
    $region22: #{discriminator_forward.9} parent=1 // pred_check
      _
    $region23: #{discriminator_forward.9} parent=1 // pred_check_branch
      %358 = sbr.rel (0) target = $region25
    $region24: #{discriminator_forward.9} parent=1 // pred_region
      %360 = dma.done [#allocation4], 32
    $region25: #{discriminator_forward.9} parent=1 // pred_fallthru
      _
    %361 = vsyncpa [#allocation4], 1

</llo_original>
